<compile_context>
chip_gen: v6e
topology: v6e:2x2x1
jax: 0.10.0
libtpu: 0.0.40
codegen_flags: <defaults>
</compile_context>

<pallas_src>
import jax
import jax.numpy as jnp
from jax import lax
from jax.experimental import pallas as pl
from jax.experimental.pallas import tpu as pltpu


def mvcnn_kernel(xcols_ref, w1_ref, b1_ref, w2_ref, b2_ref,
                 wf1_ref, bf1_ref, wf2_ref, bf2_ref, out_ref):
    # One batch tile (Bt samples) per grid step; conv1 im2col already applied.
    Bt = out_ref.shape[0]
    BL = xcols_ref.shape[0]                    # Bt * L
    L = BL // Bt
    Lh, Lq = L // 2, L // 4
    C1 = b1_ref.shape[-1]                      # 64
    C2 = b2_ref.shape[-1]                      # 128
    R1 = Bt * Lh                               # rows after pool1

    # ---- conv1: single (Bt*L, 3*Cin) @ (3*Cin, C1) MXU push ----
    y1 = jnp.dot(xcols_ref[...], w1_ref[...], preferred_element_type=jnp.float32)
    y1 = jnp.maximum(y1 + b1_ref[...], 0.0)                                # (Bt*L, C1) f32

    # ---- maxpool1 (k=2, s=2), kept as SSA values (samples are row-contiguous,
    #      L is even, so pairs never cross sample boundaries) ----
    p1 = jnp.max(y1.reshape(R1, 2, C1), axis=1)                            # (Bt*Lh, C1) f32
    p1b = p1.astype(jnp.bfloat16)

    # ---- conv2: 3-tap accumulation (no lane concat). Per-sample zero padding
    #      via masked sublane shifts inside the batch tile. ----
    zrow = jnp.zeros((1, C1), jnp.bfloat16)
    prev = jnp.concatenate([zrow, p1b[:R1 - 1]], axis=0)                   # row r -> p1[r-1]
    nxt = jnp.concatenate([p1b[1:], zrow], axis=0)                         # row r -> p1[r+1]
    pos = lax.broadcasted_iota(jnp.int32, (R1, 1), 0) % Lh
    prev = jnp.where(pos == 0, jnp.bfloat16(0), prev)                      # first row of sample
    nxt = jnp.where(pos == Lh - 1, jnp.bfloat16(0), nxt)                   # last row of sample
    y2 = (jnp.dot(prev, w2_ref[0], preferred_element_type=jnp.float32)
          + jnp.dot(p1b, w2_ref[1], preferred_element_type=jnp.float32)
          + jnp.dot(nxt, w2_ref[2], preferred_element_type=jnp.float32))
    y2 = jnp.maximum(y2 + b2_ref[...], 0.0)                                # (Bt*Lh, C2) f32

    # ---- maxpool2 + fc1: one flatten per batch tile, then (Bt, Lq*C2)@(Lq*C2, H) ----
    p2 = jnp.max(y2.reshape(Bt * Lq, 2, C2), axis=1)                       # (Bt*Lq, C2)
    p2f = p2.reshape(Bt, Lq * C2).astype(jnp.bfloat16)                     # flatten: t*C2 + c
    h = jnp.dot(p2f, wf1_ref[...], preferred_element_type=jnp.float32) + bf1_ref[...]
    h = jnp.maximum(h, 0.0)                                                # (Bt, H) f32

    # ---- fc2 (N padded to a lane-dense 128 in the wrapper), (Bt, NCpad) slab store ----
    out = jnp.dot(h.astype(jnp.bfloat16), wf2_ref[...],
                  preferred_element_type=jnp.float32) + bf2_ref[...]       # (Bt, NCpad)
    out_ref[...] = out.astype(out_ref.dtype)


def _pick_bt(B):
    # Prefer big tiles (fill the 256-wide MXU on v6e/v7x, 128 on v5e) while keeping
    # >= 2 grid steps when the batch allows, so v7x can feed both TensorCores.
    for bt in (256, 128, 64, 32, 16, 8):
        if B >= 2 * bt:
            return bt
    return 8


@jax.jit
def multivariate_cnn_forward(x_ncl, w1_pt, b1, w2_pt, b2, wfc1_pt, bfc1, wfc2_pt, bfc2):
    """x_ncl: (B, num_channels, input_length) like PyTorch. Returns (B, num_classes)."""
    B, Cin, L = x_ncl.shape
    assert L % 4 == 0, "MaxPool1d(2) x2 + fc1_size assume input_length % 4 == 0"
    C1 = w1_pt.shape[0]          # 64
    C2 = w2_pt.shape[0]          # 128
    H = wfc1_pt.shape[0]         # 512
    NC = wfc2_pt.shape[0]        # num_classes
    Lq = L // 4
    NCpad = ((NC + 127) // 128) * 128
    Bt = _pick_bt(B)
    Bpad = ((B + Bt - 1) // Bt) * Bt

    # --- glue: layout conversion, batch/conv padding, im2col, weight permutation, bf16 ---
    x = jnp.transpose(x_ncl, (0, 2, 1)).astype(jnp.float32)                 # (B, L, Cin)
    xp = jnp.pad(x, ((0, Bpad - B), (1, 1), (0, 0)))                        # (Bpad, L+2, Cin)
    # conv1 im2col hoisted here: cols[b, l, k*Cin + c] = xp[b, l+k, c]
    xcols = jnp.concatenate([xp[:, 0:L], xp[:, 1:L + 1], xp[:, 2:L + 2]], axis=-1)
    xcols = xcols.reshape(Bpad * L, 3 * Cin).astype(jnp.bfloat16)           # (Bpad*L, 3*Cin)

    # conv1 weight -> im2col 2D form: row index = k*Cin + c
    w1 = jnp.transpose(w1_pt, (2, 1, 0)).reshape(3 * Cin, C1).astype(jnp.bfloat16)
    # conv2 weight -> per-tap (3, C1, C2) for tap accumulation
    w2 = jnp.transpose(w2_pt, (2, 1, 0)).astype(jnp.bfloat16)               # (3, C1, C2)
    # PyTorch flattens (C2, Lq) channel-major; permute so row index = t*C2 + c.
    wf1 = jnp.transpose(wfc1_pt.reshape(H, C2, Lq), (2, 1, 0)).reshape(Lq * C2, H)
    wf1 = wf1.astype(jnp.bfloat16)
    # fc2 weight/bias padded to lane-dense N=NCpad (extra columns are zero).
    wf2 = jnp.zeros((H, NCpad), jnp.float32).at[:, :NC].set(wfc2_pt.T).astype(jnp.bfloat16)
    b1_2 = b1.reshape(1, C1).astype(jnp.float32)
    b2_2 = b2.reshape(1, C2).astype(jnp.float32)
    bf1_2 = bfc1.reshape(1, H).astype(jnp.float32)
    bf2_2 = jnp.zeros((1, NCpad), jnp.float32).at[0, :NC].set(bfc2)

    const = lambda b: (0, 0)    # weights/biases resident across the batch-tile grid
    const3 = lambda b: (0, 0, 0)
    out2 = pl.pallas_call(
        mvcnn_kernel,
        out_shape=jax.ShapeDtypeStruct((Bpad, NCpad), jnp.float32),
        grid=(Bpad // Bt,),
        in_specs=[
            pl.BlockSpec((Bt * L, 3 * Cin), lambda b: (b, 0)),   # Bt samples per step
            pl.BlockSpec((3 * Cin, C1), const),
            pl.BlockSpec((1, C1), const),
            pl.BlockSpec((3, C1, C2), const3),
            pl.BlockSpec((1, C2), const),
            pl.BlockSpec((Lq * C2, H), const),
            pl.BlockSpec((1, H), const),
            pl.BlockSpec((H, NCpad), const),
            pl.BlockSpec((1, NCpad), const),
        ],
        out_specs=pl.BlockSpec((Bt, NCpad), lambda b: (b, 0)),   # lane-dense output slab
        compiler_params=pltpu.CompilerParams(
            dimension_semantics=("parallel",)),   # both TCs on v7x when >=2 tiles
    )(xcols, w1, b1_2, w2, b2_2, wf1, bf1_2, wf2, bf2_2)
    return out2[:B, :NC]


def reference_forward(x, w1_pt, b1, w2_pt, b2, wfc1_pt, bfc1, wfc2_pt, bfc2):
    """Pure-JAX reference with PyTorch NCL semantics."""
    dn = ("NCH", "OIH", "NCH")
    hp = lax.Precision.HIGHEST
    y = lax.conv_general_dilated(x, w1_pt, (1,), [(1, 1)], dimension_numbers=dn, precision=hp)
    y = jax.nn.relu(y + b1[None, :, None])
    y = lax.reduce_window(y, -jnp.inf, lax.max, (1, 1, 2), (1, 1, 2), "VALID")
    y = lax.conv_general_dilated(y, w2_pt, (1,), [(1, 1)], dimension_numbers=dn, precision=hp)
    y = jax.nn.relu(y + b2[None, :, None])
    y = lax.reduce_window(y, -jnp.inf, lax.max, (1, 1, 2), (1, 1, 2), "VALID")
    y = y.reshape(y.shape[0], -1)                                   # channel-major flatten
    y = jax.nn.relu(jnp.dot(y, wfc1_pt.T, precision=hp) + bfc1)
    return jnp.dot(y, wfc2_pt.T, precision=hp) + bfc2


if __name__ == "__main__":
    B, Cin, L, NC = 2, 4, 16, 18          # batch, num_channels, input_length, num_classes
    Lq = L // 4
    fc1_size = 128 * Lq

    key = jax.random.PRNGKey(0)
    ks = jax.random.split(key, 9)
    # PyTorch-convention parameter shapes, deterministic init
    w1_pt = jax.random.normal(ks[0], (64, Cin, 3), jnp.float32) * 0.10
    b1 = jax.random.normal(ks[1], (64,), jnp.float32) * 0.10
    w2_pt = jax.random.normal(ks[2], (128, 64, 3), jnp.float32) * 0.05
    b2 = jax.random.normal(ks[3], (128,), jnp.float32) * 0.05
    wfc1_pt = jax.random.normal(ks[4], (512, fc1_size), jnp.float32) * 0.05
    bfc1 = jax.random.normal(ks[5], (512,), jnp.float32) * 0.05
    wfc2_pt = jax.random.normal(ks[6], (NC, 512), jnp.float32) * 0.05
    bfc2 = jax.random.normal(ks[7], (NC,), jnp.float32) * 0.05
    x = jax.random.normal(ks[8], (B, Cin, L), jnp.float32)

    out = multivariate_cnn_forward(x, w1_pt, b1, w2_pt, b2, wfc1_pt, bfc1, wfc2_pt, bfc2)
    out = jax.block_until_ready(out)

    ref = reference_forward(x, w1_pt, b1, w2_pt, b2, wfc1_pt, bfc1, wfc2_pt, bfc2)
    assert out.shape == (B, NC), out.shape
    # bf16 MXU operands with f32 accumulation -> slightly looser tolerance than pure f32
    assert jnp.allclose(out, ref, atol=3e-2, rtol=3e-2), float(jnp.max(jnp.abs(out - ref)))
    print("KERNEL_OK")
</pallas_src>

<mosaic_0001>
module attributes {stable_mosaic.version = 11 : i64} {
  func.func @mvcnn_kernel(%arg0: i32, %arg1: memref<128x12xbf16, #tpu.memory_space<vmem>>, %arg2: memref<12x64xbf16, #tpu.memory_space<vmem>>, %arg3: memref<1x64xf32, #tpu.memory_space<vmem>>, %arg4: memref<3x64x128xbf16, #tpu.memory_space<vmem>>, %arg5: memref<1x128xf32, #tpu.memory_space<vmem>>, %arg6: memref<512x512xbf16, #tpu.memory_space<vmem>>, %arg7: memref<1x512xf32, #tpu.memory_space<vmem>>, %arg8: memref<512x128xbf16, #tpu.memory_space<vmem>>, %arg9: memref<1x128xf32, #tpu.memory_space<vmem>>, %arg10: memref<8x128xf32, #tpu.memory_space<vmem>>) attributes {dimension_semantics = [#tpu.dimension_semantics<parallel>], iteration_bounds = array<i64: 1>, scalar_prefetch = 0 : i64, scratch_operands = 0 : i64, tpu.core_type = #tpu.core_type<tc>, window_params = [{transform_indices = @transform_0, window_bounds = array<i64: 128, 12>}, {pipeline_mode = #tpu.pipeline_mode<synchronous>, transform_indices = @transform_1, window_bounds = array<i64: 12, 64>}, {pipeline_mode = #tpu.pipeline_mode<synchronous>, transform_indices = @transform_2, window_bounds = array<i64: 1, 64>}, {pipeline_mode = #tpu.pipeline_mode<synchronous>, transform_indices = @transform_3, window_bounds = array<i64: 3, 64, 128>}, {pipeline_mode = #tpu.pipeline_mode<synchronous>, transform_indices = @transform_4, window_bounds = array<i64: 1, 128>}, {pipeline_mode = #tpu.pipeline_mode<synchronous>, transform_indices = @transform_5, window_bounds = array<i64: 512, 512>}, {pipeline_mode = #tpu.pipeline_mode<synchronous>, transform_indices = @transform_6, window_bounds = array<i64: 1, 512>}, {pipeline_mode = #tpu.pipeline_mode<synchronous>, transform_indices = @transform_7, window_bounds = array<i64: 512, 128>}, {pipeline_mode = #tpu.pipeline_mode<synchronous>, transform_indices = @transform_8, window_bounds = array<i64: 1, 128>}, {transform_indices = @transform_9, window_bounds = array<i64: 8, 128>}]} {
    %c0 = arith.constant 0 : index
    %c0_0 = arith.constant 0 : index
    %0 = vector.load %arg1[%c0, %c0_0] : memref<128x12xbf16, #tpu.memory_space<vmem>>, vector<128x12xbf16>
    %c0_1 = arith.constant 0 : index
    %c0_2 = arith.constant 0 : index
    %1 = vector.load %arg2[%c0_1, %c0_2] : memref<12x64xbf16, #tpu.memory_space<vmem>>, vector<12x64xbf16>
    %cst = arith.constant dense<0.000000e+00> : vector<128x64xf32>
    %2 = tpu.matmul %0, %1, %cst {dimension_numbers = #tpu.dot_dimension_numbers<[1], [0], [0], [1], [0, 0, 1, 1], [], []>} : vector<128x12xbf16>, vector<12x64xbf16>, vector<128x64xf32> -> vector<128x64xf32>
    %c0_3 = arith.constant 0 : index
    %c0_4 = arith.constant 0 : index
    %3 = vector.load %arg3[%c0_3, %c0_4] : memref<1x64xf32, #tpu.memory_space<vmem>>, vector<1x64xf32>
    %4 = vector.broadcast %3 : vector<1x64xf32> to vector<128x64xf32>
    %5 = arith.addf %2, %4 : vector<128x64xf32>
    %cst_5 = arith.constant 0.000000e+00 : f32
    %6 = vector.broadcast %cst_5 : f32 to vector<128x64xf32>
    %7 = arith.maximumf %5, %6 : vector<128x64xf32>
    %8 = vector.shape_cast %7 : vector<128x64xf32> to vector<64x2x64xf32>
    %cst_6 = arith.constant dense<0xFF800000> : vector<64x64xf32>
    %9 = vector.multi_reduction <maximumf>, %8, %cst_6 [1] : vector<64x2x64xf32> to vector<64x64xf32>
    %10 = arith.truncf %9 : vector<64x64xf32> to vector<64x64xbf16>
    %cst_7 = arith.constant 0.000000e+00 : bf16
    %11 = vector.broadcast %cst_7 : bf16 to vector<1x64xbf16>
    %12 = vector.extract_strided_slice %10 {offsets = [0, 0], sizes = [63, 64], strides = [1, 1]} : vector<64x64xbf16> to vector<63x64xbf16>
    %13 = tpu.concatenate %11, %12 in 0 : vector<1x64xbf16>, vector<63x64xbf16> -> vector<64x64xbf16>
    %14 = vector.extract_strided_slice %10 {offsets = [1, 0], sizes = [63, 64], strides = [1, 1]} : vector<64x64xbf16> to vector<63x64xbf16>
    %15 = tpu.concatenate %14, %11 in 0 : vector<63x64xbf16>, vector<1x64xbf16> -> vector<64x64xbf16>
    %16 = tpu.iota {dimensions = array<i32: 0>} : vector<64x1xi32>
    %c8_i32 = arith.constant 8 : i32
    %c0_i32 = arith.constant 0 : i32
    %17 = arith.cmpi eq, %c8_i32, %c0_i32 : i32
    %c1_i32 = arith.constant 1 : i32
    %18 = arith.select %17, %c1_i32, %c8_i32 : i32
    %19 = vector.broadcast %18 : i32 to vector<64x1xi32>
    %20 = arith.remsi %16, %19 : vector<64x1xi32>
    %c0_i32_8 = arith.constant 0 : i32
    %21 = vector.broadcast %c0_i32_8 : i32 to vector<64x1xi32>
    %22 = arith.cmpi ne, %20, %21 : vector<64x1xi32>
    %c0_i32_9 = arith.constant 0 : i32
    %23 = vector.broadcast %c0_i32_9 : i32 to vector<64x1xi32>
    %24 = arith.cmpi slt, %20, %23 : vector<64x1xi32>
    %c0_i32_10 = arith.constant 0 : i32
    %25 = arith.cmpi slt, %18, %c0_i32_10 : i32
    %26 = vector.broadcast %25 : i1 to vector<64x1xi1>
    %27 = vector.broadcast %26 : vector<64x1xi1> to vector<64x1xi1>
    %28 = arith.xori %24, %27 : vector<64x1xi1>
    %29 = arith.andi %28, %22 : vector<64x1xi1>
    %30 = vector.broadcast %18 : i32 to vector<64x1xi32>
    %31 = arith.addi %20, %30 : vector<64x1xi32>
    %32 = arith.select %29, %31, %20 : vector<64x1xi1>, vector<64x1xi32>
    %c0_i32_11 = arith.constant 0 : i32
    %33 = vector.broadcast %c0_i32_11 : i32 to vector<64x1xi32>
    %34 = arith.cmpi eq, %32, %33 : vector<64x1xi32>
    %cst_12 = arith.constant 0.000000e+00 : bf16
    %35 = vector.shape_cast %34 : vector<64x1xi1> to vector<64x1xi1>
    %36 = vector.broadcast %35 : vector<64x1xi1> to vector<64x64xi1>
    %37 = vector.broadcast %cst_12 : bf16 to vector<64x64xbf16>
    %38 = arith.select %36, %37, %13 : vector<64x64xi1>, vector<64x64xbf16>
    %c7_i32 = arith.constant 7 : i32
    %39 = vector.broadcast %c7_i32 : i32 to vector<64x1xi32>
    %40 = arith.cmpi eq, %32, %39 : vector<64x1xi32>
    %cst_13 = arith.constant 0.000000e+00 : bf16
    %41 = vector.shape_cast %40 : vector<64x1xi1> to vector<64x1xi1>
    %42 = vector.broadcast %41 : vector<64x1xi1> to vector<64x64xi1>
    %43 = vector.broadcast %cst_13 : bf16 to vector<64x64xbf16>
    %44 = arith.select %42, %43, %15 : vector<64x64xi1>, vector<64x64xbf16>
    %c0_14 = arith.constant 0 : index
    %c0_15 = arith.constant 0 : index
    %c0_16 = arith.constant 0 : index
    %45 = vector.load %arg4[%c0_14, %c0_15, %c0_16] : memref<3x64x128xbf16, #tpu.memory_space<vmem>>, vector<1x64x128xbf16>
    %46 = vector.shape_cast %45 : vector<1x64x128xbf16> to vector<64x128xbf16>
    %cst_17 = arith.constant dense<0.000000e+00> : vector<64x128xf32>
    %47 = tpu.matmul %38, %46, %cst_17 {dimension_numbers = #tpu.dot_dimension_numbers<[1], [0], [0], [1], [0, 0, 1, 1], [], []>} : vector<64x64xbf16>, vector<64x128xbf16>, vector<64x128xf32> -> vector<64x128xf32>
    %c1 = arith.constant 1 : index
    %c0_18 = arith.constant 0 : index
    %c0_19 = arith.constant 0 : index
    %48 = vector.load %arg4[%c1, %c0_18, %c0_19] : memref<3x64x128xbf16, #tpu.memory_space<vmem>>, vector<1x64x128xbf16>
    %49 = vector.shape_cast %48 : vector<1x64x128xbf16> to vector<64x128xbf16>
    %cst_20 = arith.constant dense<0.000000e+00> : vector<64x128xf32>
    %50 = tpu.matmul %10, %49, %cst_20 {dimension_numbers = #tpu.dot_dimension_numbers<[1], [0], [0], [1], [0, 0, 1, 1], [], []>} : vector<64x64xbf16>, vector<64x128xbf16>, vector<64x128xf32> -> vector<64x128xf32>
    %51 = arith.addf %47, %50 : vector<64x128xf32>
    %c2 = arith.constant 2 : index
    %c0_21 = arith.constant 0 : index
    %c0_22 = arith.constant 0 : index
    %52 = vector.load %arg4[%c2, %c0_21, %c0_22] : memref<3x64x128xbf16, #tpu.memory_space<vmem>>, vector<1x64x128xbf16>
    %53 = vector.shape_cast %52 : vector<1x64x128xbf16> to vector<64x128xbf16>
    %cst_23 = arith.constant dense<0.000000e+00> : vector<64x128xf32>
    %54 = tpu.matmul %44, %53, %cst_23 {dimension_numbers = #tpu.dot_dimension_numbers<[1], [0], [0], [1], [0, 0, 1, 1], [], []>} : vector<64x64xbf16>, vector<64x128xbf16>, vector<64x128xf32> -> vector<64x128xf32>
    %55 = arith.addf %51, %54 : vector<64x128xf32>
    %c0_24 = arith.constant 0 : index
    %c0_25 = arith.constant 0 : index
    %56 = vector.load %arg5[%c0_24, %c0_25] : memref<1x128xf32, #tpu.memory_space<vmem>>, vector<1x128xf32>
    %57 = vector.broadcast %56 : vector<1x128xf32> to vector<64x128xf32>
    %58 = arith.addf %55, %57 : vector<64x128xf32>
    %cst_26 = arith.constant 0.000000e+00 : f32
    %59 = vector.broadcast %cst_26 : f32 to vector<64x128xf32>
    %60 = arith.maximumf %58, %59 : vector<64x128xf32>
    %61 = vector.shape_cast %60 : vector<64x128xf32> to vector<32x2x128xf32>
    %cst_27 = arith.constant dense<0xFF800000> : vector<32x128xf32>
    %62 = vector.multi_reduction <maximumf>, %61, %cst_27 [1] : vector<32x2x128xf32> to vector<32x128xf32>
    %63 = vector.shape_cast %62 : vector<32x128xf32> to vector<8x512xf32>
    %64 = arith.truncf %63 : vector<8x512xf32> to vector<8x512xbf16>
    %c0_28 = arith.constant 0 : index
    %c0_29 = arith.constant 0 : index
    %65 = vector.load %arg6[%c0_28, %c0_29] : memref<512x512xbf16, #tpu.memory_space<vmem>>, vector<512x512xbf16>
    %cst_30 = arith.constant dense<0.000000e+00> : vector<8x512xf32>
    %66 = tpu.matmul %64, %65, %cst_30 {dimension_numbers = #tpu.dot_dimension_numbers<[1], [0], [0], [1], [0, 0, 1, 1], [], []>} : vector<8x512xbf16>, vector<512x512xbf16>, vector<8x512xf32> -> vector<8x512xf32>
    %c0_31 = arith.constant 0 : index
    %c0_32 = arith.constant 0 : index
    %67 = vector.load %arg7[%c0_31, %c0_32] : memref<1x512xf32, #tpu.memory_space<vmem>>, vector<1x512xf32>
    %68 = vector.broadcast %67 : vector<1x512xf32> to vector<8x512xf32>
    %69 = arith.addf %66, %68 : vector<8x512xf32>
    %cst_33 = arith.constant 0.000000e+00 : f32
    %70 = vector.broadcast %cst_33 : f32 to vector<8x512xf32>
    %71 = arith.maximumf %69, %70 : vector<8x512xf32>
    %72 = arith.truncf %71 : vector<8x512xf32> to vector<8x512xbf16>
    %c0_34 = arith.constant 0 : index
    %c0_35 = arith.constant 0 : index
    %73 = vector.load %arg8[%c0_34, %c0_35] : memref<512x128xbf16, #tpu.memory_space<vmem>>, vector<512x128xbf16>
    %cst_36 = arith.constant dense<0.000000e+00> : vector<8x128xf32>
    %74 = tpu.matmul %72, %73, %cst_36 {dimension_numbers = #tpu.dot_dimension_numbers<[1], [0], [0], [1], [0, 0, 1, 1], [], []>} : vector<8x512xbf16>, vector<512x128xbf16>, vector<8x128xf32> -> vector<8x128xf32>
    %c0_37 = arith.constant 0 : index
    %c0_38 = arith.constant 0 : index
    %75 = vector.load %arg9[%c0_37, %c0_38] : memref<1x128xf32, #tpu.memory_space<vmem>>, vector<1x128xf32>
    %76 = vector.broadcast %75 : vector<1x128xf32> to vector<8x128xf32>
    %77 = arith.addf %74, %76 : vector<8x128xf32>
    %c0_39 = arith.constant 0 : index
    %c0_40 = arith.constant 0 : index
    %78 = vector.load %arg10[%c0_39, %c0_40] : memref<8x128xf32, #tpu.memory_space<vmem>>, vector<8x128xf32>
    tpu.vector_store %arg10[%c0_39, %c0_40], %77 {strides = array<i32>} : memref<8x128xf32, #tpu.memory_space<vmem>>, vector<8x128xf32>,
    return
  }
  func.func @transform_0(%arg0: i32) -> (i32, i32) {
    %c0_i32 = arith.constant 0 : i32
    %c0_i32_0 = arith.constant 0 : i32
    return %arg0, %c0_i32 : i32, i32
  }
  func.func @transform_1(%arg0: i32) -> (i32, i32) {
    %c0_i32 = arith.constant 0 : i32
    %c0_i32_0 = arith.constant 0 : i32
    %c0_i32_1 = arith.constant 0 : i32
    return %c0_i32, %c0_i32_0 : i32, i32
  }
  func.func @transform_2(%arg0: i32) -> (i32, i32) {
    %c0_i32 = arith.constant 0 : i32
    %c0_i32_0 = arith.constant 0 : i32
    %c0_i32_1 = arith.constant 0 : i32
    return %c0_i32, %c0_i32_0 : i32, i32
  }
  func.func @transform_3(%arg0: i32) -> (i32, i32, i32) {
    %c0_i32 = arith.constant 0 : i32
    %c0_i32_0 = arith.constant 0 : i32
    %c0_i32_1 = arith.constant 0 : i32
    %c0_i32_2 = arith.constant 0 : i32
    return %c0_i32, %c0_i32_0, %c0_i32_1 : i32, i32, i32
  }
  func.func @transform_4(%arg0: i32) -> (i32, i32) {
    %c0_i32 = arith.constant 0 : i32
    %c0_i32_0 = arith.constant 0 : i32
    %c0_i32_1 = arith.constant 0 : i32
    return %c0_i32, %c0_i32_0 : i32, i32
  }
  func.func @transform_5(%arg0: i32) -> (i32, i32) {
    %c0_i32 = arith.constant 0 : i32
    %c0_i32_0 = arith.constant 0 : i32
    %c0_i32_1 = arith.constant 0 : i32
    return %c0_i32, %c0_i32_0 : i32, i32
  }
  func.func @transform_6(%arg0: i32) -> (i32, i32) {
    %c0_i32 = arith.constant 0 : i32
    %c0_i32_0 = arith.constant 0 : i32
    %c0_i32_1 = arith.constant 0 : i32
    return %c0_i32, %c0_i32_0 : i32, i32
  }
  func.func @transform_7(%arg0: i32) -> (i32, i32) {
    %c0_i32 = arith.constant 0 : i32
    %c0_i32_0 = arith.constant 0 : i32
    %c0_i32_1 = arith.constant 0 : i32
    return %c0_i32, %c0_i32_0 : i32, i32
  }
  func.func @transform_8(%arg0: i32) -> (i32, i32) {
    %c0_i32 = arith.constant 0 : i32
    %c0_i32_0 = arith.constant 0 : i32
    %c0_i32_1 = arith.constant 0 : i32
    return %c0_i32, %c0_i32_0 : i32, i32
  }
  func.func @transform_9(%arg0: i32) -> (i32, i32) {
    %c0_i32 = arith.constant 0 : i32
    %c0_i32_0 = arith.constant 0 : i32
    return %arg0, %c0_i32 : i32, i32
  }
}

</mosaic_0001>

<llo_original>
// kernel: multivariate_cnn_forward.1
$region0: #{multivariate_cnn_forward.1}
  #allocation0 [shape = 'u32[]', space=smem, size = 0x4, offset = 0x4, fixed_abs, tag = 'smem constant byte address 0x4 - core index']
  #allocation1 [shape = 'u32[144,128]{1,0:T(1,128)}', space=vmem, size = 0x12000, scoped, tag = 'internal scratch']
  %s0 = inlined_call_operand.vmem [shape: bf16[128,12], index: 0, kind: input, shape index: {}]
  %s1 = inlined_call_operand.vmem [shape: bf16[12,64], index: 1, kind: input, shape index: {}]
  %s2 = inlined_call_operand.vmem [shape: f32[1,64], index: 2, kind: input, shape index: {}]
  %s3 = inlined_call_operand.vmem [shape: bf16[3,64,128], index: 3, kind: input, shape index: {}]
  %s4 = inlined_call_operand.vmem [shape: f32[1,128], index: 4, kind: input, shape index: {}]
  %s5 = inlined_call_operand.vmem [shape: bf16[512,512], index: 5, kind: input, shape index: {}]
  %s6 = inlined_call_operand.vmem [shape: f32[1,512], index: 6, kind: input, shape index: {}]
  %s7 = inlined_call_operand.vmem [shape: bf16[512,128], index: 7, kind: input, shape index: {}]
  %s8 = inlined_call_operand.vmem [shape: f32[1,128], index: 8, kind: input, shape index: {}]
  %s9 = inlined_call_operand.vmem [shape: f32[8,128], index: 9, kind: output, shape index: {}]
  %s10 = sld [smem:[#allocation0]]
  $region46: #{multivariate_cnn_forward.1} parent=0
    _
  %s12 = ssub.s32 1, %s10
  %s13 = scalar_select 0, %s12, %s10
  // Predicated region
  $region2: #{multivariate_cnn_forward.1} parent=0 // pred_check
    _
  $region3: #{multivariate_cnn_forward.1} parent=0 // pred_check_branch
    %15 = sbr.rel (0) target = $region5
  $region4: #{multivariate_cnn_forward.1} parent=0 // pred_region
    _
  $region5: #{multivariate_cnn_forward.1} parent=0 // pred_fallthru
    _
  // Predicated region
  $region6: #{multivariate_cnn_forward.1} parent=0 // pred_check
    _
  $region7: #{multivariate_cnn_forward.1} parent=0 // pred_check_branch
    %17 = sbr.rel (0) target = $region9
  $region8: #{multivariate_cnn_forward.1} parent=0 // pred_region
    _
  $region9: #{multivariate_cnn_forward.1} parent=0 // pred_fallthru
    _
  // Predicated region
  $region10: #{multivariate_cnn_forward.1} parent=0 // pred_check
    _
  $region11: #{multivariate_cnn_forward.1} parent=0 // pred_check_branch
    %19 = sbr.rel (0) target = $region13
  $region12: #{multivariate_cnn_forward.1} parent=0 // pred_region
    _
  $region13: #{multivariate_cnn_forward.1} parent=0 // pred_fallthru
    _
  // Predicated region
  $region14: #{multivariate_cnn_forward.1} parent=0 // pred_check
    _
  $region15: #{multivariate_cnn_forward.1} parent=0 // pred_check_branch
    %21 = sbr.rel (0) target = $region17
  $region16: #{multivariate_cnn_forward.1} parent=0 // pred_region
    _
  $region17: #{multivariate_cnn_forward.1} parent=0 // pred_fallthru
    _
  // Predicated region
  $region18: #{multivariate_cnn_forward.1} parent=0 // pred_check
    _
  $region19: #{multivariate_cnn_forward.1} parent=0 // pred_check_branch
    %23 = sbr.rel (0) target = $region21
  $region20: #{multivariate_cnn_forward.1} parent=0 // pred_region
    _
  $region21: #{multivariate_cnn_forward.1} parent=0 // pred_fallthru
    _
  // Predicated region
  $region22: #{multivariate_cnn_forward.1} parent=0 // pred_check
    _
  $region23: #{multivariate_cnn_forward.1} parent=0 // pred_check_branch
    %25 = sbr.rel (0) target = $region25
  $region24: #{multivariate_cnn_forward.1} parent=0 // pred_region
    _
  $region25: #{multivariate_cnn_forward.1} parent=0 // pred_fallthru
    _
  // Predicated region
  $region26: #{multivariate_cnn_forward.1} parent=0 // pred_check
    _
  $region27: #{multivariate_cnn_forward.1} parent=0 // pred_check_branch
    %27 = sbr.rel (0) target = $region29
  $region28: #{multivariate_cnn_forward.1} parent=0 // pred_region
    _
  $region29: #{multivariate_cnn_forward.1} parent=0 // pred_fallthru
    _
  // Predicated region
  $region30: #{multivariate_cnn_forward.1} parent=0 // pred_check
    _
  $region31: #{multivariate_cnn_forward.1} parent=0 // pred_check_branch
    %29 = sbr.rel (0) target = $region33
  $region32: #{multivariate_cnn_forward.1} parent=0 // pred_region
    _
  $region33: #{multivariate_cnn_forward.1} parent=0 // pred_fallthru
    _
  // Predicated region
  $region34: #{multivariate_cnn_forward.1} parent=0 // pred_check
    _
  $region35: #{multivariate_cnn_forward.1} parent=0 // pred_check_branch
    %31 = sbr.rel (0) target = $region37
  $region36: #{multivariate_cnn_forward.1} parent=0 // pred_region
    _
  $region37: #{multivariate_cnn_forward.1} parent=0 // pred_fallthru
    _
  %v35 = vld [vmem:[%s0] sm:$0xf]
  %v36 = vld [vmem:[%s0 + $0x4] sm:$0xf]
  %v37 = vld [vmem:[%s0 + $0x8] sm:$0xf]
  %v38 = vld [vmem:[%s0 + $0xc] sm:$0xf]
  %v39 = vld [vmem:[%s0 + $0x10] sm:$0xf]
  %v40 = vld [vmem:[%s0 + $0x14] sm:$0xf]
  %v41 = vld [vmem:[%s0 + $0x18] sm:$0xf]
  %v42 = vld [vmem:[%s0 + $0x1c] sm:$0xf]
  %v43 = vld [vmem:[%s0 + $0x20] sm:$0xf]
  %v44 = vld [vmem:[%s0 + $0x24] sm:$0xf]
  %v45 = vld [vmem:[%s0 + $0x28] sm:$0xf]
  %v46 = vld [vmem:[%s0 + $0x2c] sm:$0xf]
  %v47 = vld [vmem:[%s0 + $0x30] sm:$0xf]
  %v48 = vld [vmem:[%s0 + $0x34] sm:$0xf]
  %v49 = vld [vmem:[%s0 + $0x38] sm:$0xf]
  %v50 = vld [vmem:[%s0 + $0x3c] sm:$0xf]
  %v51 = vld [vmem:[%s1] sm:$0xf]
  %v52 = vld [vmem:[%s1 + $0x4] sm:$0x3]
  %v53 = vld [vmem:[%s2] sm:$0x1]
  %v55 = vlaneseq
  %v56 = vshrl.u32 %v55, 7
  %v57 = vsub.s32 0, %v56
  %v58 = vrot.slane %v53, %v57
  %v76 = vunpack.c.l.b16 %v35
  %v77 = vunpack.c.l.b16 %v36
  %v78 = vunpack.c.l.b16 %v37
  %v79 = vunpack.c.l.b16 %v38
  %v80 = vunpack.c.l.b16 %v39
  %v81 = vunpack.c.l.b16 %v40
  %v82 = vunpack.c.l.b16 %v41
  %v83 = vunpack.c.l.b16 %v42
  %v84 = vunpack.c.l.b16 %v43
  %v85 = vunpack.c.l.b16 %v44
  %v86 = vunpack.c.l.b16 %v45
  %v87 = vunpack.c.l.b16 %v46
  %v88 = vunpack.c.l.b16 %v47
  %v89 = vunpack.c.l.b16 %v48
  %v90 = vunpack.c.l.b16 %v49
  %v91 = vunpack.c.l.b16 %v50
  %v92 = vpack.c.b16 %v77, %v76
  %v93 = vpack.c.b16 %v79, %v78
  %v94 = vpack.c.b16 %v81, %v80
  %v95 = vpack.c.b16 %v83, %v82
  %v96 = vpack.c.b16 %v85, %v84
  %v97 = vpack.c.b16 %v87, %v86
  %v98 = vpack.c.b16 %v89, %v88
  %v99 = vpack.c.b16 %v91, %v90
  %v102 = vunpack.c.l.b16 %v51
  %v103 = vunpack.c.l.b16 %v52
  %v104 = vpack.c.b16 %v103, %v102
  %vm105 = vcmask 97280
  %v107 = vsel %vm105, %v92, 0
  %v110 = vsel %vm105, %v93, 0
  %v113 = vsel %vm105, %v94, 0
  %v116 = vsel %vm105, %v95, 0
  %v119 = vsel %vm105, %v96, 0
  %v122 = vsel %vm105, %v97, 0
  %v125 = vsel %vm105, %v98, 0
  %v128 = vsel %vm105, %v99, 0
  %vm130 = vcmask 1045504
  %v132 = vsel %vm130, %v104, 0
  %134 = vmatprep.subr.bf16.mxu0 0
  %135 = vmatpush1.bf16.msra.mxu0 0
  %136 = vmatprep.subr.bf16.mxu0 0
  %137 = vmatpush1.bf16.msra.mxu0 0
  %138 = vmatprep.subr.bf16.mxu0 0
  %139 = vmatpush1.bf16.msra.mxu0 0
  %140 = vmatprep.subr.bf16.mxu0 0
  %141 = vmatpush1.bf16.msra.mxu0 0
  %142 = vmatprep.subr.bf16.mxu0 0
  %143 = vmatpush1.bf16.msra.mxu0 0
  %144 = vmatprep.subr.bf16.mxu0 0
  %145 = vmatpush1.bf16.msra.mxu0 0
  %146 = vmatprep.subr.bf16.mxu0 0
  %147 = vmatpush1.bf16.msra.mxu0 0
  %148 = vmatprep.subr.bf16.mxu0 0
  %149 = vmatpush1.bf16.msra.mxu0 %v132
  %150 = vmatprep.subr.bf16.mxu0 0
  %151 = vmatpush2.bf16.msra.mxu0 0
  %152 = vmatprep.subr.bf16.mxu0 0
  %153 = vmatpush2.bf16.msra.mxu0 0
  %154 = vmatprep.subr.bf16.mxu0 0
  %155 = vmatpush2.bf16.msra.mxu0 0
  %156 = vmatprep.subr.bf16.mxu0 0
  %157 = vmatpush2.bf16.msra.mxu0 0
  %158 = vmatprep.subr.bf16.mxu0 0
  %159 = vmatpush2.bf16.msra.mxu0 0
  %160 = vmatprep.subr.bf16.mxu0 0
  %161 = vmatpush2.bf16.msra.mxu0 0
  %162 = vmatprep.subr.bf16.mxu0 0
  %163 = vmatpush2.bf16.msra.mxu0 0
  %164 = vmatprep.subr.bf16.mxu0 0
  %165 = vmatpush2.bf16.msra.mxu0 0
  %166 = vmatprep.mubr.bf16.mxu0 0
  %167 = vmatmul.mubr.bf16.gmra.mxu0 %v107
  %v168 = vpop.f32.mrf.mxu0
  %v169 = vadd.f32 %v58, %v168
  %v170 = vpop.f32.mrf.mxu0
  %v171 = vpop.f32.mrf.mxu0
  %v172 = vadd.f32 %v58, %v171
  %v173 = vpop.f32.mrf.mxu0
  %174 = vmatprep.mubr.bf16.mxu0 0
  %175 = vmatmul.mubr.bf16.gmra.mxu0 %v110
  %v176 = vpop.f32.mrf.mxu0
  %v177 = vadd.f32 %v58, %v176
  %v178 = vpop.f32.mrf.mxu0
  %v179 = vpop.f32.mrf.mxu0
  %v180 = vadd.f32 %v58, %v179
  %v181 = vpop.f32.mrf.mxu0
  %182 = vmatprep.mubr.bf16.mxu0 0
  %183 = vmatmul.mubr.bf16.gmra.mxu0 %v113
  %v184 = vpop.f32.mrf.mxu0
  %v185 = vadd.f32 %v58, %v184
  %v186 = vpop.f32.mrf.mxu0
  %v187 = vpop.f32.mrf.mxu0
  %v188 = vadd.f32 %v58, %v187
  %v189 = vpop.f32.mrf.mxu0
  %190 = vmatprep.mubr.bf16.mxu0 0
  %191 = vmatmul.mubr.bf16.gmra.mxu0 %v116
  %v192 = vpop.f32.mrf.mxu0
  %v193 = vadd.f32 %v58, %v192
  %v194 = vpop.f32.mrf.mxu0
  %v195 = vpop.f32.mrf.mxu0
  %v196 = vadd.f32 %v58, %v195
  %v197 = vpop.f32.mrf.mxu0
  %198 = vmatprep.mubr.bf16.mxu0 0
  %199 = vmatmul.mubr.bf16.gmra.mxu0 %v119
  %v200 = vpop.f32.mrf.mxu0
  %v201 = vadd.f32 %v58, %v200
  %v202 = vpop.f32.mrf.mxu0
  %v203 = vpop.f32.mrf.mxu0
  %v204 = vadd.f32 %v58, %v203
  %v205 = vpop.f32.mrf.mxu0
  %206 = vmatprep.mubr.bf16.mxu0 0
  %207 = vmatmul.mubr.bf16.gmra.mxu0 %v122
  %v208 = vpop.f32.mrf.mxu0
  %v209 = vadd.f32 %v58, %v208
  %v210 = vpop.f32.mrf.mxu0
  %v211 = vpop.f32.mrf.mxu0
  %v212 = vadd.f32 %v58, %v211
  %v213 = vpop.f32.mrf.mxu0
  %214 = vmatprep.mubr.bf16.mxu0 0
  %215 = vmatmul.mubr.bf16.gmra.mxu0 %v125
  %v216 = vpop.f32.mrf.mxu0
  %v217 = vadd.f32 %v58, %v216
  %v218 = vpop.f32.mrf.mxu0
  %v219 = vpop.f32.mrf.mxu0
  %v220 = vadd.f32 %v58, %v219
  %v221 = vpop.f32.mrf.mxu0
  %222 = vmatprep.mubr.bf16.mxu0 0
  %223 = vmatmul.mubr.bf16.gmra.mxu0 %v128
  %v224 = vpop.f32.mrf.mxu0
  %v225 = vadd.f32 %v58, %v224
  %v226 = vpop.f32.mrf.mxu0
  %v227 = vpop.f32.mrf.mxu0
  %v228 = vadd.f32 %v58, %v227
  %v229 = vpop.f32.mrf.mxu0
  %230 = vdwg.mxu0
  %v231 = vmax.f32 %v169, 0.0
  %v232 = vmax.f32 %v172, 0.0
  %v233 = vmax.f32 %v177, 0.0
  %v234 = vmax.f32 %v180, 0.0
  %v235 = vmax.f32 %v185, 0.0
  %v236 = vmax.f32 %v188, 0.0
  %v237 = vmax.f32 %v193, 0.0
  %v238 = vmax.f32 %v196, 0.0
  %v239 = vmax.f32 %v201, 0.0
  %v240 = vmax.f32 %v204, 0.0
  %v241 = vmax.f32 %v209, 0.0
  %v242 = vmax.f32 %v212, 0.0
  %v243 = vmax.f32 %v217, 0.0
  %v244 = vmax.f32 %v220, 0.0
  %v245 = vmax.f32 %v225, 0.0
  %v246 = vmax.f32 %v228, 0.0
  %v263 = vcombine.high %v231, %v231
  %v265 = vunpack.c.l.s4 1983009808
  %v266 = vunpack.c.0.s8 %v265
  %v267 = vlaneseq
  %v268 = vshrl.u32 %v267, 7
  %v269 = vsub.s32 %v266, %v268
  %v270 = vrot.slane %v231, %v269
  %v272 = vunpack.c.l.s4 1983009808
  %v273 = vunpack.c.0.s8 %v272
  %v274 = vlaneseq
  %v275 = vshrl.u32 %v274, 7
  %v276 = vsub.s32 %v273, %v275
  %v277 = vrot.slane %v263, %v276
  %v278 = vcombine.high %v270, %v270
  %v279 = vcombine.high %v277, %v277
  %v280 = vcombine.high %v232, %v232
  %v282 = vunpack.c.l.s4 1983009808
  %v283 = vunpack.c.0.s8 %v282
  %v284 = vlaneseq
  %v285 = vshrl.u32 %v284, 7
  %v286 = vsub.s32 %v283, %v285
  %v287 = vrot.slane %v232, %v286
  %v289 = vunpack.c.l.s4 1983009808
  %v290 = vunpack.c.0.s8 %v289
  %v291 = vlaneseq
  %v292 = vshrl.u32 %v291, 7
  %v293 = vsub.s32 %v290, %v292
  %v294 = vrot.slane %v280, %v293
  %v295 = vcombine.high %v287, %v287
  %v296 = vcombine.high %v294, %v294
  %v297 = vcombine.high %v233, %v233
  %v299 = vunpack.c.l.s4 1983009808
  %v300 = vunpack.c.0.s8 %v299
  %v301 = vlaneseq
  %v302 = vshrl.u32 %v301, 7
  %v303 = vsub.s32 %v300, %v302
  %v304 = vrot.slane %v233, %v303
  %v306 = vunpack.c.l.s4 1983009808
  %v307 = vunpack.c.0.s8 %v306
  %v308 = vlaneseq
  %v309 = vshrl.u32 %v308, 7
  %v310 = vsub.s32 %v307, %v309
  %v311 = vrot.slane %v297, %v310
  %v312 = vcombine.high %v304, %v304
  %v313 = vcombine.high %v311, %v311
  %v314 = vcombine.high %v234, %v234
  %v316 = vunpack.c.l.s4 1983009808
  %v317 = vunpack.c.0.s8 %v316
  %v318 = vlaneseq
  %v319 = vshrl.u32 %v318, 7
  %v320 = vsub.s32 %v317, %v319
  %v321 = vrot.slane %v234, %v320
  %v323 = vunpack.c.l.s4 1983009808
  %v324 = vunpack.c.0.s8 %v323
  %v325 = vlaneseq
  %v326 = vshrl.u32 %v325, 7
  %v327 = vsub.s32 %v324, %v326
  %v328 = vrot.slane %v314, %v327
  %v329 = vcombine.high %v321, %v321
  %v330 = vcombine.high %v328, %v328
  %v331 = vcombine.high %v235, %v235
  %v333 = vunpack.c.l.s4 1983009808
  %v334 = vunpack.c.0.s8 %v333
  %v335 = vlaneseq
  %v336 = vshrl.u32 %v335, 7
  %v337 = vsub.s32 %v334, %v336
  %v338 = vrot.slane %v235, %v337
  %v340 = vunpack.c.l.s4 1983009808
  %v341 = vunpack.c.0.s8 %v340
  %v342 = vlaneseq
  %v343 = vshrl.u32 %v342, 7
  %v344 = vsub.s32 %v341, %v343
  %v345 = vrot.slane %v331, %v344
  %v346 = vcombine.high %v338, %v338
  %v347 = vcombine.high %v345, %v345
  %v348 = vcombine.high %v236, %v236
  %v350 = vunpack.c.l.s4 1983009808
  %v351 = vunpack.c.0.s8 %v350
  %v352 = vlaneseq
  %v353 = vshrl.u32 %v352, 7
  %v354 = vsub.s32 %v351, %v353
  %v355 = vrot.slane %v236, %v354
  %v357 = vunpack.c.l.s4 1983009808
  %v358 = vunpack.c.0.s8 %v357
  %v359 = vlaneseq
  %v360 = vshrl.u32 %v359, 7
  %v361 = vsub.s32 %v358, %v360
  %v362 = vrot.slane %v348, %v361
  %v363 = vcombine.high %v355, %v355
  %v364 = vcombine.high %v362, %v362
  %v365 = vcombine.high %v237, %v237
  %v367 = vunpack.c.l.s4 1983009808
  %v368 = vunpack.c.0.s8 %v367
  %v369 = vlaneseq
  %v370 = vshrl.u32 %v369, 7
  %v371 = vsub.s32 %v368, %v370
  %v372 = vrot.slane %v237, %v371
  %v374 = vunpack.c.l.s4 1983009808
  %v375 = vunpack.c.0.s8 %v374
  %v376 = vlaneseq
  %v377 = vshrl.u32 %v376, 7
  %v378 = vsub.s32 %v375, %v377
  %v379 = vrot.slane %v365, %v378
  %v380 = vcombine.high %v372, %v372
  %v381 = vcombine.high %v379, %v379
  %v382 = vcombine.high %v238, %v238
  %v384 = vunpack.c.l.s4 1983009808
  %v385 = vunpack.c.0.s8 %v384
  %v386 = vlaneseq
  %v387 = vshrl.u32 %v386, 7
  %v388 = vsub.s32 %v385, %v387
  %v389 = vrot.slane %v238, %v388
  %v391 = vunpack.c.l.s4 1983009808
  %v392 = vunpack.c.0.s8 %v391
  %v393 = vlaneseq
  %v394 = vshrl.u32 %v393, 7
  %v395 = vsub.s32 %v392, %v394
  %v396 = vrot.slane %v382, %v395
  %v397 = vcombine.high %v389, %v389
  %v398 = vcombine.high %v396, %v396
  %v399 = vcombine.high %v239, %v239
  %v401 = vunpack.c.l.s4 1983009808
  %v402 = vunpack.c.0.s8 %v401
  %v403 = vlaneseq
  %v404 = vshrl.u32 %v403, 7
  %v405 = vsub.s32 %v402, %v404
  %v406 = vrot.slane %v239, %v405
  %v408 = vunpack.c.l.s4 1983009808
  %v409 = vunpack.c.0.s8 %v408
  %v410 = vlaneseq
  %v411 = vshrl.u32 %v410, 7
  %v412 = vsub.s32 %v409, %v411
  %v413 = vrot.slane %v399, %v412
  %v414 = vcombine.high %v406, %v406
  %v415 = vcombine.high %v413, %v413
  %v416 = vcombine.high %v240, %v240
  %v418 = vunpack.c.l.s4 1983009808
  %v419 = vunpack.c.0.s8 %v418
  %v420 = vlaneseq
  %v421 = vshrl.u32 %v420, 7
  %v422 = vsub.s32 %v419, %v421
  %v423 = vrot.slane %v240, %v422
  %v425 = vunpack.c.l.s4 1983009808
  %v426 = vunpack.c.0.s8 %v425
  %v427 = vlaneseq
  %v428 = vshrl.u32 %v427, 7
  %v429 = vsub.s32 %v426, %v428
  %v430 = vrot.slane %v416, %v429
  %v431 = vcombine.high %v423, %v423
  %v432 = vcombine.high %v430, %v430
  %v433 = vcombine.high %v241, %v241
  %v435 = vunpack.c.l.s4 1983009808
  %v436 = vunpack.c.0.s8 %v435
  %v437 = vlaneseq
  %v438 = vshrl.u32 %v437, 7
  %v439 = vsub.s32 %v436, %v438
  %v440 = vrot.slane %v241, %v439
  %v442 = vunpack.c.l.s4 1983009808
  %v443 = vunpack.c.0.s8 %v442
  %v444 = vlaneseq
  %v445 = vshrl.u32 %v444, 7
  %v446 = vsub.s32 %v443, %v445
  %v447 = vrot.slane %v433, %v446
  %v448 = vcombine.high %v440, %v440
  %v449 = vcombine.high %v447, %v447
  %v450 = vcombine.high %v242, %v242
  %v452 = vunpack.c.l.s4 1983009808
  %v453 = vunpack.c.0.s8 %v452
  %v454 = vlaneseq
  %v455 = vshrl.u32 %v454, 7
  %v456 = vsub.s32 %v453, %v455
  %v457 = vrot.slane %v242, %v456
  %v459 = vunpack.c.l.s4 1983009808
  %v460 = vunpack.c.0.s8 %v459
  %v461 = vlaneseq
  %v462 = vshrl.u32 %v461, 7
  %v463 = vsub.s32 %v460, %v462
  %v464 = vrot.slane %v450, %v463
  %v465 = vcombine.high %v457, %v457
  %v466 = vcombine.high %v464, %v464
  %v467 = vcombine.high %v243, %v243
  %v469 = vunpack.c.l.s4 1983009808
  %v470 = vunpack.c.0.s8 %v469
  %v471 = vlaneseq
  %v472 = vshrl.u32 %v471, 7
  %v473 = vsub.s32 %v470, %v472
  %v474 = vrot.slane %v243, %v473
  %v476 = vunpack.c.l.s4 1983009808
  %v477 = vunpack.c.0.s8 %v476
  %v478 = vlaneseq
  %v479 = vshrl.u32 %v478, 7
  %v480 = vsub.s32 %v477, %v479
  %v481 = vrot.slane %v467, %v480
  %v482 = vcombine.high %v474, %v474
  %v483 = vcombine.high %v481, %v481
  %v484 = vcombine.high %v244, %v244
  %v486 = vunpack.c.l.s4 1983009808
  %v487 = vunpack.c.0.s8 %v486
  %v488 = vlaneseq
  %v489 = vshrl.u32 %v488, 7
  %v490 = vsub.s32 %v487, %v489
  %v491 = vrot.slane %v244, %v490
  %v493 = vunpack.c.l.s4 1983009808
  %v494 = vunpack.c.0.s8 %v493
  %v495 = vlaneseq
  %v496 = vshrl.u32 %v495, 7
  %v497 = vsub.s32 %v494, %v496
  %v498 = vrot.slane %v484, %v497
  %v499 = vcombine.high %v491, %v491
  %v500 = vcombine.high %v498, %v498
  %v501 = vcombine.high %v245, %v245
  %v503 = vunpack.c.l.s4 1983009808
  %v504 = vunpack.c.0.s8 %v503
  %v505 = vlaneseq
  %v506 = vshrl.u32 %v505, 7
  %v507 = vsub.s32 %v504, %v506
  %v508 = vrot.slane %v245, %v507
  %v510 = vunpack.c.l.s4 1983009808
  %v511 = vunpack.c.0.s8 %v510
  %v512 = vlaneseq
  %v513 = vshrl.u32 %v512, 7
  %v514 = vsub.s32 %v511, %v513
  %v515 = vrot.slane %v501, %v514
  %v516 = vcombine.high %v508, %v508
  %v517 = vcombine.high %v515, %v515
  %v518 = vcombine.high %v246, %v246
  %v520 = vunpack.c.l.s4 1983009808
  %v521 = vunpack.c.0.s8 %v520
  %v522 = vlaneseq
  %v523 = vshrl.u32 %v522, 7
  %v524 = vsub.s32 %v521, %v523
  %v525 = vrot.slane %v246, %v524
  %v527 = vunpack.c.l.s4 1983009808
  %v528 = vunpack.c.0.s8 %v527
  %v529 = vlaneseq
  %v530 = vshrl.u32 %v529, 7
  %v531 = vsub.s32 %v528, %v530
  %v532 = vrot.slane %v518, %v531
  %v533 = vcombine.high %v525, %v525
  %v534 = vcombine.high %v532, %v532
  %vm599 = vcmask 517120
  %v600 = vsel %vm599, %v270, -inf
  %v601 = vrot.slane %v600, 4
  %v602 = vmax.f32 %v600, %v601
  %v603 = vrot.slane %v602, 2
  %v604 = vmax.f32 %v602, %v603
  %v605 = vrot.slane %v604, 1
  %v606 = vmax.f32 %v604, %v605
  %v607 = vsel %vm599, %v278, -inf
  %v608 = vrot.slane %v607, 4
  %v609 = vmax.f32 %v607, %v608
  %v610 = vrot.slane %v609, 2
  %v611 = vmax.f32 %v609, %v610
  %v612 = vrot.slane %v611, 1
  %v613 = vmax.f32 %v611, %v612
  %v614 = vsel %vm599, %v277, -inf
  %v615 = vrot.slane %v614, 4
  %v616 = vmax.f32 %v614, %v615
  %v617 = vrot.slane %v616, 2
  %v618 = vmax.f32 %v616, %v617
  %v619 = vrot.slane %v618, 1
  %v620 = vmax.f32 %v618, %v619
  %v621 = vsel %vm599, %v279, -inf
  %v622 = vrot.slane %v621, 4
  %v623 = vmax.f32 %v621, %v622
  %v624 = vrot.slane %v623, 2
  %v625 = vmax.f32 %v623, %v624
  %v626 = vrot.slane %v625, 1
  %v627 = vmax.f32 %v625, %v626
  %v628 = vsel %vm599, %v287, -inf
  %v629 = vrot.slane %v628, 4
  %v630 = vmax.f32 %v628, %v629
  %v631 = vrot.slane %v630, 2
  %v632 = vmax.f32 %v630, %v631
  %v633 = vrot.slane %v632, 1
  %v634 = vmax.f32 %v632, %v633
  %v635 = vsel %vm599, %v295, -inf
  %v636 = vrot.slane %v635, 4
  %v637 = vmax.f32 %v635, %v636
  %v638 = vrot.slane %v637, 2
  %v639 = vmax.f32 %v637, %v638
  %v640 = vrot.slane %v639, 1
  %v641 = vmax.f32 %v639, %v640
  %v642 = vsel %vm599, %v294, -inf
  %v643 = vrot.slane %v642, 4
  %v644 = vmax.f32 %v642, %v643
  %v645 = vrot.slane %v644, 2
  %v646 = vmax.f32 %v644, %v645
  %v647 = vrot.slane %v646, 1
  %v648 = vmax.f32 %v646, %v647
  %v649 = vsel %vm599, %v296, -inf
  %v650 = vrot.slane %v649, 4
  %v651 = vmax.f32 %v649, %v650
  %v652 = vrot.slane %v651, 2
  %v653 = vmax.f32 %v651, %v652
  %v654 = vrot.slane %v653, 1
  %v655 = vmax.f32 %v653, %v654
  %v656 = vsel %vm599, %v304, -inf
  %v657 = vrot.slane %v656, 4
  %v658 = vmax.f32 %v656, %v657
  %v659 = vrot.slane %v658, 2
  %v660 = vmax.f32 %v658, %v659
  %v661 = vrot.slane %v660, 1
  %v662 = vmax.f32 %v660, %v661
  %v663 = vsel %vm599, %v312, -inf
  %v664 = vrot.slane %v663, 4
  %v665 = vmax.f32 %v663, %v664
  %v666 = vrot.slane %v665, 2
  %v667 = vmax.f32 %v665, %v666
  %v668 = vrot.slane %v667, 1
  %v669 = vmax.f32 %v667, %v668
  %v670 = vsel %vm599, %v311, -inf
  %v671 = vrot.slane %v670, 4
  %v672 = vmax.f32 %v670, %v671
  %v673 = vrot.slane %v672, 2
  %v674 = vmax.f32 %v672, %v673
  %v675 = vrot.slane %v674, 1
  %v676 = vmax.f32 %v674, %v675
  %v677 = vsel %vm599, %v313, -inf
  %v678 = vrot.slane %v677, 4
  %v679 = vmax.f32 %v677, %v678
  %v680 = vrot.slane %v679, 2
  %v681 = vmax.f32 %v679, %v680
  %v682 = vrot.slane %v681, 1
  %v683 = vmax.f32 %v681, %v682
  %v684 = vsel %vm599, %v321, -inf
  %v685 = vrot.slane %v684, 4
  %v686 = vmax.f32 %v684, %v685
  %v687 = vrot.slane %v686, 2
  %v688 = vmax.f32 %v686, %v687
  %v689 = vrot.slane %v688, 1
  %v690 = vmax.f32 %v688, %v689
  %v691 = vsel %vm599, %v329, -inf
  %v692 = vrot.slane %v691, 4
  %v693 = vmax.f32 %v691, %v692
  %v694 = vrot.slane %v693, 2
  %v695 = vmax.f32 %v693, %v694
  %v696 = vrot.slane %v695, 1
  %v697 = vmax.f32 %v695, %v696
  %v698 = vsel %vm599, %v328, -inf
  %v699 = vrot.slane %v698, 4
  %v700 = vmax.f32 %v698, %v699
  %v701 = vrot.slane %v700, 2
  %v702 = vmax.f32 %v700, %v701
  %v703 = vrot.slane %v702, 1
  %v704 = vmax.f32 %v702, %v703
  %v705 = vsel %vm599, %v330, -inf
  %v706 = vrot.slane %v705, 4
  %v707 = vmax.f32 %v705, %v706
  %v708 = vrot.slane %v707, 2
  %v709 = vmax.f32 %v707, %v708
  %v710 = vrot.slane %v709, 1
  %v711 = vmax.f32 %v709, %v710
  %v712 = vsel %vm599, %v338, -inf
  %v713 = vrot.slane %v712, 4
  %v714 = vmax.f32 %v712, %v713
  %v715 = vrot.slane %v714, 2
  %v716 = vmax.f32 %v714, %v715
  %v717 = vrot.slane %v716, 1
  %v718 = vmax.f32 %v716, %v717
  %v719 = vsel %vm599, %v346, -inf
  %v720 = vrot.slane %v719, 4
  %v721 = vmax.f32 %v719, %v720
  %v722 = vrot.slane %v721, 2
  %v723 = vmax.f32 %v721, %v722
  %v724 = vrot.slane %v723, 1
  %v725 = vmax.f32 %v723, %v724
  %v726 = vsel %vm599, %v345, -inf
  %v727 = vrot.slane %v726, 4
  %v728 = vmax.f32 %v726, %v727
  %v729 = vrot.slane %v728, 2
  %v730 = vmax.f32 %v728, %v729
  %v731 = vrot.slane %v730, 1
  %v732 = vmax.f32 %v730, %v731
  %v733 = vsel %vm599, %v347, -inf
  %v734 = vrot.slane %v733, 4
  %v735 = vmax.f32 %v733, %v734
  %v736 = vrot.slane %v735, 2
  %v737 = vmax.f32 %v735, %v736
  %v738 = vrot.slane %v737, 1
  %v739 = vmax.f32 %v737, %v738
  %v740 = vsel %vm599, %v355, -inf
  %v741 = vrot.slane %v740, 4
  %v742 = vmax.f32 %v740, %v741
  %v743 = vrot.slane %v742, 2
  %v744 = vmax.f32 %v742, %v743
  %v745 = vrot.slane %v744, 1
  %v746 = vmax.f32 %v744, %v745
  %v747 = vsel %vm599, %v363, -inf
  %v748 = vrot.slane %v747, 4
  %v749 = vmax.f32 %v747, %v748
  %v750 = vrot.slane %v749, 2
  %v751 = vmax.f32 %v749, %v750
  %v752 = vrot.slane %v751, 1
  %v753 = vmax.f32 %v751, %v752
  %v754 = vsel %vm599, %v362, -inf
  %v755 = vrot.slane %v754, 4
  %v756 = vmax.f32 %v754, %v755
  %v757 = vrot.slane %v756, 2
  %v758 = vmax.f32 %v756, %v757
  %v759 = vrot.slane %v758, 1
  %v760 = vmax.f32 %v758, %v759
  %v761 = vsel %vm599, %v364, -inf
  %v762 = vrot.slane %v761, 4
  %v763 = vmax.f32 %v761, %v762
  %v764 = vrot.slane %v763, 2
  %v765 = vmax.f32 %v763, %v764
  %v766 = vrot.slane %v765, 1
  %v767 = vmax.f32 %v765, %v766
  %v768 = vsel %vm599, %v372, -inf
  %v769 = vrot.slane %v768, 4
  %v770 = vmax.f32 %v768, %v769
  %v771 = vrot.slane %v770, 2
  %v772 = vmax.f32 %v770, %v771
  %v773 = vrot.slane %v772, 1
  %v774 = vmax.f32 %v772, %v773
  %v775 = vsel %vm599, %v380, -inf
  %v776 = vrot.slane %v775, 4
  %v777 = vmax.f32 %v775, %v776
  %v778 = vrot.slane %v777, 2
  %v779 = vmax.f32 %v777, %v778
  %v780 = vrot.slane %v779, 1
  %v781 = vmax.f32 %v779, %v780
  %v782 = vsel %vm599, %v379, -inf
  %v783 = vrot.slane %v782, 4
  %v784 = vmax.f32 %v782, %v783
  %v785 = vrot.slane %v784, 2
  %v786 = vmax.f32 %v784, %v785
  %v787 = vrot.slane %v786, 1
  %v788 = vmax.f32 %v786, %v787
  %v789 = vsel %vm599, %v381, -inf
  %v790 = vrot.slane %v789, 4
  %v791 = vmax.f32 %v789, %v790
  %v792 = vrot.slane %v791, 2
  %v793 = vmax.f32 %v791, %v792
  %v794 = vrot.slane %v793, 1
  %v795 = vmax.f32 %v793, %v794
  %v796 = vsel %vm599, %v389, -inf
  %v797 = vrot.slane %v796, 4
  %v798 = vmax.f32 %v796, %v797
  %v799 = vrot.slane %v798, 2
  %v800 = vmax.f32 %v798, %v799
  %v801 = vrot.slane %v800, 1
  %v802 = vmax.f32 %v800, %v801
  %v803 = vsel %vm599, %v397, -inf
  %v804 = vrot.slane %v803, 4
  %v805 = vmax.f32 %v803, %v804
  %v806 = vrot.slane %v805, 2
  %v807 = vmax.f32 %v805, %v806
  %v808 = vrot.slane %v807, 1
  %v809 = vmax.f32 %v807, %v808
  %v810 = vsel %vm599, %v396, -inf
  %v811 = vrot.slane %v810, 4
  %v812 = vmax.f32 %v810, %v811
  %v813 = vrot.slane %v812, 2
  %v814 = vmax.f32 %v812, %v813
  %v815 = vrot.slane %v814, 1
  %v816 = vmax.f32 %v814, %v815
  %v817 = vsel %vm599, %v398, -inf
  %v818 = vrot.slane %v817, 4
  %v819 = vmax.f32 %v817, %v818
  %v820 = vrot.slane %v819, 2
  %v821 = vmax.f32 %v819, %v820
  %v822 = vrot.slane %v821, 1
  %v823 = vmax.f32 %v821, %v822
  %v824 = vsel %vm599, %v406, -inf
  %v825 = vrot.slane %v824, 4
  %v826 = vmax.f32 %v824, %v825
  %v827 = vrot.slane %v826, 2
  %v828 = vmax.f32 %v826, %v827
  %v829 = vrot.slane %v828, 1
  %v830 = vmax.f32 %v828, %v829
  %v831 = vsel %vm599, %v414, -inf
  %v832 = vrot.slane %v831, 4
  %v833 = vmax.f32 %v831, %v832
  %v834 = vrot.slane %v833, 2
  %v835 = vmax.f32 %v833, %v834
  %v836 = vrot.slane %v835, 1
  %v837 = vmax.f32 %v835, %v836
  %v838 = vsel %vm599, %v413, -inf
  %v839 = vrot.slane %v838, 4
  %v840 = vmax.f32 %v838, %v839
  %v841 = vrot.slane %v840, 2
  %v842 = vmax.f32 %v840, %v841
  %v843 = vrot.slane %v842, 1
  %v844 = vmax.f32 %v842, %v843
  %v845 = vsel %vm599, %v415, -inf
  %v846 = vrot.slane %v845, 4
  %v847 = vmax.f32 %v845, %v846
  %v848 = vrot.slane %v847, 2
  %v849 = vmax.f32 %v847, %v848
  %v850 = vrot.slane %v849, 1
  %v851 = vmax.f32 %v849, %v850
  %v852 = vsel %vm599, %v423, -inf
  %v853 = vrot.slane %v852, 4
  %v854 = vmax.f32 %v852, %v853
  %v855 = vrot.slane %v854, 2
  %v856 = vmax.f32 %v854, %v855
  %v857 = vrot.slane %v856, 1
  %v858 = vmax.f32 %v856, %v857
  %v859 = vsel %vm599, %v431, -inf
  %v860 = vrot.slane %v859, 4
  %v861 = vmax.f32 %v859, %v860
  %v862 = vrot.slane %v861, 2
  %v863 = vmax.f32 %v861, %v862
  %v864 = vrot.slane %v863, 1
  %v865 = vmax.f32 %v863, %v864
  %v866 = vsel %vm599, %v430, -inf
  %v867 = vrot.slane %v866, 4
  %v868 = vmax.f32 %v866, %v867
  %v869 = vrot.slane %v868, 2
  %v870 = vmax.f32 %v868, %v869
  %v871 = vrot.slane %v870, 1
  %v872 = vmax.f32 %v870, %v871
  %v873 = vsel %vm599, %v432, -inf
  %v874 = vrot.slane %v873, 4
  %v875 = vmax.f32 %v873, %v874
  %v876 = vrot.slane %v875, 2
  %v877 = vmax.f32 %v875, %v876
  %v878 = vrot.slane %v877, 1
  %v879 = vmax.f32 %v877, %v878
  %v880 = vsel %vm599, %v440, -inf
  %v881 = vrot.slane %v880, 4
  %v882 = vmax.f32 %v880, %v881
  %v883 = vrot.slane %v882, 2
  %v884 = vmax.f32 %v882, %v883
  %v885 = vrot.slane %v884, 1
  %v886 = vmax.f32 %v884, %v885
  %v887 = vsel %vm599, %v448, -inf
  %v888 = vrot.slane %v887, 4
  %v889 = vmax.f32 %v887, %v888
  %v890 = vrot.slane %v889, 2
  %v891 = vmax.f32 %v889, %v890
  %v892 = vrot.slane %v891, 1
  %v893 = vmax.f32 %v891, %v892
  %v894 = vsel %vm599, %v447, -inf
  %v895 = vrot.slane %v894, 4
  %v896 = vmax.f32 %v894, %v895
  %v897 = vrot.slane %v896, 2
  %v898 = vmax.f32 %v896, %v897
  %v899 = vrot.slane %v898, 1
  %v900 = vmax.f32 %v898, %v899
  %v901 = vsel %vm599, %v449, -inf
  %v902 = vrot.slane %v901, 4
  %v903 = vmax.f32 %v901, %v902
  %v904 = vrot.slane %v903, 2
  %v905 = vmax.f32 %v903, %v904
  %v906 = vrot.slane %v905, 1
  %v907 = vmax.f32 %v905, %v906
  %v908 = vsel %vm599, %v457, -inf
  %v909 = vrot.slane %v908, 4
  %v910 = vmax.f32 %v908, %v909
  %v911 = vrot.slane %v910, 2
  %v912 = vmax.f32 %v910, %v911
  %v913 = vrot.slane %v912, 1
  %v914 = vmax.f32 %v912, %v913
  %v915 = vsel %vm599, %v465, -inf
  %v916 = vrot.slane %v915, 4
  %v917 = vmax.f32 %v915, %v916
  %v918 = vrot.slane %v917, 2
  %v919 = vmax.f32 %v917, %v918
  %v920 = vrot.slane %v919, 1
  %v921 = vmax.f32 %v919, %v920
  %v922 = vsel %vm599, %v464, -inf
  %v923 = vrot.slane %v922, 4
  %v924 = vmax.f32 %v922, %v923
  %v925 = vrot.slane %v924, 2
  %v926 = vmax.f32 %v924, %v925
  %v927 = vrot.slane %v926, 1
  %v928 = vmax.f32 %v926, %v927
  %v929 = vsel %vm599, %v466, -inf
  %v930 = vrot.slane %v929, 4
  %v931 = vmax.f32 %v929, %v930
  %v932 = vrot.slane %v931, 2
  %v933 = vmax.f32 %v931, %v932
  %v934 = vrot.slane %v933, 1
  %v935 = vmax.f32 %v933, %v934
  %v936 = vsel %vm599, %v474, -inf
  %v937 = vrot.slane %v936, 4
  %v938 = vmax.f32 %v936, %v937
  %v939 = vrot.slane %v938, 2
  %v940 = vmax.f32 %v938, %v939
  %v941 = vrot.slane %v940, 1
  %v942 = vmax.f32 %v940, %v941
  %v943 = vsel %vm599, %v482, -inf
  %v944 = vrot.slane %v943, 4
  %v945 = vmax.f32 %v943, %v944
  %v946 = vrot.slane %v945, 2
  %v947 = vmax.f32 %v945, %v946
  %v948 = vrot.slane %v947, 1
  %v949 = vmax.f32 %v947, %v948
  %v950 = vsel %vm599, %v481, -inf
  %v951 = vrot.slane %v950, 4
  %v952 = vmax.f32 %v950, %v951
  %v953 = vrot.slane %v952, 2
  %v954 = vmax.f32 %v952, %v953
  %v955 = vrot.slane %v954, 1
  %v956 = vmax.f32 %v954, %v955
  %v957 = vsel %vm599, %v483, -inf
  %v958 = vrot.slane %v957, 4
  %v959 = vmax.f32 %v957, %v958
  %v960 = vrot.slane %v959, 2
  %v961 = vmax.f32 %v959, %v960
  %v962 = vrot.slane %v961, 1
  %v963 = vmax.f32 %v961, %v962
  %v964 = vsel %vm599, %v491, -inf
  %v965 = vrot.slane %v964, 4
  %v966 = vmax.f32 %v964, %v965
  %v967 = vrot.slane %v966, 2
  %v968 = vmax.f32 %v966, %v967
  %v969 = vrot.slane %v968, 1
  %v970 = vmax.f32 %v968, %v969
  %v971 = vsel %vm599, %v499, -inf
  %v972 = vrot.slane %v971, 4
  %v973 = vmax.f32 %v971, %v972
  %v974 = vrot.slane %v973, 2
  %v975 = vmax.f32 %v973, %v974
  %v976 = vrot.slane %v975, 1
  %v977 = vmax.f32 %v975, %v976
  %v978 = vsel %vm599, %v498, -inf
  %v979 = vrot.slane %v978, 4
  %v980 = vmax.f32 %v978, %v979
  %v981 = vrot.slane %v980, 2
  %v982 = vmax.f32 %v980, %v981
  %v983 = vrot.slane %v982, 1
  %v984 = vmax.f32 %v982, %v983
  %v985 = vsel %vm599, %v500, -inf
  %v986 = vrot.slane %v985, 4
  %v987 = vmax.f32 %v985, %v986
  %v988 = vrot.slane %v987, 2
  %v989 = vmax.f32 %v987, %v988
  %v990 = vrot.slane %v989, 1
  %v991 = vmax.f32 %v989, %v990
  %v992 = vsel %vm599, %v508, -inf
  %v993 = vrot.slane %v992, 4
  %v994 = vmax.f32 %v992, %v993
  %v995 = vrot.slane %v994, 2
  %v996 = vmax.f32 %v994, %v995
  %v997 = vrot.slane %v996, 1
  %v998 = vmax.f32 %v996, %v997
  %v999 = vsel %vm599, %v516, -inf
  %v1000 = vrot.slane %v999, 4
  %v1001 = vmax.f32 %v999, %v1000
  %v1002 = vrot.slane %v1001, 2
  %v1003 = vmax.f32 %v1001, %v1002
  %v1004 = vrot.slane %v1003, 1
  %v1005 = vmax.f32 %v1003, %v1004
  %v1006 = vsel %vm599, %v515, -inf
  %v1007 = vrot.slane %v1006, 4
  %v1008 = vmax.f32 %v1006, %v1007
  %v1009 = vrot.slane %v1008, 2
  %v1010 = vmax.f32 %v1008, %v1009
  %v1011 = vrot.slane %v1010, 1
  %v1012 = vmax.f32 %v1010, %v1011
  %v1013 = vsel %vm599, %v517, -inf
  %v1014 = vrot.slane %v1013, 4
  %v1015 = vmax.f32 %v1013, %v1014
  %v1016 = vrot.slane %v1015, 2
  %v1017 = vmax.f32 %v1015, %v1016
  %v1018 = vrot.slane %v1017, 1
  %v1019 = vmax.f32 %v1017, %v1018
  %v1020 = vsel %vm599, %v525, -inf
  %v1021 = vrot.slane %v1020, 4
  %v1022 = vmax.f32 %v1020, %v1021
  %v1023 = vrot.slane %v1022, 2
  %v1024 = vmax.f32 %v1022, %v1023
  %v1025 = vrot.slane %v1024, 1
  %v1026 = vmax.f32 %v1024, %v1025
  %v1027 = vsel %vm599, %v533, -inf
  %v1028 = vrot.slane %v1027, 4
  %v1029 = vmax.f32 %v1027, %v1028
  %v1030 = vrot.slane %v1029, 2
  %v1031 = vmax.f32 %v1029, %v1030
  %v1032 = vrot.slane %v1031, 1
  %v1033 = vmax.f32 %v1031, %v1032
  %v1034 = vsel %vm599, %v532, -inf
  %v1035 = vrot.slane %v1034, 4
  %v1036 = vmax.f32 %v1034, %v1035
  %v1037 = vrot.slane %v1036, 2
  %v1038 = vmax.f32 %v1036, %v1037
  %v1039 = vrot.slane %v1038, 1
  %v1040 = vmax.f32 %v1038, %v1039
  %v1041 = vsel %vm599, %v534, -inf
  %v1042 = vrot.slane %v1041, 4
  %v1043 = vmax.f32 %v1041, %v1042
  %v1044 = vrot.slane %v1043, 2
  %v1045 = vmax.f32 %v1043, %v1044
  %v1046 = vrot.slane %v1045, 1
  %v1047 = vmax.f32 %v1045, %v1046
  %v1048 = vpack.c.bf16 %v606, %v606
  %v1049 = vpack.c.bf16 %v613, %v613
  %v1050 = vpack.c.bf16 %v620, %v620
  %v1051 = vpack.c.bf16 %v627, %v627
  %v1052 = vpack.c.bf16 %v634, %v634
  %v1053 = vpack.c.bf16 %v641, %v641
  %v1054 = vpack.c.bf16 %v648, %v648
  %v1055 = vpack.c.bf16 %v655, %v655
  %v1056 = vpack.c.bf16 %v662, %v662
  %v1057 = vpack.c.bf16 %v669, %v669
  %v1058 = vpack.c.bf16 %v676, %v676
  %v1059 = vpack.c.bf16 %v683, %v683
  %v1060 = vpack.c.bf16 %v690, %v690
  %v1061 = vpack.c.bf16 %v697, %v697
  %v1062 = vpack.c.bf16 %v704, %v704
  %v1063 = vpack.c.bf16 %v711, %v711
  %v1064 = vpack.c.bf16 %v718, %v718
  %v1065 = vpack.c.bf16 %v725, %v725
  %v1066 = vpack.c.bf16 %v732, %v732
  %v1067 = vpack.c.bf16 %v739, %v739
  %v1068 = vpack.c.bf16 %v746, %v746
  %v1069 = vpack.c.bf16 %v753, %v753
  %v1070 = vpack.c.bf16 %v760, %v760
  %v1071 = vpack.c.bf16 %v767, %v767
  %v1072 = vpack.c.bf16 %v774, %v774
  %v1073 = vpack.c.bf16 %v781, %v781
  %v1074 = vpack.c.bf16 %v788, %v788
  %v1075 = vpack.c.bf16 %v795, %v795
  %v1076 = vpack.c.bf16 %v802, %v802
  %v1077 = vpack.c.bf16 %v809, %v809
  %v1078 = vpack.c.bf16 %v816, %v816
  %v1079 = vpack.c.bf16 %v823, %v823
  %v1080 = vpack.c.bf16 %v830, %v830
  %v1081 = vpack.c.bf16 %v837, %v837
  %v1082 = vpack.c.bf16 %v844, %v844
  %v1083 = vpack.c.bf16 %v851, %v851
  %v1084 = vpack.c.bf16 %v858, %v858
  %v1085 = vpack.c.bf16 %v865, %v865
  %v1086 = vpack.c.bf16 %v872, %v872
  %v1087 = vpack.c.bf16 %v879, %v879
  %v1088 = vpack.c.bf16 %v886, %v886
  %v1089 = vpack.c.bf16 %v893, %v893
  %v1090 = vpack.c.bf16 %v900, %v900
  %v1091 = vpack.c.bf16 %v907, %v907
  %v1092 = vpack.c.bf16 %v914, %v914
  %v1093 = vpack.c.bf16 %v921, %v921
  %v1094 = vpack.c.bf16 %v928, %v928
  %v1095 = vpack.c.bf16 %v935, %v935
  %v1096 = vpack.c.bf16 %v942, %v942
  %v1097 = vpack.c.bf16 %v949, %v949
  %v1098 = vpack.c.bf16 %v956, %v956
  %v1099 = vpack.c.bf16 %v963, %v963
  %v1100 = vpack.c.bf16 %v970, %v970
  %v1101 = vpack.c.bf16 %v977, %v977
  %v1102 = vpack.c.bf16 %v984, %v984
  %v1103 = vpack.c.bf16 %v991, %v991
  %v1104 = vpack.c.bf16 %v998, %v998
  %v1105 = vpack.c.bf16 %v1005, %v1005
  %v1106 = vpack.c.bf16 %v1012, %v1012
  %v1107 = vpack.c.bf16 %v1019, %v1019
  %v1108 = vpack.c.bf16 %v1026, %v1026
  %v1109 = vpack.c.bf16 %v1033, %v1033
  %v1110 = vpack.c.bf16 %v1040, %v1040
  %v1111 = vpack.c.bf16 %v1047, %v1047
  %v1175 = vunpack.c.l.b16 %v1048
  %v1176 = vunpack.c.l.b16 %v1049
  %v1177 = vunpack.c.l.b16 %v1050
  %v1178 = vunpack.c.l.b16 %v1051
  %v1179 = vunpack.c.l.b16 %v1052
  %v1180 = vunpack.c.l.b16 %v1053
  %v1181 = vunpack.c.l.b16 %v1054
  %v1182 = vunpack.c.l.b16 %v1055
  %v1183 = vunpack.c.l.b16 %v1056
  %v1184 = vunpack.c.l.b16 %v1057
  %v1185 = vunpack.c.l.b16 %v1058
  %v1186 = vunpack.c.l.b16 %v1059
  %v1187 = vunpack.c.l.b16 %v1060
  %v1188 = vunpack.c.l.b16 %v1061
  %v1189 = vunpack.c.l.b16 %v1062
  %v1190 = vunpack.c.l.b16 %v1063
  %v1191 = vunpack.c.l.b16 %v1064
  %v1192 = vunpack.c.l.b16 %v1065
  %v1193 = vunpack.c.l.b16 %v1066
  %v1194 = vunpack.c.l.b16 %v1067
  %v1195 = vunpack.c.l.b16 %v1068
  %v1196 = vunpack.c.l.b16 %v1069
  %v1197 = vunpack.c.l.b16 %v1070
  %v1198 = vunpack.c.l.b16 %v1071
  %v1199 = vunpack.c.l.b16 %v1072
  %v1200 = vunpack.c.l.b16 %v1073
  %v1201 = vunpack.c.l.b16 %v1074
  %v1202 = vunpack.c.l.b16 %v1075
  %v1203 = vunpack.c.l.b16 %v1076
  %v1204 = vunpack.c.l.b16 %v1077
  %v1205 = vunpack.c.l.b16 %v1078
  %v1206 = vunpack.c.l.b16 %v1079
  %v1207 = vunpack.c.l.b16 %v1080
  %v1208 = vunpack.c.l.b16 %v1081
  %v1209 = vunpack.c.l.b16 %v1082
  %v1210 = vunpack.c.l.b16 %v1083
  %v1211 = vunpack.c.l.b16 %v1084
  %v1212 = vunpack.c.l.b16 %v1085
  %v1213 = vunpack.c.l.b16 %v1086
  %v1214 = vunpack.c.l.b16 %v1087
  %v1215 = vunpack.c.l.b16 %v1088
  %v1216 = vunpack.c.l.b16 %v1089
  %v1217 = vunpack.c.l.b16 %v1090
  %v1218 = vunpack.c.l.b16 %v1091
  %v1219 = vunpack.c.l.b16 %v1092
  %v1220 = vunpack.c.l.b16 %v1093
  %v1221 = vunpack.c.l.b16 %v1094
  %v1222 = vunpack.c.l.b16 %v1095
  %v1223 = vunpack.c.l.b16 %v1096
  %v1224 = vunpack.c.l.b16 %v1097
  %v1225 = vunpack.c.l.b16 %v1098
  %v1226 = vunpack.c.l.b16 %v1099
  %v1227 = vunpack.c.l.b16 %v1100
  %v1228 = vunpack.c.l.b16 %v1101
  %v1229 = vunpack.c.l.b16 %v1102
  %v1230 = vunpack.c.l.b16 %v1103
  %v1231 = vunpack.c.l.b16 %v1104
  %v1232 = vunpack.c.l.b16 %v1105
  %v1233 = vunpack.c.l.b16 %v1106
  %v1234 = vunpack.c.l.b16 %v1107
  %v1235 = vunpack.c.l.b16 %v1108
  %v1236 = vunpack.c.l.b16 %v1109
  %v1237 = vunpack.c.l.b16 %v1110
  %vm1238 = vcmask 1042434
  %v1239 = vsel %vm1238, %v1176, %v1175
  %vm1240 = vcmask 1043459
  %v1241 = vsel %vm1240, %v1177, %v1239
  %vm1242 = vcmask 1044484
  %v1243 = vsel %vm1242, %v1178, %v1241
  %vm1244 = vcmask 1045509
  %v1245 = vsel %vm1244, %v1179, %v1243
  %vm1246 = vcmask 1046534
  %v1247 = vsel %vm1246, %v1180, %v1245
  %vm1248 = vcmask 1047559
  %v1249 = vsel %vm1248, %v1181, %v1247
  %vm1250 = vcmask 1041409
  %v1251 = vsel %vm1250, %v1183, %v1182
  %v1252 = vsel %vm1238, %v1184, %v1251
  %v1253 = vsel %vm1240, %v1185, %v1252
  %v1254 = vsel %vm1242, %v1186, %v1253
  %v1255 = vsel %vm1244, %v1187, %v1254
  %v1256 = vsel %vm1246, %v1188, %v1255
  %v1257 = vsel %vm1248, %v1189, %v1256
  %v1258 = vsel %vm1250, %v1191, %v1190
  %v1259 = vsel %vm1238, %v1192, %v1258
  %v1260 = vsel %vm1240, %v1193, %v1259
  %v1261 = vsel %vm1242, %v1194, %v1260
  %v1262 = vsel %vm1244, %v1195, %v1261
  %v1263 = vsel %vm1246, %v1196, %v1262
  %v1264 = vsel %vm1248, %v1197, %v1263
  %v1265 = vsel %vm1250, %v1199, %v1198
  %v1266 = vsel %vm1238, %v1200, %v1265
  %v1267 = vsel %vm1240, %v1201, %v1266
  %v1268 = vsel %vm1242, %v1202, %v1267
  %v1269 = vsel %vm1244, %v1203, %v1268
  %v1270 = vsel %vm1246, %v1204, %v1269
  %v1271 = vsel %vm1248, %v1205, %v1270
  %v1272 = vsel %vm1250, %v1207, %v1206
  %v1273 = vsel %vm1238, %v1208, %v1272
  %v1274 = vsel %vm1240, %v1209, %v1273
  %v1275 = vsel %vm1242, %v1210, %v1274
  %v1276 = vsel %vm1244, %v1211, %v1275
  %v1277 = vsel %vm1246, %v1212, %v1276
  %v1278 = vsel %vm1248, %v1213, %v1277
  %v1279 = vsel %vm1250, %v1215, %v1214
  %v1280 = vsel %vm1238, %v1216, %v1279
  %v1281 = vsel %vm1240, %v1217, %v1280
  %v1282 = vsel %vm1242, %v1218, %v1281
  %v1283 = vsel %vm1244, %v1219, %v1282
  %v1284 = vsel %vm1246, %v1220, %v1283
  %v1285 = vsel %vm1248, %v1221, %v1284
  %v1286 = vsel %vm1250, %v1223, %v1222
  %v1287 = vsel %vm1238, %v1224, %v1286
  %v1288 = vsel %vm1240, %v1225, %v1287
  %v1289 = vsel %vm1242, %v1226, %v1288
  %v1290 = vsel %vm1244, %v1227, %v1289
  %v1291 = vsel %vm1246, %v1228, %v1290
  %v1292 = vsel %vm1248, %v1229, %v1291
  %v1293 = vsel %vm1250, %v1231, %v1230
  %v1294 = vsel %vm1238, %v1232, %v1293
  %v1295 = vsel %vm1240, %v1233, %v1294
  %v1296 = vsel %vm1242, %v1234, %v1295
  %v1297 = vsel %vm1244, %v1235, %v1296
  %v1298 = vsel %vm1246, %v1236, %v1297
  %v1299 = vsel %vm1248, %v1237, %v1298
  %v1300 = vpack.c.b16 %v1257, %v1249
  %v1301 = vpack.c.b16 %v1271, %v1264
  %v1302 = vpack.c.b16 %v1285, %v1278
  %v1303 = vpack.c.b16 %v1299, %v1292
  %vm1308 = vcmask 1040384
  %vm1309 = vsmask.f32 256
  %vm1310 = vmand %vm1308, %vm1309
  %v1311 = vsel %vm1310, 0, %v1300
  %v1313 = vunpack.c.l.b16 %v1111
  %v1314 = vsel %vm1250, %v1177, %v1176
  %v1315 = vsel %vm1238, %v1178, %v1314
  %v1316 = vsel %vm1240, %v1179, %v1315
  %v1317 = vsel %vm1242, %v1180, %v1316
  %v1318 = vsel %vm1244, %v1181, %v1317
  %v1319 = vsel %vm1246, %v1182, %v1318
  %v1320 = vsel %vm1248, %v1183, %v1319
  %v1321 = vsel %vm1250, %v1185, %v1184
  %v1322 = vsel %vm1238, %v1186, %v1321
  %v1323 = vsel %vm1240, %v1187, %v1322
  %v1324 = vsel %vm1242, %v1188, %v1323
  %v1325 = vsel %vm1244, %v1189, %v1324
  %v1326 = vsel %vm1246, %v1190, %v1325
  %v1327 = vsel %vm1248, %v1191, %v1326
  %v1328 = vsel %vm1250, %v1193, %v1192
  %v1329 = vsel %vm1238, %v1194, %v1328
  %v1330 = vsel %vm1240, %v1195, %v1329
  %v1331 = vsel %vm1242, %v1196, %v1330
  %v1332 = vsel %vm1244, %v1197, %v1331
  %v1333 = vsel %vm1246, %v1198, %v1332
  %v1334 = vsel %vm1248, %v1199, %v1333
  %v1335 = vsel %vm1250, %v1201, %v1200
  %v1336 = vsel %vm1238, %v1202, %v1335
  %v1337 = vsel %vm1240, %v1203, %v1336
  %v1338 = vsel %vm1242, %v1204, %v1337
  %v1339 = vsel %vm1244, %v1205, %v1338
  %v1340 = vsel %vm1246, %v1206, %v1339
  %v1341 = vsel %vm1248, %v1207, %v1340
  %v1342 = vsel %vm1250, %v1209, %v1208
  %v1343 = vsel %vm1238, %v1210, %v1342
  %v1344 = vsel %vm1240, %v1211, %v1343
  %v1345 = vsel %vm1242, %v1212, %v1344
  %v1346 = vsel %vm1244, %v1213, %v1345
  %v1347 = vsel %vm1246, %v1214, %v1346
  %v1348 = vsel %vm1248, %v1215, %v1347
  %v1349 = vsel %vm1250, %v1217, %v1216
  %v1350 = vsel %vm1238, %v1218, %v1349
  %v1351 = vsel %vm1240, %v1219, %v1350
  %v1352 = vsel %vm1242, %v1220, %v1351
  %v1353 = vsel %vm1244, %v1221, %v1352
  %v1354 = vsel %vm1246, %v1222, %v1353
  %v1355 = vsel %vm1248, %v1223, %v1354
  %v1356 = vsel %vm1250, %v1225, %v1224
  %v1357 = vsel %vm1238, %v1226, %v1356
  %v1358 = vsel %vm1240, %v1227, %v1357
  %v1359 = vsel %vm1242, %v1228, %v1358
  %v1360 = vsel %vm1244, %v1229, %v1359
  %v1361 = vsel %vm1246, %v1230, %v1360
  %v1362 = vsel %vm1248, %v1231, %v1361
  %v1363 = vsel %vm1250, %v1233, %v1232
  %v1364 = vsel %vm1238, %v1234, %v1363
  %v1365 = vsel %vm1240, %v1235, %v1364
  %v1366 = vsel %vm1242, %v1236, %v1365
  %v1367 = vsel %vm1244, %v1237, %v1366
  %v1368 = vsel %vm1246, %v1313, %v1367
  %v1369 = vpack.c.b16 %v1327, %v1320
  %v1370 = vpack.c.b16 %v1341, %v1334
  %v1371 = vpack.c.b16 %v1355, %v1348
  %v1372 = vpack.c.b16 %v1368, %v1362
  %vm1377 = vcmask 1047552
  %vm1378 = vsmask.f32 7424
  %vm1379 = vmand %vm1377, %vm1378
  %v1380 = vsel %vm1379, %v1372, 0
  %v1381 = vlaneseq
  %v1382 = vshrl.u32 %v1381, 7
  %v1383 = vadd.s32 %v1382, 8
  %v1384 = vadd.s32 %v1382, 16
  %v1385 = vadd.s32 %v1382, 24
  %v1386 = vadd.s32 %v1382, 32
  %v1387 = vadd.s32 %v1382, 40
  %v1388 = vadd.s32 %v1382, 48
  %v1389 = vadd.s32 %v1382, 56
  %vm1390 = vcmp.lt.s32.totalorder %v1382, 0
  %v1391 = vsub.s32 0, %v1382
  %v1392 = vsel %vm1390, %v1391, %v1382
  %v1393 = vshrl.u32 %v1392, 3
  %v1394 = vand.u32 %v1392, 7
  %v1395 = vsub.s32 0, %v1394
  %v1396 = vsel %vm1390, %v1395, %v1394
  %vm1397 = vcmp.lt.s32.totalorder %v1383, 0
  %v1398 = vsub.s32 0, %v1383
  %v1399 = vsel %vm1397, %v1398, %v1383
  %v1400 = vshrl.u32 %v1399, 3
  %v1401 = vand.u32 %v1399, 7
  %v1402 = vsub.s32 0, %v1401
  %v1403 = vsel %vm1397, %v1402, %v1401
  %vm1404 = vcmp.lt.s32.totalorder %v1384, 0
  %v1405 = vsub.s32 0, %v1384
  %v1406 = vsel %vm1404, %v1405, %v1384
  %v1407 = vshrl.u32 %v1406, 3
  %v1408 = vand.u32 %v1406, 7
  %v1409 = vsub.s32 0, %v1408
  %v1410 = vsel %vm1404, %v1409, %v1408
  %vm1411 = vcmp.lt.s32.totalorder %v1385, 0
  %v1412 = vsub.s32 0, %v1385
  %v1413 = vsel %vm1411, %v1412, %v1385
  %v1414 = vshrl.u32 %v1413, 3
  %v1415 = vand.u32 %v1413, 7
  %v1416 = vsub.s32 0, %v1415
  %v1417 = vsel %vm1411, %v1416, %v1415
  %vm1418 = vcmp.lt.s32.totalorder %v1386, 0
  %v1419 = vsub.s32 0, %v1386
  %v1420 = vsel %vm1418, %v1419, %v1386
  %v1421 = vshrl.u32 %v1420, 3
  %v1422 = vand.u32 %v1420, 7
  %v1423 = vsub.s32 0, %v1422
  %v1424 = vsel %vm1418, %v1423, %v1422
  %vm1425 = vcmp.lt.s32.totalorder %v1387, 0
  %v1426 = vsub.s32 0, %v1387
  %v1427 = vsel %vm1425, %v1426, %v1387
  %v1428 = vshrl.u32 %v1427, 3
  %v1429 = vand.u32 %v1427, 7
  %v1430 = vsub.s32 0, %v1429
  %v1431 = vsel %vm1425, %v1430, %v1429
  %vm1432 = vcmp.lt.s32.totalorder %v1388, 0
  %v1433 = vsub.s32 0, %v1388
  %v1434 = vsel %vm1432, %v1433, %v1388
  %v1435 = vshrl.u32 %v1434, 3
  %v1436 = vand.u32 %v1434, 7
  %v1437 = vsub.s32 0, %v1436
  %v1438 = vsel %vm1432, %v1437, %v1436
  %vm1439 = vcmp.lt.s32.totalorder %v1389, 0
  %v1440 = vsub.s32 0, %v1389
  %v1441 = vsel %vm1439, %v1440, %v1389
  %v1442 = vshrl.u32 %v1441, 3
  %v1443 = vand.u32 %v1441, 7
  %v1444 = vsub.s32 0, %v1443
  %v1445 = vsel %vm1439, %v1444, %v1443
  %vm1446 = vcmp.ne.s32.totalorder %v1396, 0
  %vm1447 = vcmp.ne.s32.totalorder %v1403, 0
  %vm1448 = vcmp.ne.s32.totalorder %v1410, 0
  %vm1449 = vcmp.ne.s32.totalorder %v1417, 0
  %vm1450 = vcmp.ne.s32.totalorder %v1424, 0
  %vm1451 = vcmp.ne.s32.totalorder %v1431, 0
  %vm1452 = vcmp.ne.s32.totalorder %v1438, 0
  %vm1453 = vcmp.ne.s32.totalorder %v1445, 0
  %vm1454 = vcmp.lt.s32.totalorder %v1396, 0
  %vm1455 = vcmp.lt.s32.totalorder %v1403, 0
  %vm1456 = vcmp.lt.s32.totalorder %v1410, 0
  %vm1457 = vcmp.lt.s32.totalorder %v1417, 0
  %vm1458 = vcmp.lt.s32.totalorder %v1424, 0
  %vm1459 = vcmp.lt.s32.totalorder %v1431, 0
  %vm1460 = vcmp.lt.s32.totalorder %v1438, 0
  %vm1461 = vcmp.lt.s32.totalorder %v1445, 0
  %vm1462 = vmand %vm1454, %vm1446
  %vm1463 = vmand %vm1455, %vm1447
  %vm1464 = vmand %vm1456, %vm1448
  %vm1465 = vmand %vm1457, %vm1449
  %vm1466 = vmand %vm1458, %vm1450
  %vm1467 = vmand %vm1459, %vm1451
  %vm1468 = vmand %vm1460, %vm1452
  %vm1469 = vmand %vm1461, %vm1453
  %v1470 = vadd.s32 %v1396, 8
  %v1471 = vadd.s32 %v1403, 8
  %v1472 = vadd.s32 %v1410, 8
  %v1473 = vadd.s32 %v1417, 8
  %v1474 = vadd.s32 %v1424, 8
  %v1475 = vadd.s32 %v1431, 8
  %v1476 = vadd.s32 %v1438, 8
  %v1477 = vadd.s32 %v1445, 8
  %v1478 = vsel %vm1462, %v1470, %v1396
  %v1479 = vsel %vm1463, %v1471, %v1403
  %v1480 = vsel %vm1464, %v1472, %v1410
  %v1481 = vsel %vm1465, %v1473, %v1417
  %v1482 = vsel %vm1466, %v1474, %v1424
  %v1483 = vsel %vm1467, %v1475, %v1431
  %v1484 = vsel %vm1468, %v1476, %v1438
  %v1485 = vsel %vm1469, %v1477, %v1445
  %vm1486 = vcmp.eq.s32.totalorder %v1478, 0
  %vm1487 = vcmp.eq.s32.totalorder %v1479, 0
  %vm1488 = vcmp.eq.s32.totalorder %v1480, 0
  %vm1489 = vcmp.eq.s32.totalorder %v1481, 0
  %vm1490 = vcmp.eq.s32.totalorder %v1482, 0
  %vm1491 = vcmp.eq.s32.totalorder %v1483, 0
  %vm1492 = vcmp.eq.s32.totalorder %v1484, 0
  %vm1493 = vcmp.eq.s32.totalorder %v1485, 0
  %v1494 = vsel %vm1486, 1, 0
  %v1495 = vsel %vm1487, 1, 0
  %v1496 = vsel %vm1488, 1, 0
  %v1497 = vsel %vm1489, 1, 0
  %v1498 = vsel %vm1490, 1, 0
  %v1499 = vsel %vm1491, 1, 0
  %v1500 = vsel %vm1492, 1, 0
  %v1501 = vsel %vm1493, 1, 0
  %vm1502 = vcmp.eq.s32.totalorder %v1494, 1
  %vm1503 = vcmp.eq.s32.totalorder %v1495, 1
  %vm1504 = vcmp.eq.s32.totalorder %v1496, 1
  %vm1505 = vcmp.eq.s32.totalorder %v1497, 1
  %vm1506 = vcmp.eq.s32.totalorder %v1498, 1
  %vm1507 = vcmp.eq.s32.totalorder %v1499, 1
  %vm1508 = vcmp.eq.s32.totalorder %v1500, 1
  %vm1509 = vcmp.eq.s32.totalorder %v1501, 1
  %vm1510 = vmpackc.low %vm1502, %vm1502
  %vm1511 = vmpackc.low %vm1503, %vm1503
  %vm1512 = vmpackc.low %vm1504, %vm1504
  %vm1513 = vmpackc.low %vm1505, %vm1505
  %vm1514 = vmpackc.low %vm1506, %vm1506
  %vm1515 = vmpackc.low %vm1507, %vm1507
  %vm1516 = vmpackc.low %vm1508, %vm1508
  %vm1517 = vmpackc.low %vm1509, %vm1509
  %v1518 = vsel %vm1510, 65537, 0
  %v1519 = vsel %vm1511, 65537, 0
  %v1520 = vsel %vm1512, 65537, 0
  %v1521 = vsel %vm1513, 65537, 0
  %v1522 = vsel %vm1514, 65537, 0
  %v1523 = vsel %vm1515, 65537, 0
  %v1524 = vsel %vm1516, 65537, 0
  %v1525 = vsel %vm1517, 65537, 0
  %v1526 = vunpack.c.l.b16 %v1518
  %v1527 = vunpack.c.l.b16 %v1519
  %v1528 = vunpack.c.l.b16 %v1520
  %v1529 = vunpack.c.l.b16 %v1521
  %v1530 = vunpack.c.l.b16 %v1522
  %v1531 = vunpack.c.l.b16 %v1523
  %v1532 = vunpack.c.l.b16 %v1524
  %v1533 = vunpack.c.l.b16 %v1525
  %v1534 = vpack.c.b16 %v1527, %v1526
  %v1535 = vpack.c.b16 %v1529, %v1528
  %v1536 = vpack.c.b16 %v1531, %v1530
  %v1537 = vpack.c.b16 %v1533, %v1532
  %vm1538 = vcmp.ne.s16.totalorder %v1534, 0
  %vm1539 = vcmp.ne.s16.totalorder %v1535, 0
  %vm1540 = vcmp.ne.s16.totalorder %v1536, 0
  %vm1541 = vcmp.ne.s16.totalorder %v1537, 0
  %v1542 = vsel %vm1538, 0, %v1311
  %v1543 = vsel %vm1539, 0, %v1301
  %v1544 = vsel %vm1540, 0, %v1302
  %v1545 = vsel %vm1541, 0, %v1303
  %vm1546 = vcmp.eq.s32.totalorder %v1478, 7
  %vm1547 = vcmp.eq.s32.totalorder %v1479, 7
  %vm1548 = vcmp.eq.s32.totalorder %v1480, 7
  %vm1549 = vcmp.eq.s32.totalorder %v1481, 7
  %vm1550 = vcmp.eq.s32.totalorder %v1482, 7
  %vm1551 = vcmp.eq.s32.totalorder %v1483, 7
  %vm1552 = vcmp.eq.s32.totalorder %v1484, 7
  %vm1553 = vcmp.eq.s32.totalorder %v1485, 7
  %v1554 = vsel %vm1546, 1, 0
  %v1555 = vsel %vm1547, 1, 0
  %v1556 = vsel %vm1548, 1, 0
  %v1557 = vsel %vm1549, 1, 0
  %v1558 = vsel %vm1550, 1, 0
  %v1559 = vsel %vm1551, 1, 0
  %v1560 = vsel %vm1552, 1, 0
  %v1561 = vsel %vm1553, 1, 0
  %vm1562 = vcmp.eq.s32.totalorder %v1554, 1
  %vm1563 = vcmp.eq.s32.totalorder %v1555, 1
  %vm1564 = vcmp.eq.s32.totalorder %v1556, 1
  %vm1565 = vcmp.eq.s32.totalorder %v1557, 1
  %vm1566 = vcmp.eq.s32.totalorder %v1558, 1
  %vm1567 = vcmp.eq.s32.totalorder %v1559, 1
  %vm1568 = vcmp.eq.s32.totalorder %v1560, 1
  %vm1569 = vcmp.eq.s32.totalorder %v1561, 1
  %vm1570 = vmpackc.low %vm1562, %vm1562
  %vm1571 = vmpackc.low %vm1563, %vm1563
  %vm1572 = vmpackc.low %vm1564, %vm1564
  %vm1573 = vmpackc.low %vm1565, %vm1565
  %vm1574 = vmpackc.low %vm1566, %vm1566
  %vm1575 = vmpackc.low %vm1567, %vm1567
  %vm1576 = vmpackc.low %vm1568, %vm1568
  %vm1577 = vmpackc.low %vm1569, %vm1569
  %v1578 = vsel %vm1570, 65537, 0
  %v1579 = vsel %vm1571, 65537, 0
  %v1580 = vsel %vm1572, 65537, 0
  %v1581 = vsel %vm1573, 65537, 0
  %v1582 = vsel %vm1574, 65537, 0
  %v1583 = vsel %vm1575, 65537, 0
  %v1584 = vsel %vm1576, 65537, 0
  %v1585 = vsel %vm1577, 65537, 0
  %v1586 = vunpack.c.l.b16 %v1578
  %v1587 = vunpack.c.l.b16 %v1579
  %v1588 = vunpack.c.l.b16 %v1580
  %v1589 = vunpack.c.l.b16 %v1581
  %v1590 = vunpack.c.l.b16 %v1582
  %v1591 = vunpack.c.l.b16 %v1583
  %v1592 = vunpack.c.l.b16 %v1584
  %v1593 = vunpack.c.l.b16 %v1585
  %v1594 = vpack.c.b16 %v1587, %v1586
  %v1595 = vpack.c.b16 %v1589, %v1588
  %v1596 = vpack.c.b16 %v1591, %v1590
  %v1597 = vpack.c.b16 %v1593, %v1592
  %vm1598 = vcmp.ne.s16.totalorder %v1594, 0
  %vm1599 = vcmp.ne.s16.totalorder %v1595, 0
  %vm1600 = vcmp.ne.s16.totalorder %v1596, 0
  %vm1601 = vcmp.ne.s16.totalorder %v1597, 0
  %v1602 = vsel %vm1598, 0, %v1369
  %v1603 = vsel %vm1599, 0, %v1370
  %v1604 = vsel %vm1600, 0, %v1371
  %v1605 = vsel %vm1601, 0, %v1380
  %v1606 = vld [vmem:[%s3] sm:$0xf]
  %v1607 = vld [vmem:[%s3 + $0x4] sm:$0xf]
  %v1608 = vld [vmem:[%s3 + $0x8] sm:$0xf]
  %v1609 = vld [vmem:[%s3 + $0xc] sm:$0xf]
  %v1610 = vld [vmem:[%s3 + $0x10] sm:$0xf]
  %v1611 = vld [vmem:[%s3 + $0x14] sm:$0xf]
  %v1612 = vld [vmem:[%s3 + $0x18] sm:$0xf]
  %v1613 = vld [vmem:[%s3 + $0x1c] sm:$0xf]
  %s1614 = scalar_lea.vmem %s3, 32
  %v1615 = vld [vmem:[%s1614] sm:$0xf]
  %v1616 = vld [vmem:[%s1614 + $0x4] sm:$0xf]
  %v1617 = vld [vmem:[%s1614 + $0x8] sm:$0xf]
  %v1618 = vld [vmem:[%s1614 + $0xc] sm:$0xf]
  %v1619 = vld [vmem:[%s1614 + $0x10] sm:$0xf]
  %v1620 = vld [vmem:[%s1614 + $0x14] sm:$0xf]
  %v1621 = vld [vmem:[%s1614 + $0x18] sm:$0xf]
  %v1622 = vld [vmem:[%s1614 + $0x1c] sm:$0xf]
  %v1623 = vsel %vm1250, %v1176, %v1175
  %v1624 = vsel %vm1238, %v1177, %v1623
  %v1625 = vsel %vm1240, %v1178, %v1624
  %v1626 = vsel %vm1242, %v1179, %v1625
  %v1627 = vsel %vm1244, %v1180, %v1626
  %v1628 = vsel %vm1246, %v1181, %v1627
  %v1629 = vsel %vm1248, %v1182, %v1628
  %v1630 = vsel %vm1250, %v1184, %v1183
  %v1631 = vsel %vm1238, %v1185, %v1630
  %v1632 = vsel %vm1240, %v1186, %v1631
  %v1633 = vsel %vm1242, %v1187, %v1632
  %v1634 = vsel %vm1244, %v1188, %v1633
  %v1635 = vsel %vm1246, %v1189, %v1634
  %v1636 = vsel %vm1248, %v1190, %v1635
  %v1637 = vsel %vm1250, %v1192, %v1191
  %v1638 = vsel %vm1238, %v1193, %v1637
  %v1639 = vsel %vm1240, %v1194, %v1638
  %v1640 = vsel %vm1242, %v1195, %v1639
  %v1641 = vsel %vm1244, %v1196, %v1640
  %v1642 = vsel %vm1246, %v1197, %v1641
  %v1643 = vsel %vm1248, %v1198, %v1642
  %v1644 = vsel %vm1250, %v1200, %v1199
  %v1645 = vsel %vm1238, %v1201, %v1644
  %v1646 = vsel %vm1240, %v1202, %v1645
  %v1647 = vsel %vm1242, %v1203, %v1646
  %v1648 = vsel %vm1244, %v1204, %v1647
  %v1649 = vsel %vm1246, %v1205, %v1648
  %v1650 = vsel %vm1248, %v1206, %v1649
  %v1651 = vsel %vm1250, %v1208, %v1207
  %v1652 = vsel %vm1238, %v1209, %v1651
  %v1653 = vsel %vm1240, %v1210, %v1652
  %v1654 = vsel %vm1242, %v1211, %v1653
  %v1655 = vsel %vm1244, %v1212, %v1654
  %v1656 = vsel %vm1246, %v1213, %v1655
  %v1657 = vsel %vm1248, %v1214, %v1656
  %v1658 = vsel %vm1250, %v1216, %v1215
  %v1659 = vsel %vm1238, %v1217, %v1658
  %v1660 = vsel %vm1240, %v1218, %v1659
  %v1661 = vsel %vm1242, %v1219, %v1660
  %v1662 = vsel %vm1244, %v1220, %v1661
  %v1663 = vsel %vm1246, %v1221, %v1662
  %v1664 = vsel %vm1248, %v1222, %v1663
  %v1665 = vsel %vm1250, %v1224, %v1223
  %v1666 = vsel %vm1238, %v1225, %v1665
  %v1667 = vsel %vm1240, %v1226, %v1666
  %v1668 = vsel %vm1242, %v1227, %v1667
  %v1669 = vsel %vm1244, %v1228, %v1668
  %v1670 = vsel %vm1246, %v1229, %v1669
  %v1671 = vsel %vm1248, %v1230, %v1670
  %v1672 = vsel %vm1250, %v1232, %v1231
  %v1673 = vsel %vm1238, %v1233, %v1672
  %v1674 = vsel %vm1240, %v1234, %v1673
  %v1675 = vsel %vm1242, %v1235, %v1674
  %v1676 = vsel %vm1244, %v1236, %v1675
  %v1677 = vsel %vm1246, %v1237, %v1676
  %v1678 = vsel %vm1248, %v1313, %v1677
  %v1679 = vpack.c.b16 %v1636, %v1629
  %v1680 = vpack.c.b16 %v1650, %v1643
  %v1681 = vpack.c.b16 %v1664, %v1657
  %v1682 = vpack.c.b16 %v1678, %v1671
  %v1691 = vunpack.c.l.b16 %v1615
  %v1692 = vunpack.c.l.b16 %v1616
  %v1693 = vunpack.c.l.b16 %v1617
  %v1694 = vunpack.c.l.b16 %v1618
  %v1695 = vunpack.c.l.b16 %v1619
  %v1696 = vunpack.c.l.b16 %v1620
  %v1697 = vunpack.c.l.b16 %v1621
  %v1698 = vunpack.c.l.b16 %v1622
  %v1699 = vpack.c.b16 %v1692, %v1691
  %v1700 = vpack.c.b16 %v1694, %v1693
  %v1701 = vpack.c.b16 %v1696, %v1695
  %v1702 = vpack.c.b16 %v1698, %v1697
  %vm1707 = vcmask 523264
  %v1709 = vsel %vm1707, %v1679, 0
  %v1712 = vsel %vm1707, %v1680, 0
  %v1715 = vsel %vm1707, %v1681, 0
  %v1718 = vsel %vm1707, %v1682, 0
  %1720 = vmatprep.subr.bf16.mxu0 0
  %1721 = vmatpush1.bf16.msra.mxu0 0
  %1722 = vmatprep.subr.bf16.mxu0 0
  %1723 = vmatpush1.bf16.msra.mxu0 0
  %1724 = vmatprep.subr.bf16.mxu0 0
  %1725 = vmatpush1.bf16.msra.mxu0 0
  %1726 = vmatprep.subr.bf16.mxu0 0
  %1727 = vmatpush1.bf16.msra.mxu0 0
  %1728 = vmatprep.subr.bf16.mxu0 0
  %1729 = vmatpush1.bf16.msra.mxu0 %v1702
  %1730 = vmatprep.subr.bf16.mxu0 0
  %1731 = vmatpush1.bf16.msra.mxu0 %v1701
  %1732 = vmatprep.subr.bf16.mxu0 0
  %1733 = vmatpush1.bf16.msra.mxu0 %v1700
  %1734 = vmatprep.subr.bf16.mxu0 0
  %1735 = vmatpush1.bf16.msra.mxu0 %v1699
  %1736 = vmatprep.subr.bf16.mxu0 0
  %1737 = vmatpush2.bf16.msra.mxu0 0
  %1738 = vmatprep.subr.bf16.mxu0 0
  %1739 = vmatpush2.bf16.msra.mxu0 0
  %1740 = vmatprep.subr.bf16.mxu0 0
  %1741 = vmatpush2.bf16.msra.mxu0 0
  %1742 = vmatprep.subr.bf16.mxu0 0
  %1743 = vmatpush2.bf16.msra.mxu0 0
  %1744 = vmatprep.subr.bf16.mxu0 0
  %1745 = vmatpush2.bf16.msra.mxu0 0
  %1746 = vmatprep.subr.bf16.mxu0 0
  %1747 = vmatpush2.bf16.msra.mxu0 0
  %1748 = vmatprep.subr.bf16.mxu0 0
  %1749 = vmatpush2.bf16.msra.mxu0 0
  %1750 = vmatprep.subr.bf16.mxu0 0
  %1751 = vmatpush2.bf16.msra.mxu0 0
  %1752 = vmatprep.mubr.bf16.mxu0 0
  %1753 = vmatmul.mubr.bf16.gmra.mxu0 %v1709
  %v1754 = vpop.f32.mrf.mxu0
  %v1755 = vadd.f32 0.0, %v1754
  %v1756 = vpop.f32.mrf.mxu0
  %v1757 = vpop.f32.mrf.mxu0
  %v1758 = vadd.f32 0.0, %v1757
  %v1759 = vpop.f32.mrf.mxu0
  %1760 = vmatprep.mubr.bf16.mxu0 0
  %1761 = vmatmul.mubr.bf16.gmra.mxu0 %v1712
  %v1762 = vpop.f32.mrf.mxu0
  %v1763 = vadd.f32 0.0, %v1762
  %v1764 = vpop.f32.mrf.mxu0
  %v1765 = vpop.f32.mrf.mxu0
  %v1766 = vadd.f32 0.0, %v1765
  %v1767 = vpop.f32.mrf.mxu0
  %1768 = vmatprep.mubr.bf16.mxu0 0
  %1769 = vmatmul.mubr.bf16.gmra.mxu0 %v1715
  %v1770 = vpop.f32.mrf.mxu0
  %v1771 = vadd.f32 0.0, %v1770
  %v1772 = vpop.f32.mrf.mxu0
  %v1773 = vpop.f32.mrf.mxu0
  %v1774 = vadd.f32 0.0, %v1773
  %v1775 = vpop.f32.mrf.mxu0
  %1776 = vmatprep.mubr.bf16.mxu0 0
  %1777 = vmatmul.mubr.bf16.gmra.mxu0 %v1718
  %v1778 = vpop.f32.mrf.mxu0
  %v1779 = vadd.f32 0.0, %v1778
  %v1780 = vpop.f32.mrf.mxu0
  %v1781 = vpop.f32.mrf.mxu0
  %v1782 = vadd.f32 0.0, %v1781
  %v1783 = vpop.f32.mrf.mxu0
  %1784 = vdwg.mxu0
  %v1793 = vunpack.c.l.b16 %v1606
  %v1794 = vunpack.c.l.b16 %v1607
  %v1795 = vunpack.c.l.b16 %v1608
  %v1796 = vunpack.c.l.b16 %v1609
  %v1797 = vunpack.c.l.b16 %v1610
  %v1798 = vunpack.c.l.b16 %v1611
  %v1799 = vunpack.c.l.b16 %v1612
  %v1800 = vunpack.c.l.b16 %v1613
  %v1801 = vpack.c.b16 %v1794, %v1793
  %v1802 = vpack.c.b16 %v1796, %v1795
  %v1803 = vpack.c.b16 %v1798, %v1797
  %v1804 = vpack.c.b16 %v1800, %v1799
  %v1810 = vsel %vm1707, %v1542, 0
  %v1813 = vsel %vm1707, %v1543, 0
  %v1816 = vsel %vm1707, %v1544, 0
  %v1819 = vsel %vm1707, %v1545, 0
  %1821 = vmatprep.subr.bf16.mxu0 0
  %1822 = vmatpush1.bf16.msra.mxu0 0
  %1823 = vmatprep.subr.bf16.mxu0 0
  %1824 = vmatpush1.bf16.msra.mxu0 0
  %1825 = vmatprep.subr.bf16.mxu0 0
  %1826 = vmatpush1.bf16.msra.mxu0 0
  %1827 = vmatprep.subr.bf16.mxu0 0
  %1828 = vmatpush1.bf16.msra.mxu0 0
  %1829 = vmatprep.subr.bf16.mxu0 0
  %1830 = vmatpush1.bf16.msra.mxu0 %v1804
  %1831 = vmatprep.subr.bf16.mxu0 0
  %1832 = vmatpush1.bf16.msra.mxu0 %v1803
  %1833 = vmatprep.subr.bf16.mxu0 0
  %1834 = vmatpush1.bf16.msra.mxu0 %v1802
  %1835 = vmatprep.subr.bf16.mxu0 0
  %1836 = vmatpush1.bf16.msra.mxu0 %v1801
  %1837 = vmatprep.subr.bf16.mxu0 0
  %1838 = vmatpush2.bf16.msra.mxu0 0
  %1839 = vmatprep.subr.bf16.mxu0 0
  %1840 = vmatpush2.bf16.msra.mxu0 0
  %1841 = vmatprep.subr.bf16.mxu0 0
  %1842 = vmatpush2.bf16.msra.mxu0 0
  %1843 = vmatprep.subr.bf16.mxu0 0
  %1844 = vmatpush2.bf16.msra.mxu0 0
  %1845 = vmatprep.subr.bf16.mxu0 0
  %1846 = vmatpush2.bf16.msra.mxu0 0
  %1847 = vmatprep.subr.bf16.mxu0 0
  %1848 = vmatpush2.bf16.msra.mxu0 0
  %1849 = vmatprep.subr.bf16.mxu0 0
  %1850 = vmatpush2.bf16.msra.mxu0 0
  %1851 = vmatprep.subr.bf16.mxu0 0
  %1852 = vmatpush2.bf16.msra.mxu0 0
  %1853 = vmatprep.mubr.bf16.mxu0 0
  %1854 = vmatmul.mubr.bf16.gmra.mxu0 %v1810
  %v1855 = vpop.f32.mrf.mxu0
  %v1856 = vadd.f32 %v1755, %v1855
  %v1857 = vpop.f32.mrf.mxu0
  %v1858 = vpop.f32.mrf.mxu0
  %v1859 = vadd.f32 %v1758, %v1858
  %v1860 = vpop.f32.mrf.mxu0
  %1861 = vmatprep.mubr.bf16.mxu0 0
  %1862 = vmatmul.mubr.bf16.gmra.mxu0 %v1813
  %v1863 = vpop.f32.mrf.mxu0
  %v1864 = vadd.f32 %v1763, %v1863
  %v1865 = vpop.f32.mrf.mxu0
  %v1866 = vpop.f32.mrf.mxu0
  %v1867 = vadd.f32 %v1766, %v1866
  %v1868 = vpop.f32.mrf.mxu0
  %1869 = vmatprep.mubr.bf16.mxu0 0
  %1870 = vmatmul.mubr.bf16.gmra.mxu0 %v1816
  %v1871 = vpop.f32.mrf.mxu0
  %v1872 = vadd.f32 %v1771, %v1871
  %v1873 = vpop.f32.mrf.mxu0
  %v1874 = vpop.f32.mrf.mxu0
  %v1875 = vadd.f32 %v1774, %v1874
  %v1876 = vpop.f32.mrf.mxu0
  %1877 = vmatprep.mubr.bf16.mxu0 0
  %1878 = vmatmul.mubr.bf16.gmra.mxu0 %v1819
  %v1879 = vpop.f32.mrf.mxu0
  %v1880 = vadd.f32 %v1779, %v1879
  %v1881 = vpop.f32.mrf.mxu0
  %v1882 = vpop.f32.mrf.mxu0
  %v1883 = vadd.f32 %v1782, %v1882
  %v1884 = vpop.f32.mrf.mxu0
  %1885 = vdwg.mxu0
  %s1886 = scalar_lea.vmem %s3, 64
  %v1887 = vld [vmem:[%s1886] sm:$0xf]
  %v1888 = vld [vmem:[%s1886 + $0x4] sm:$0xf]
  %v1889 = vld [vmem:[%s1886 + $0x8] sm:$0xf]
  %v1890 = vld [vmem:[%s1886 + $0xc] sm:$0xf]
  %v1891 = vld [vmem:[%s1886 + $0x10] sm:$0xf]
  %v1892 = vld [vmem:[%s1886 + $0x14] sm:$0xf]
  %v1893 = vld [vmem:[%s1886 + $0x18] sm:$0xf]
  %v1894 = vld [vmem:[%s1886 + $0x1c] sm:$0xf]
  %v1903 = vunpack.c.l.b16 %v1887
  %v1904 = vunpack.c.l.b16 %v1888
  %v1905 = vunpack.c.l.b16 %v1889
  %v1906 = vunpack.c.l.b16 %v1890
  %v1907 = vunpack.c.l.b16 %v1891
  %v1908 = vunpack.c.l.b16 %v1892
  %v1909 = vunpack.c.l.b16 %v1893
  %v1910 = vunpack.c.l.b16 %v1894
  %v1911 = vpack.c.b16 %v1904, %v1903
  %v1912 = vpack.c.b16 %v1906, %v1905
  %v1913 = vpack.c.b16 %v1908, %v1907
  %v1914 = vpack.c.b16 %v1910, %v1909
  %v1920 = vsel %vm1707, %v1602, 0
  %v1923 = vsel %vm1707, %v1603, 0
  %v1926 = vsel %vm1707, %v1604, 0
  %v1929 = vsel %vm1707, %v1605, 0
  %1931 = vmatprep.subr.bf16.mxu0 0
  %1932 = vmatpush1.bf16.msra.mxu0 0
  %1933 = vmatprep.subr.bf16.mxu0 0
  %1934 = vmatpush1.bf16.msra.mxu0 0
  %1935 = vmatprep.subr.bf16.mxu0 0
  %1936 = vmatpush1.bf16.msra.mxu0 0
  %1937 = vmatprep.subr.bf16.mxu0 0
  %1938 = vmatpush1.bf16.msra.mxu0 0
  %1939 = vmatprep.subr.bf16.mxu0 0
  %1940 = vmatpush1.bf16.msra.mxu0 %v1914
  %1941 = vmatprep.subr.bf16.mxu0 0
  %1942 = vmatpush1.bf16.msra.mxu0 %v1913
  %1943 = vmatprep.subr.bf16.mxu0 0
  %1944 = vmatpush1.bf16.msra.mxu0 %v1912
  %1945 = vmatprep.subr.bf16.mxu0 0
  %1946 = vmatpush1.bf16.msra.mxu0 %v1911
  %1947 = vmatprep.subr.bf16.mxu0 0
  %1948 = vmatpush2.bf16.msra.mxu0 0
  %1949 = vmatprep.subr.bf16.mxu0 0
  %1950 = vmatpush2.bf16.msra.mxu0 0
  %1951 = vmatprep.subr.bf16.mxu0 0
  %1952 = vmatpush2.bf16.msra.mxu0 0
  %1953 = vmatprep.subr.bf16.mxu0 0
  %1954 = vmatpush2.bf16.msra.mxu0 0
  %1955 = vmatprep.subr.bf16.mxu0 0
  %1956 = vmatpush2.bf16.msra.mxu0 0
  %1957 = vmatprep.subr.bf16.mxu0 0
  %1958 = vmatpush2.bf16.msra.mxu0 0
  %1959 = vmatprep.subr.bf16.mxu0 0
  %1960 = vmatpush2.bf16.msra.mxu0 0
  %1961 = vmatprep.subr.bf16.mxu0 0
  %1962 = vmatpush2.bf16.msra.mxu0 0
  %1963 = vmatprep.mubr.bf16.mxu0 0
  %1964 = vmatmul.mubr.bf16.gmra.mxu0 %v1920
  %v1965 = vpop.f32.mrf.mxu0
  %v1966 = vadd.f32 0.0, %v1965
  %v1967 = vpop.f32.mrf.mxu0
  %v1968 = vpop.f32.mrf.mxu0
  %v1969 = vadd.f32 0.0, %v1968
  %v1970 = vpop.f32.mrf.mxu0
  %1971 = vmatprep.mubr.bf16.mxu0 0
  %1972 = vmatmul.mubr.bf16.gmra.mxu0 %v1923
  %v1973 = vpop.f32.mrf.mxu0
  %v1974 = vadd.f32 0.0, %v1973
  %v1975 = vpop.f32.mrf.mxu0
  %v1976 = vpop.f32.mrf.mxu0
  %v1977 = vadd.f32 0.0, %v1976
  %v1978 = vpop.f32.mrf.mxu0
  %1979 = vmatprep.mubr.bf16.mxu0 0
  %1980 = vmatmul.mubr.bf16.gmra.mxu0 %v1926
  %v1981 = vpop.f32.mrf.mxu0
  %v1982 = vadd.f32 0.0, %v1981
  %v1983 = vpop.f32.mrf.mxu0
  %v1984 = vpop.f32.mrf.mxu0
  %v1985 = vadd.f32 0.0, %v1984
  %v1986 = vpop.f32.mrf.mxu0
  %1987 = vmatprep.mubr.bf16.mxu0 0
  %1988 = vmatmul.mubr.bf16.gmra.mxu0 %v1929
  %v1989 = vpop.f32.mrf.mxu0
  %v1990 = vadd.f32 0.0, %v1989
  %v1991 = vpop.f32.mrf.mxu0
  %v1992 = vpop.f32.mrf.mxu0
  %v1993 = vadd.f32 0.0, %v1992
  %v1994 = vpop.f32.mrf.mxu0
  %1995 = vdwg.mxu0
  %v1996 = vadd.f32 %v1856, %v1966
  %v1997 = vadd.f32 %v1859, %v1969
  %v1998 = vadd.f32 %v1864, %v1974
  %v1999 = vadd.f32 %v1867, %v1977
  %v2000 = vadd.f32 %v1872, %v1982
  %v2001 = vadd.f32 %v1875, %v1985
  %v2002 = vadd.f32 %v1880, %v1990
  %v2003 = vadd.f32 %v1883, %v1993
  %v2004 = vld [vmem:[%s4] sm:$0x1]
  %v2006 = vlaneseq
  %v2007 = vshrl.u32 %v2006, 7
  %v2008 = vsub.s32 0, %v2007
  %v2009 = vrot.slane %v2004, %v2008
  %v2011 = vadd.f32 %v1996, %v2009
  %v2012 = vadd.f32 %v1997, %v2009
  %v2013 = vadd.f32 %v1998, %v2009
  %v2014 = vadd.f32 %v1999, %v2009
  %v2015 = vadd.f32 %v2000, %v2009
  %v2016 = vadd.f32 %v2001, %v2009
  %v2017 = vadd.f32 %v2002, %v2009
  %v2018 = vadd.f32 %v2003, %v2009
  %v2019 = vmax.f32 %v2011, 0.0
  %v2020 = vmax.f32 %v2012, 0.0
  %v2021 = vmax.f32 %v2013, 0.0
  %v2022 = vmax.f32 %v2014, 0.0
  %v2023 = vmax.f32 %v2015, 0.0
  %v2024 = vmax.f32 %v2016, 0.0
  %v2025 = vmax.f32 %v2017, 0.0
  %v2026 = vmax.f32 %v2018, 0.0
  %v2035 = vcombine.high %v2019, %v2019
  %v2037 = vunpack.c.l.s4 1983009808
  %v2038 = vunpack.c.0.s8 %v2037
  %v2039 = vlaneseq
  %v2040 = vshrl.u32 %v2039, 7
  %v2041 = vsub.s32 %v2038, %v2040
  %v2042 = vrot.slane %v2019, %v2041
  %v2044 = vunpack.c.l.s4 1983009808
  %v2045 = vunpack.c.0.s8 %v2044
  %v2046 = vlaneseq
  %v2047 = vshrl.u32 %v2046, 7
  %v2048 = vsub.s32 %v2045, %v2047
  %v2049 = vrot.slane %v2035, %v2048
  %v2050 = vcombine.high %v2042, %v2042
  %v2051 = vcombine.high %v2049, %v2049
  %v2052 = vcombine.high %v2020, %v2020
  %v2054 = vunpack.c.l.s4 1983009808
  %v2055 = vunpack.c.0.s8 %v2054
  %v2056 = vlaneseq
  %v2057 = vshrl.u32 %v2056, 7
  %v2058 = vsub.s32 %v2055, %v2057
  %v2059 = vrot.slane %v2020, %v2058
  %v2061 = vunpack.c.l.s4 1983009808
  %v2062 = vunpack.c.0.s8 %v2061
  %v2063 = vlaneseq
  %v2064 = vshrl.u32 %v2063, 7
  %v2065 = vsub.s32 %v2062, %v2064
  %v2066 = vrot.slane %v2052, %v2065
  %v2067 = vcombine.high %v2059, %v2059
  %v2068 = vcombine.high %v2066, %v2066
  %v2069 = vcombine.high %v2021, %v2021
  %v2071 = vunpack.c.l.s4 1983009808
  %v2072 = vunpack.c.0.s8 %v2071
  %v2073 = vlaneseq
  %v2074 = vshrl.u32 %v2073, 7
  %v2075 = vsub.s32 %v2072, %v2074
  %v2076 = vrot.slane %v2021, %v2075
  %v2078 = vunpack.c.l.s4 1983009808
  %v2079 = vunpack.c.0.s8 %v2078
  %v2080 = vlaneseq
  %v2081 = vshrl.u32 %v2080, 7
  %v2082 = vsub.s32 %v2079, %v2081
  %v2083 = vrot.slane %v2069, %v2082
  %v2084 = vcombine.high %v2076, %v2076
  %v2085 = vcombine.high %v2083, %v2083
  %v2086 = vcombine.high %v2022, %v2022
  %v2088 = vunpack.c.l.s4 1983009808
  %v2089 = vunpack.c.0.s8 %v2088
  %v2090 = vlaneseq
  %v2091 = vshrl.u32 %v2090, 7
  %v2092 = vsub.s32 %v2089, %v2091
  %v2093 = vrot.slane %v2022, %v2092
  %v2095 = vunpack.c.l.s4 1983009808
  %v2096 = vunpack.c.0.s8 %v2095
  %v2097 = vlaneseq
  %v2098 = vshrl.u32 %v2097, 7
  %v2099 = vsub.s32 %v2096, %v2098
  %v2100 = vrot.slane %v2086, %v2099
  %v2101 = vcombine.high %v2093, %v2093
  %v2102 = vcombine.high %v2100, %v2100
  %v2103 = vcombine.high %v2023, %v2023
  %v2105 = vunpack.c.l.s4 1983009808
  %v2106 = vunpack.c.0.s8 %v2105
  %v2107 = vlaneseq
  %v2108 = vshrl.u32 %v2107, 7
  %v2109 = vsub.s32 %v2106, %v2108
  %v2110 = vrot.slane %v2023, %v2109
  %v2112 = vunpack.c.l.s4 1983009808
  %v2113 = vunpack.c.0.s8 %v2112
  %v2114 = vlaneseq
  %v2115 = vshrl.u32 %v2114, 7
  %v2116 = vsub.s32 %v2113, %v2115
  %v2117 = vrot.slane %v2103, %v2116
  %v2118 = vcombine.high %v2110, %v2110
  %v2119 = vcombine.high %v2117, %v2117
  %v2120 = vcombine.high %v2024, %v2024
  %v2122 = vunpack.c.l.s4 1983009808
  %v2123 = vunpack.c.0.s8 %v2122
  %v2124 = vlaneseq
  %v2125 = vshrl.u32 %v2124, 7
  %v2126 = vsub.s32 %v2123, %v2125
  %v2127 = vrot.slane %v2024, %v2126
  %v2129 = vunpack.c.l.s4 1983009808
  %v2130 = vunpack.c.0.s8 %v2129
  %v2131 = vlaneseq
  %v2132 = vshrl.u32 %v2131, 7
  %v2133 = vsub.s32 %v2130, %v2132
  %v2134 = vrot.slane %v2120, %v2133
  %v2135 = vcombine.high %v2127, %v2127
  %v2136 = vcombine.high %v2134, %v2134
  %v2137 = vcombine.high %v2025, %v2025
  %v2139 = vunpack.c.l.s4 1983009808
  %v2140 = vunpack.c.0.s8 %v2139
  %v2141 = vlaneseq
  %v2142 = vshrl.u32 %v2141, 7
  %v2143 = vsub.s32 %v2140, %v2142
  %v2144 = vrot.slane %v2025, %v2143
  %v2146 = vunpack.c.l.s4 1983009808
  %v2147 = vunpack.c.0.s8 %v2146
  %v2148 = vlaneseq
  %v2149 = vshrl.u32 %v2148, 7
  %v2150 = vsub.s32 %v2147, %v2149
  %v2151 = vrot.slane %v2137, %v2150
  %v2152 = vcombine.high %v2144, %v2144
  %v2153 = vcombine.high %v2151, %v2151
  %v2154 = vcombine.high %v2026, %v2026
  %v2156 = vunpack.c.l.s4 1983009808
  %v2157 = vunpack.c.0.s8 %v2156
  %v2158 = vlaneseq
  %v2159 = vshrl.u32 %v2158, 7
  %v2160 = vsub.s32 %v2157, %v2159
  %v2161 = vrot.slane %v2026, %v2160
  %v2163 = vunpack.c.l.s4 1983009808
  %v2164 = vunpack.c.0.s8 %v2163
  %v2165 = vlaneseq
  %v2166 = vshrl.u32 %v2165, 7
  %v2167 = vsub.s32 %v2164, %v2166
  %v2168 = vrot.slane %v2154, %v2167
  %v2169 = vcombine.high %v2161, %v2161
  %v2170 = vcombine.high %v2168, %v2168
  %vm2203 = vcmask 1041408
  %v2204 = vsel %vm2203, %v2042, -inf
  %v2205 = vrot.slane %v2204, 4
  %v2206 = vmax.f32 %v2204, %v2205
  %v2207 = vrot.slane %v2206, 2
  %v2208 = vmax.f32 %v2206, %v2207
  %v2209 = vrot.slane %v2208, 1
  %v2210 = vmax.f32 %v2208, %v2209
  %v2211 = vsel %vm2203, %v2050, -inf
  %v2212 = vrot.slane %v2211, 4
  %v2213 = vmax.f32 %v2211, %v2212
  %v2214 = vrot.slane %v2213, 2
  %v2215 = vmax.f32 %v2213, %v2214
  %v2216 = vrot.slane %v2215, 1
  %v2217 = vmax.f32 %v2215, %v2216
  %v2218 = vsel %vm2203, %v2049, -inf
  %v2219 = vrot.slane %v2218, 4
  %v2220 = vmax.f32 %v2218, %v2219
  %v2221 = vrot.slane %v2220, 2
  %v2222 = vmax.f32 %v2220, %v2221
  %v2223 = vrot.slane %v2222, 1
  %v2224 = vmax.f32 %v2222, %v2223
  %v2225 = vsel %vm2203, %v2051, -inf
  %v2226 = vrot.slane %v2225, 4
  %v2227 = vmax.f32 %v2225, %v2226
  %v2228 = vrot.slane %v2227, 2
  %v2229 = vmax.f32 %v2227, %v2228
  %v2230 = vrot.slane %v2229, 1
  %v2231 = vmax.f32 %v2229, %v2230
  %v2232 = vsel %vm2203, %v2059, -inf
  %v2233 = vrot.slane %v2232, 4
  %v2234 = vmax.f32 %v2232, %v2233
  %v2235 = vrot.slane %v2234, 2
  %v2236 = vmax.f32 %v2234, %v2235
  %v2237 = vrot.slane %v2236, 1
  %v2238 = vmax.f32 %v2236, %v2237
  %v2239 = vsel %vm2203, %v2067, -inf
  %v2240 = vrot.slane %v2239, 4
  %v2241 = vmax.f32 %v2239, %v2240
  %v2242 = vrot.slane %v2241, 2
  %v2243 = vmax.f32 %v2241, %v2242
  %v2244 = vrot.slane %v2243, 1
  %v2245 = vmax.f32 %v2243, %v2244
  %v2246 = vsel %vm2203, %v2066, -inf
  %v2247 = vrot.slane %v2246, 4
  %v2248 = vmax.f32 %v2246, %v2247
  %v2249 = vrot.slane %v2248, 2
  %v2250 = vmax.f32 %v2248, %v2249
  %v2251 = vrot.slane %v2250, 1
  %v2252 = vmax.f32 %v2250, %v2251
  %v2253 = vsel %vm2203, %v2068, -inf
  %v2254 = vrot.slane %v2253, 4
  %v2255 = vmax.f32 %v2253, %v2254
  %v2256 = vrot.slane %v2255, 2
  %v2257 = vmax.f32 %v2255, %v2256
  %v2258 = vrot.slane %v2257, 1
  %v2259 = vmax.f32 %v2257, %v2258
  %v2260 = vsel %vm2203, %v2076, -inf
  %v2261 = vrot.slane %v2260, 4
  %v2262 = vmax.f32 %v2260, %v2261
  %v2263 = vrot.slane %v2262, 2
  %v2264 = vmax.f32 %v2262, %v2263
  %v2265 = vrot.slane %v2264, 1
  %v2266 = vmax.f32 %v2264, %v2265
  %v2267 = vsel %vm2203, %v2084, -inf
  %v2268 = vrot.slane %v2267, 4
  %v2269 = vmax.f32 %v2267, %v2268
  %v2270 = vrot.slane %v2269, 2
  %v2271 = vmax.f32 %v2269, %v2270
  %v2272 = vrot.slane %v2271, 1
  %v2273 = vmax.f32 %v2271, %v2272
  %v2274 = vsel %vm2203, %v2083, -inf
  %v2275 = vrot.slane %v2274, 4
  %v2276 = vmax.f32 %v2274, %v2275
  %v2277 = vrot.slane %v2276, 2
  %v2278 = vmax.f32 %v2276, %v2277
  %v2279 = vrot.slane %v2278, 1
  %v2280 = vmax.f32 %v2278, %v2279
  %v2281 = vsel %vm2203, %v2085, -inf
  %v2282 = vrot.slane %v2281, 4
  %v2283 = vmax.f32 %v2281, %v2282
  %v2284 = vrot.slane %v2283, 2
  %v2285 = vmax.f32 %v2283, %v2284
  %v2286 = vrot.slane %v2285, 1
  %v2287 = vmax.f32 %v2285, %v2286
  %v2288 = vsel %vm2203, %v2093, -inf
  %v2289 = vrot.slane %v2288, 4
  %v2290 = vmax.f32 %v2288, %v2289
  %v2291 = vrot.slane %v2290, 2
  %v2292 = vmax.f32 %v2290, %v2291
  %v2293 = vrot.slane %v2292, 1
  %v2294 = vmax.f32 %v2292, %v2293
  %v2295 = vsel %vm2203, %v2101, -inf
  %v2296 = vrot.slane %v2295, 4
  %v2297 = vmax.f32 %v2295, %v2296
  %v2298 = vrot.slane %v2297, 2
  %v2299 = vmax.f32 %v2297, %v2298
  %v2300 = vrot.slane %v2299, 1
  %v2301 = vmax.f32 %v2299, %v2300
  %v2302 = vsel %vm2203, %v2100, -inf
  %v2303 = vrot.slane %v2302, 4
  %v2304 = vmax.f32 %v2302, %v2303
  %v2305 = vrot.slane %v2304, 2
  %v2306 = vmax.f32 %v2304, %v2305
  %v2307 = vrot.slane %v2306, 1
  %v2308 = vmax.f32 %v2306, %v2307
  %v2309 = vsel %vm2203, %v2102, -inf
  %v2310 = vrot.slane %v2309, 4
  %v2311 = vmax.f32 %v2309, %v2310
  %v2312 = vrot.slane %v2311, 2
  %v2313 = vmax.f32 %v2311, %v2312
  %v2314 = vrot.slane %v2313, 1
  %v2315 = vmax.f32 %v2313, %v2314
  %v2316 = vsel %vm2203, %v2110, -inf
  %v2317 = vrot.slane %v2316, 4
  %v2318 = vmax.f32 %v2316, %v2317
  %v2319 = vrot.slane %v2318, 2
  %v2320 = vmax.f32 %v2318, %v2319
  %v2321 = vrot.slane %v2320, 1
  %v2322 = vmax.f32 %v2320, %v2321
  %v2323 = vsel %vm2203, %v2118, -inf
  %v2324 = vrot.slane %v2323, 4
  %v2325 = vmax.f32 %v2323, %v2324
  %v2326 = vrot.slane %v2325, 2
  %v2327 = vmax.f32 %v2325, %v2326
  %v2328 = vrot.slane %v2327, 1
  %v2329 = vmax.f32 %v2327, %v2328
  %v2330 = vsel %vm2203, %v2117, -inf
  %v2331 = vrot.slane %v2330, 4
  %v2332 = vmax.f32 %v2330, %v2331
  %v2333 = vrot.slane %v2332, 2
  %v2334 = vmax.f32 %v2332, %v2333
  %v2335 = vrot.slane %v2334, 1
  %v2336 = vmax.f32 %v2334, %v2335
  %v2337 = vsel %vm2203, %v2119, -inf
  %v2338 = vrot.slane %v2337, 4
  %v2339 = vmax.f32 %v2337, %v2338
  %v2340 = vrot.slane %v2339, 2
  %v2341 = vmax.f32 %v2339, %v2340
  %v2342 = vrot.slane %v2341, 1
  %v2343 = vmax.f32 %v2341, %v2342
  %v2344 = vsel %vm2203, %v2127, -inf
  %v2345 = vrot.slane %v2344, 4
  %v2346 = vmax.f32 %v2344, %v2345
  %v2347 = vrot.slane %v2346, 2
  %v2348 = vmax.f32 %v2346, %v2347
  %v2349 = vrot.slane %v2348, 1
  %v2350 = vmax.f32 %v2348, %v2349
  %v2351 = vsel %vm2203, %v2135, -inf
  %v2352 = vrot.slane %v2351, 4
  %v2353 = vmax.f32 %v2351, %v2352
  %v2354 = vrot.slane %v2353, 2
  %v2355 = vmax.f32 %v2353, %v2354
  %v2356 = vrot.slane %v2355, 1
  %v2357 = vmax.f32 %v2355, %v2356
  %v2358 = vsel %vm2203, %v2134, -inf
  %v2359 = vrot.slane %v2358, 4
  %v2360 = vmax.f32 %v2358, %v2359
  %v2361 = vrot.slane %v2360, 2
  %v2362 = vmax.f32 %v2360, %v2361
  %v2363 = vrot.slane %v2362, 1
  %v2364 = vmax.f32 %v2362, %v2363
  %v2365 = vsel %vm2203, %v2136, -inf
  %v2366 = vrot.slane %v2365, 4
  %v2367 = vmax.f32 %v2365, %v2366
  %v2368 = vrot.slane %v2367, 2
  %v2369 = vmax.f32 %v2367, %v2368
  %v2370 = vrot.slane %v2369, 1
  %v2371 = vmax.f32 %v2369, %v2370
  %v2372 = vsel %vm2203, %v2144, -inf
  %v2373 = vrot.slane %v2372, 4
  %v2374 = vmax.f32 %v2372, %v2373
  %v2375 = vrot.slane %v2374, 2
  %v2376 = vmax.f32 %v2374, %v2375
  %v2377 = vrot.slane %v2376, 1
  %v2378 = vmax.f32 %v2376, %v2377
  %v2379 = vsel %vm2203, %v2152, -inf
  %v2380 = vrot.slane %v2379, 4
  %v2381 = vmax.f32 %v2379, %v2380
  %v2382 = vrot.slane %v2381, 2
  %v2383 = vmax.f32 %v2381, %v2382
  %v2384 = vrot.slane %v2383, 1
  %v2385 = vmax.f32 %v2383, %v2384
  %v2386 = vsel %vm2203, %v2151, -inf
  %v2387 = vrot.slane %v2386, 4
  %v2388 = vmax.f32 %v2386, %v2387
  %v2389 = vrot.slane %v2388, 2
  %v2390 = vmax.f32 %v2388, %v2389
  %v2391 = vrot.slane %v2390, 1
  %v2392 = vmax.f32 %v2390, %v2391
  %v2393 = vsel %vm2203, %v2153, -inf
  %v2394 = vrot.slane %v2393, 4
  %v2395 = vmax.f32 %v2393, %v2394
  %v2396 = vrot.slane %v2395, 2
  %v2397 = vmax.f32 %v2395, %v2396
  %v2398 = vrot.slane %v2397, 1
  %v2399 = vmax.f32 %v2397, %v2398
  %v2400 = vsel %vm2203, %v2161, -inf
  %v2401 = vrot.slane %v2400, 4
  %v2402 = vmax.f32 %v2400, %v2401
  %v2403 = vrot.slane %v2402, 2
  %v2404 = vmax.f32 %v2402, %v2403
  %v2405 = vrot.slane %v2404, 1
  %v2406 = vmax.f32 %v2404, %v2405
  %v2407 = vsel %vm2203, %v2169, -inf
  %v2408 = vrot.slane %v2407, 4
  %v2409 = vmax.f32 %v2407, %v2408
  %v2410 = vrot.slane %v2409, 2
  %v2411 = vmax.f32 %v2409, %v2410
  %v2412 = vrot.slane %v2411, 1
  %v2413 = vmax.f32 %v2411, %v2412
  %v2414 = vsel %vm2203, %v2168, -inf
  %v2415 = vrot.slane %v2414, 4
  %v2416 = vmax.f32 %v2414, %v2415
  %v2417 = vrot.slane %v2416, 2
  %v2418 = vmax.f32 %v2416, %v2417
  %v2419 = vrot.slane %v2418, 1
  %v2420 = vmax.f32 %v2418, %v2419
  %v2421 = vsel %vm2203, %v2170, -inf
  %v2422 = vrot.slane %v2421, 4
  %v2423 = vmax.f32 %v2421, %v2422
  %v2424 = vrot.slane %v2423, 2
  %v2425 = vmax.f32 %v2423, %v2424
  %v2426 = vrot.slane %v2425, 1
  %v2427 = vmax.f32 %v2425, %v2426
  %v2460 = vsel %vm1250, %v2217, %v2210
  %v2461 = vsel %vm1238, %v2224, %v2460
  %v2462 = vsel %vm1240, %v2231, %v2461
  %v2463 = vsel %vm1242, %v2238, %v2462
  %v2464 = vsel %vm1244, %v2245, %v2463
  %v2465 = vsel %vm1246, %v2252, %v2464
  %v2466 = vsel %vm1248, %v2259, %v2465
  %v2467 = vsel %vm1250, %v2273, %v2266
  %v2468 = vsel %vm1238, %v2280, %v2467
  %v2469 = vsel %vm1240, %v2287, %v2468
  %v2470 = vsel %vm1242, %v2294, %v2469
  %v2471 = vsel %vm1244, %v2301, %v2470
  %v2472 = vsel %vm1246, %v2308, %v2471
  %v2473 = vsel %vm1248, %v2315, %v2472
  %v2474 = vsel %vm1250, %v2329, %v2322
  %v2475 = vsel %vm1238, %v2336, %v2474
  %v2476 = vsel %vm1240, %v2343, %v2475
  %v2477 = vsel %vm1242, %v2350, %v2476
  %v2478 = vsel %vm1244, %v2357, %v2477
  %v2479 = vsel %vm1246, %v2364, %v2478
  %v2480 = vsel %vm1248, %v2371, %v2479
  %v2481 = vsel %vm1250, %v2385, %v2378
  %v2482 = vsel %vm1238, %v2392, %v2481
  %v2483 = vsel %vm1240, %v2399, %v2482
  %v2484 = vsel %vm1242, %v2406, %v2483
  %v2485 = vsel %vm1244, %v2413, %v2484
  %v2486 = vsel %vm1246, %v2420, %v2485
  %v2487 = vsel %vm1248, %v2427, %v2486
  %v2493 = vunpack.c.l.s4 1935823168
  %v2494 = vunpack.c.0.s8 %v2493
  %v2495 = vlaneseq
  %v2496 = vshrl.u32 %v2495, 7
  %v2497 = vsub.s32 %v2494, %v2496
  %v2498 = vrot.slane %v2466, %v2497
  %v2500 = vunpack.c.l.s4 1935823168
  %v2501 = vunpack.c.0.s8 %v2500
  %v2502 = vlaneseq
  %v2503 = vshrl.u32 %v2502, 7
  %v2504 = vsub.s32 %v2501, %v2503
  %v2505 = vrot.slane %v2473, %v2504
  %v2507 = vunpack.c.l.s4 1935823168
  %v2508 = vunpack.c.0.s8 %v2507
  %v2509 = vlaneseq
  %v2510 = vshrl.u32 %v2509, 7
  %v2511 = vsub.s32 %v2508, %v2510
  %v2512 = vrot.slane %v2480, %v2511
  %v2514 = vunpack.c.l.s4 1935823168
  %v2515 = vunpack.c.0.s8 %v2514
  %v2516 = vlaneseq
  %v2517 = vshrl.u32 %v2516, 7
  %v2518 = vsub.s32 %v2515, %v2517
  %v2519 = vrot.slane %v2487, %v2518
  %v2524 = vcombine.low %v2498, %v2505
  %v2525 = vcombine.high %v2498, %v2505
  %v2526 = vcombine.low %v2512, %v2519
  %v2527 = vcombine.high %v2512, %v2519
  %v2529 = vunpack.c.l.s4 1983009808
  %v2530 = vunpack.c.0.s8 %v2529
  %v2531 = vlaneseq
  %v2532 = vshrl.u32 %v2531, 7
  %v2533 = vsub.s32 %v2530, %v2532
  %v2534 = vrot.slane %v2524, %v2533
  %v2536 = vunpack.c.l.s4 1983009808
  %v2537 = vunpack.c.0.s8 %v2536
  %v2538 = vlaneseq
  %v2539 = vshrl.u32 %v2538, 7
  %v2540 = vsub.s32 %v2537, %v2539
  %v2541 = vrot.slane %v2525, %v2540
  %v2543 = vunpack.c.l.s4 1983009808
  %v2544 = vunpack.c.0.s8 %v2543
  %v2545 = vlaneseq
  %v2546 = vshrl.u32 %v2545, 7
  %v2547 = vsub.s32 %v2544, %v2546
  %v2548 = vrot.slane %v2526, %v2547
  %v2550 = vunpack.c.l.s4 1983009808
  %v2551 = vunpack.c.0.s8 %v2550
  %v2552 = vlaneseq
  %v2553 = vshrl.u32 %v2552, 7
  %v2554 = vsub.s32 %v2551, %v2553
  %v2555 = vrot.slane %v2527, %v2554
  %v2556 = vcombine.low %v2534, %v2548
  %v2557 = vcombine.high %v2534, %v2548
  %v2558 = vcombine.low %v2541, %v2555
  %v2559 = vcombine.high %v2541, %v2555
  %v2564 = vpack.c.bf16 %v2556, %v2556
  %v2565 = vpack.c.bf16 %v2557, %v2557
  %v2566 = vpack.c.bf16 %v2558, %v2558
  %v2567 = vpack.c.bf16 %v2559, %v2559
  %v2568 = vld [vmem:[%s5] sm:$0xff]
  %v2569 = vld [vmem:[%s5 + $0x8] sm:$0xff]
  %v2570 = vld [vmem:[%s5 + $0x10] sm:$0xff]
  %v2571 = vld [vmem:[%s5 + $0x18] sm:$0xff]
  %v2572 = vld [vmem:[%s5 + $0x20] sm:$0xff]
  %v2573 = vld [vmem:[%s5 + $0x28] sm:$0xff]
  %v2574 = vld [vmem:[%s5 + $0x30] sm:$0xff]
  %v2575 = vld [vmem:[%s5 + $0x38] sm:$0xff]
  %v2576 = vld [vmem:[%s5 + $0x40] sm:$0xff]
  %v2577 = vld [vmem:[%s5 + $0x48] sm:$0xff]
  %v2578 = vld [vmem:[%s5 + $0x50] sm:$0xff]
  %v2579 = vld [vmem:[%s5 + $0x58] sm:$0xff]
  %v2580 = vld [vmem:[%s5 + $0x60] sm:$0xff]
  %v2581 = vld [vmem:[%s5 + $0x68] sm:$0xff]
  %v2582 = vld [vmem:[%s5 + $0x70] sm:$0xff]
  %v2583 = vld [vmem:[%s5 + $0x78] sm:$0xff]
  %v2584 = vld [vmem:[%s5 + $0x80] sm:$0xff]
  %v2585 = vld [vmem:[%s5 + $0x88] sm:$0xff]
  %v2586 = vld [vmem:[%s5 + $0x90] sm:$0xff]
  %v2587 = vld [vmem:[%s5 + $0x98] sm:$0xff]
  %v2588 = vld [vmem:[%s5 + $0xa0] sm:$0xff]
  %v2589 = vld [vmem:[%s5 + $0xa8] sm:$0xff]
  %v2590 = vld [vmem:[%s5 + $0xb0] sm:$0xff]
  %v2591 = vld [vmem:[%s5 + $0xb8] sm:$0xff]
  %v2592 = vld [vmem:[%s5 + $0xc0] sm:$0xff]
  %v2593 = vld [vmem:[%s5 + $0xc8] sm:$0xff]
  %v2594 = vld [vmem:[%s5 + $0xd0] sm:$0xff]
  %v2595 = vld [vmem:[%s5 + $0xd8] sm:$0xff]
  %v2596 = vld [vmem:[%s5 + $0xe0] sm:$0xff]
  %v2597 = vld [vmem:[%s5 + $0xe8] sm:$0xff]
  %v2598 = vld [vmem:[%s5 + $0xf0] sm:$0xff]
  %v2599 = vld [vmem:[%s5 + $0xf8] sm:$0xff]
  %v2600 = vld [vmem:[%s5 + $0x100] sm:$0xff]
  %v2601 = vld [vmem:[%s5 + $0x108] sm:$0xff]
  %v2602 = vld [vmem:[%s5 + $0x110] sm:$0xff]
  %v2603 = vld [vmem:[%s5 + $0x118] sm:$0xff]
  %v2604 = vld [vmem:[%s5 + $0x120] sm:$0xff]
  %v2605 = vld [vmem:[%s5 + $0x128] sm:$0xff]
  %v2606 = vld [vmem:[%s5 + $0x130] sm:$0xff]
  %v2607 = vld [vmem:[%s5 + $0x138] sm:$0xff]
  %v2608 = vld [vmem:[%s5 + $0x140] sm:$0xff]
  %v2609 = vld [vmem:[%s5 + $0x148] sm:$0xff]
  %v2610 = vld [vmem:[%s5 + $0x150] sm:$0xff]
  %v2611 = vld [vmem:[%s5 + $0x158] sm:$0xff]
  %v2612 = vld [vmem:[%s5 + $0x160] sm:$0xff]
  %v2613 = vld [vmem:[%s5 + $0x168] sm:$0xff]
  %v2614 = vld [vmem:[%s5 + $0x170] sm:$0xff]
  %v2615 = vld [vmem:[%s5 + $0x178] sm:$0xff]
  %v2616 = vld [vmem:[%s5 + $0x180] sm:$0xff]
  %v2617 = vld [vmem:[%s5 + $0x188] sm:$0xff]
  %v2618 = vld [vmem:[%s5 + $0x190] sm:$0xff]
  %v2619 = vld [vmem:[%s5 + $0x198] sm:$0xff]
  %v2620 = vld [vmem:[%s5 + $0x1a0] sm:$0xff]
  %v2621 = vld [vmem:[%s5 + $0x1a8] sm:$0xff]
  %v2622 = vld [vmem:[%s5 + $0x1b0] sm:$0xff]
  %v2623 = vld [vmem:[%s5 + $0x1b8] sm:$0xff]
  %v2624 = vld [vmem:[%s5 + $0x1c0] sm:$0xff]
  %v2625 = vld [vmem:[%s5 + $0x1c8] sm:$0xff]
  %v2626 = vld [vmem:[%s5 + $0x1d0] sm:$0xff]
  %v2627 = vld [vmem:[%s5 + $0x1d8] sm:$0xff]
  %v2628 = vld [vmem:[%s5 + $0x1e0] sm:$0xff]
  %v2629 = vld [vmem:[%s5 + $0x1e8] sm:$0xff]
  %v2630 = vld [vmem:[%s5 + $0x1f0] sm:$0xff]
  %v2631 = vld [vmem:[%s5 + $0x1f8] sm:$0xff]
  %v2632 = vld [vmem:[%s5 + $0x200] sm:$0xff]
  %v2633 = vld [vmem:[%s5 + $0x208] sm:$0xff]
  %v2634 = vld [vmem:[%s5 + $0x210] sm:$0xff]
  %v2635 = vld [vmem:[%s5 + $0x218] sm:$0xff]
  %v2636 = vld [vmem:[%s5 + $0x220] sm:$0xff]
  %v2637 = vld [vmem:[%s5 + $0x228] sm:$0xff]
  %v2638 = vld [vmem:[%s5 + $0x230] sm:$0xff]
  %v2639 = vld [vmem:[%s5 + $0x238] sm:$0xff]
  %v2640 = vld [vmem:[%s5 + $0x240] sm:$0xff]
  %v2641 = vld [vmem:[%s5 + $0x248] sm:$0xff]
  %v2642 = vld [vmem:[%s5 + $0x250] sm:$0xff]
  %v2643 = vld [vmem:[%s5 + $0x258] sm:$0xff]
  %v2644 = vld [vmem:[%s5 + $0x260] sm:$0xff]
  %v2645 = vld [vmem:[%s5 + $0x268] sm:$0xff]
  %v2646 = vld [vmem:[%s5 + $0x270] sm:$0xff]
  %v2647 = vld [vmem:[%s5 + $0x278] sm:$0xff]
  %v2648 = vld [vmem:[%s5 + $0x280] sm:$0xff]
  %v2649 = vld [vmem:[%s5 + $0x288] sm:$0xff]
  %v2650 = vld [vmem:[%s5 + $0x290] sm:$0xff]
  %v2651 = vld [vmem:[%s5 + $0x298] sm:$0xff]
  %v2652 = vld [vmem:[%s5 + $0x2a0] sm:$0xff]
  %v2653 = vld [vmem:[%s5 + $0x2a8] sm:$0xff]
  %v2654 = vld [vmem:[%s5 + $0x2b0] sm:$0xff]
  %v2655 = vld [vmem:[%s5 + $0x2b8] sm:$0xff]
  %v2656 = vld [vmem:[%s5 + $0x2c0] sm:$0xff]
  %v2657 = vld [vmem:[%s5 + $0x2c8] sm:$0xff]
  %v2658 = vld [vmem:[%s5 + $0x2d0] sm:$0xff]
  %v2659 = vld [vmem:[%s5 + $0x2d8] sm:$0xff]
  %v2660 = vld [vmem:[%s5 + $0x2e0] sm:$0xff]
  %v2661 = vld [vmem:[%s5 + $0x2e8] sm:$0xff]
  %v2662 = vld [vmem:[%s5 + $0x2f0] sm:$0xff]
  %v2663 = vld [vmem:[%s5 + $0x2f8] sm:$0xff]
  %v2664 = vld [vmem:[%s5 + $0x300] sm:$0xff]
  %v2665 = vld [vmem:[%s5 + $0x308] sm:$0xff]
  %v2666 = vld [vmem:[%s5 + $0x310] sm:$0xff]
  %v2667 = vld [vmem:[%s5 + $0x318] sm:$0xff]
  %v2668 = vld [vmem:[%s5 + $0x320] sm:$0xff]
  %v2669 = vld [vmem:[%s5 + $0x328] sm:$0xff]
  %v2670 = vld [vmem:[%s5 + $0x330] sm:$0xff]
  %v2671 = vld [vmem:[%s5 + $0x338] sm:$0xff]
  %v2672 = vld [vmem:[%s5 + $0x340] sm:$0xff]
  %v2673 = vld [vmem:[%s5 + $0x348] sm:$0xff]
  %v2674 = vld [vmem:[%s5 + $0x350] sm:$0xff]
  %v2675 = vld [vmem:[%s5 + $0x358] sm:$0xff]
  %v2676 = vld [vmem:[%s5 + $0x360] sm:$0xff]
  %v2677 = vld [vmem:[%s5 + $0x368] sm:$0xff]
  %v2678 = vld [vmem:[%s5 + $0x370] sm:$0xff]
  %v2679 = vld [vmem:[%s5 + $0x378] sm:$0xff]
  %v2680 = vld [vmem:[%s5 + $0x380] sm:$0xff]
  %v2681 = vld [vmem:[%s5 + $0x388] sm:$0xff]
  %v2682 = vld [vmem:[%s5 + $0x390] sm:$0xff]
  %v2683 = vld [vmem:[%s5 + $0x398] sm:$0xff]
  %v2684 = vld [vmem:[%s5 + $0x3a0] sm:$0xff]
  %v2685 = vld [vmem:[%s5 + $0x3a8] sm:$0xff]
  %v2686 = vld [vmem:[%s5 + $0x3b0] sm:$0xff]
  %v2687 = vld [vmem:[%s5 + $0x3b8] sm:$0xff]
  %v2688 = vld [vmem:[%s5 + $0x3c0] sm:$0xff]
  %v2689 = vld [vmem:[%s5 + $0x3c8] sm:$0xff]
  %v2690 = vld [vmem:[%s5 + $0x3d0] sm:$0xff]
  %v2691 = vld [vmem:[%s5 + $0x3d8] sm:$0xff]
  %v2692 = vld [vmem:[%s5 + $0x3e0] sm:$0xff]
  %v2693 = vld [vmem:[%s5 + $0x3e8] sm:$0xff]
  %v2694 = vld [vmem:[%s5 + $0x3f0] sm:$0xff]
  %v2695 = vld [vmem:[%s5 + $0x3f8] sm:$0xff]
  %v2696 = vld [vmem:[%s6] sm:$0xf]
  %v2698 = vlaneseq
  %v2699 = vshrl.u32 %v2698, 7
  %v2700 = vsub.s32 0, %v2699
  %v2701 = vrot.slane %v2696, %v2700
  %v2702 = vlaneseq
  %v2703 = vshrl.u32 %v2702, 7
  %v2704 = vsub.s32 1, %v2703
  %v2705 = vrot.slane %v2696, %v2704
  %v2706 = vlaneseq
  %v2707 = vshrl.u32 %v2706, 7
  %v2708 = vsub.s32 2, %v2707
  %v2709 = vrot.slane %v2696, %v2708
  %v2710 = vlaneseq
  %v2711 = vshrl.u32 %v2710, 7
  %v2712 = vsub.s32 3, %v2711
  %v2713 = vrot.slane %v2696, %v2712
  %v2846 = vunpack.c.l.b16 %v2568
  %v2847 = vunpack.c.h.b16 %v2568
  %v2848 = vunpack.c.l.b16 %v2569
  %v2849 = vunpack.c.h.b16 %v2569
  %v2850 = vunpack.c.l.b16 %v2570
  %v2851 = vunpack.c.h.b16 %v2570
  %v2852 = vunpack.c.l.b16 %v2571
  %v2853 = vunpack.c.h.b16 %v2571
  %v2854 = vunpack.c.l.b16 %v2572
  %v2855 = vunpack.c.h.b16 %v2572
  %v2856 = vunpack.c.l.b16 %v2573
  %v2857 = vunpack.c.h.b16 %v2573
  %v2858 = vunpack.c.l.b16 %v2574
  %v2859 = vunpack.c.h.b16 %v2574
  %v2860 = vunpack.c.l.b16 %v2575
  %v2861 = vunpack.c.h.b16 %v2575
  %v2862 = vunpack.c.l.b16 %v2576
  %v2863 = vunpack.c.h.b16 %v2576
  %v2864 = vunpack.c.l.b16 %v2577
  %v2865 = vunpack.c.h.b16 %v2577
  %v2866 = vunpack.c.l.b16 %v2578
  %v2867 = vunpack.c.h.b16 %v2578
  %v2868 = vunpack.c.l.b16 %v2579
  %v2869 = vunpack.c.h.b16 %v2579
  %v2870 = vunpack.c.l.b16 %v2580
  %v2871 = vunpack.c.h.b16 %v2580
  %v2872 = vunpack.c.l.b16 %v2581
  %v2873 = vunpack.c.h.b16 %v2581
  %v2874 = vunpack.c.l.b16 %v2582
  %v2875 = vunpack.c.h.b16 %v2582
  %v2876 = vunpack.c.l.b16 %v2583
  %v2877 = vunpack.c.h.b16 %v2583
  %v2878 = vunpack.c.l.b16 %v2584
  %v2879 = vunpack.c.h.b16 %v2584
  %v2880 = vunpack.c.l.b16 %v2585
  %v2881 = vunpack.c.h.b16 %v2585
  %v2882 = vunpack.c.l.b16 %v2586
  %v2883 = vunpack.c.h.b16 %v2586
  %v2884 = vunpack.c.l.b16 %v2587
  %v2885 = vunpack.c.h.b16 %v2587
  %v2886 = vunpack.c.l.b16 %v2588
  %v2887 = vunpack.c.h.b16 %v2588
  %v2888 = vunpack.c.l.b16 %v2589
  %v2889 = vunpack.c.h.b16 %v2589
  %v2890 = vunpack.c.l.b16 %v2590
  %v2891 = vunpack.c.h.b16 %v2590
  %v2892 = vunpack.c.l.b16 %v2591
  %v2893 = vunpack.c.h.b16 %v2591
  %v2894 = vunpack.c.l.b16 %v2592
  %v2895 = vunpack.c.h.b16 %v2592
  %v2896 = vunpack.c.l.b16 %v2593
  %v2897 = vunpack.c.h.b16 %v2593
  %v2898 = vunpack.c.l.b16 %v2594
  %v2899 = vunpack.c.h.b16 %v2594
  %v2900 = vunpack.c.l.b16 %v2595
  %v2901 = vunpack.c.h.b16 %v2595
  %v2902 = vunpack.c.l.b16 %v2596
  %v2903 = vunpack.c.h.b16 %v2596
  %v2904 = vunpack.c.l.b16 %v2597
  %v2905 = vunpack.c.h.b16 %v2597
  %v2906 = vunpack.c.l.b16 %v2598
  %v2907 = vunpack.c.h.b16 %v2598
  %v2908 = vunpack.c.l.b16 %v2599
  %v2909 = vunpack.c.h.b16 %v2599
  %v2910 = vunpack.c.l.b16 %v2600
  %v2911 = vunpack.c.h.b16 %v2600
  %v2912 = vunpack.c.l.b16 %v2601
  %v2913 = vunpack.c.h.b16 %v2601
  %v2914 = vunpack.c.l.b16 %v2602
  %v2915 = vunpack.c.h.b16 %v2602
  %v2916 = vunpack.c.l.b16 %v2603
  %v2917 = vunpack.c.h.b16 %v2603
  %v2918 = vunpack.c.l.b16 %v2604
  %v2919 = vunpack.c.h.b16 %v2604
  %v2920 = vunpack.c.l.b16 %v2605
  %v2921 = vunpack.c.h.b16 %v2605
  %v2922 = vunpack.c.l.b16 %v2606
  %v2923 = vunpack.c.h.b16 %v2606
  %v2924 = vunpack.c.l.b16 %v2607
  %v2925 = vunpack.c.h.b16 %v2607
  %v2926 = vunpack.c.l.b16 %v2608
  %v2927 = vunpack.c.h.b16 %v2608
  %v2928 = vunpack.c.l.b16 %v2609
  %v2929 = vunpack.c.h.b16 %v2609
  %v2930 = vunpack.c.l.b16 %v2610
  %v2931 = vunpack.c.h.b16 %v2610
  %v2932 = vunpack.c.l.b16 %v2611
  %v2933 = vunpack.c.h.b16 %v2611
  %v2934 = vunpack.c.l.b16 %v2612
  %v2935 = vunpack.c.h.b16 %v2612
  %v2936 = vunpack.c.l.b16 %v2613
  %v2937 = vunpack.c.h.b16 %v2613
  %v2938 = vunpack.c.l.b16 %v2614
  %v2939 = vunpack.c.h.b16 %v2614
  %v2940 = vunpack.c.l.b16 %v2615
  %v2941 = vunpack.c.h.b16 %v2615
  %v2942 = vunpack.c.l.b16 %v2616
  %v2943 = vunpack.c.h.b16 %v2616
  %v2944 = vunpack.c.l.b16 %v2617
  %v2945 = vunpack.c.h.b16 %v2617
  %v2946 = vunpack.c.l.b16 %v2618
  %v2947 = vunpack.c.h.b16 %v2618
  %v2948 = vunpack.c.l.b16 %v2619
  %v2949 = vunpack.c.h.b16 %v2619
  %v2950 = vunpack.c.l.b16 %v2620
  %v2951 = vunpack.c.h.b16 %v2620
  %v2952 = vunpack.c.l.b16 %v2621
  %v2953 = vunpack.c.h.b16 %v2621
  %v2954 = vunpack.c.l.b16 %v2622
  %v2955 = vunpack.c.h.b16 %v2622
  %v2956 = vunpack.c.l.b16 %v2623
  %v2957 = vunpack.c.h.b16 %v2623
  %v2958 = vunpack.c.l.b16 %v2624
  %v2959 = vunpack.c.h.b16 %v2624
  %v2960 = vunpack.c.l.b16 %v2625
  %v2961 = vunpack.c.h.b16 %v2625
  %v2962 = vunpack.c.l.b16 %v2626
  %v2963 = vunpack.c.h.b16 %v2626
  %v2964 = vunpack.c.l.b16 %v2627
  %v2965 = vunpack.c.h.b16 %v2627
  %v2966 = vunpack.c.l.b16 %v2628
  %v2967 = vunpack.c.h.b16 %v2628
  %v2968 = vunpack.c.l.b16 %v2629
  %v2969 = vunpack.c.h.b16 %v2629
  %v2970 = vunpack.c.l.b16 %v2630
  %v2971 = vunpack.c.h.b16 %v2630
  %v2972 = vunpack.c.l.b16 %v2631
  %v2973 = vunpack.c.h.b16 %v2631
  %v2974 = vunpack.c.l.b16 %v2632
  %v2975 = vunpack.c.h.b16 %v2632
  %v2976 = vunpack.c.l.b16 %v2633
  %v2977 = vunpack.c.h.b16 %v2633
  %v2978 = vunpack.c.l.b16 %v2634
  %v2979 = vunpack.c.h.b16 %v2634
  %v2980 = vunpack.c.l.b16 %v2635
  %v2981 = vunpack.c.h.b16 %v2635
  %v2982 = vunpack.c.l.b16 %v2636
  %v2983 = vunpack.c.h.b16 %v2636
  %v2984 = vunpack.c.l.b16 %v2637
  %v2985 = vunpack.c.h.b16 %v2637
  %v2986 = vunpack.c.l.b16 %v2638
  %v2987 = vunpack.c.h.b16 %v2638
  %v2988 = vunpack.c.l.b16 %v2639
  %v2989 = vunpack.c.h.b16 %v2639
  %v2990 = vunpack.c.l.b16 %v2640
  %v2991 = vunpack.c.h.b16 %v2640
  %v2992 = vunpack.c.l.b16 %v2641
  %v2993 = vunpack.c.h.b16 %v2641
  %v2994 = vunpack.c.l.b16 %v2642
  %v2995 = vunpack.c.h.b16 %v2642
  %v2996 = vunpack.c.l.b16 %v2643
  %v2997 = vunpack.c.h.b16 %v2643
  %v2998 = vunpack.c.l.b16 %v2644
  %v2999 = vunpack.c.h.b16 %v2644
  %v3000 = vunpack.c.l.b16 %v2645
  %v3001 = vunpack.c.h.b16 %v2645
  %v3002 = vunpack.c.l.b16 %v2646
  %v3003 = vunpack.c.h.b16 %v2646
  %v3004 = vunpack.c.l.b16 %v2647
  %v3005 = vunpack.c.h.b16 %v2647
  %v3006 = vunpack.c.l.b16 %v2648
  %v3007 = vunpack.c.h.b16 %v2648
  %v3008 = vunpack.c.l.b16 %v2649
  %v3009 = vunpack.c.h.b16 %v2649
  %v3010 = vunpack.c.l.b16 %v2650
  %v3011 = vunpack.c.h.b16 %v2650
  %v3012 = vunpack.c.l.b16 %v2651
  %v3013 = vunpack.c.h.b16 %v2651
  %v3014 = vunpack.c.l.b16 %v2652
  %v3015 = vunpack.c.h.b16 %v2652
  %v3016 = vunpack.c.l.b16 %v2653
  %v3017 = vunpack.c.h.b16 %v2653
  %v3018 = vunpack.c.l.b16 %v2654
  %v3019 = vunpack.c.h.b16 %v2654
  %v3020 = vunpack.c.l.b16 %v2655
  %v3021 = vunpack.c.h.b16 %v2655
  %v3022 = vunpack.c.l.b16 %v2656
  %v3023 = vunpack.c.h.b16 %v2656
  %v3024 = vunpack.c.l.b16 %v2657
  %v3025 = vunpack.c.h.b16 %v2657
  %v3026 = vunpack.c.l.b16 %v2658
  %v3027 = vunpack.c.h.b16 %v2658
  %v3028 = vunpack.c.l.b16 %v2659
  %v3029 = vunpack.c.h.b16 %v2659
  %v3030 = vunpack.c.l.b16 %v2660
  %v3031 = vunpack.c.h.b16 %v2660
  %v3032 = vunpack.c.l.b16 %v2661
  %v3033 = vunpack.c.h.b16 %v2661
  %v3034 = vunpack.c.l.b16 %v2662
  %v3035 = vunpack.c.h.b16 %v2662
  %v3036 = vunpack.c.l.b16 %v2663
  %v3037 = vunpack.c.h.b16 %v2663
  %v3038 = vunpack.c.l.b16 %v2664
  %v3039 = vunpack.c.h.b16 %v2664
  %v3040 = vunpack.c.l.b16 %v2665
  %v3041 = vunpack.c.h.b16 %v2665
  %v3042 = vunpack.c.l.b16 %v2666
  %v3043 = vunpack.c.h.b16 %v2666
  %v3044 = vunpack.c.l.b16 %v2667
  %v3045 = vunpack.c.h.b16 %v2667
  %v3046 = vunpack.c.l.b16 %v2668
  %v3047 = vunpack.c.h.b16 %v2668
  %v3048 = vunpack.c.l.b16 %v2669
  %v3049 = vunpack.c.h.b16 %v2669
  %v3050 = vunpack.c.l.b16 %v2670
  %v3051 = vunpack.c.h.b16 %v2670
  %v3052 = vunpack.c.l.b16 %v2671
  %v3053 = vunpack.c.h.b16 %v2671
  %v3054 = vunpack.c.l.b16 %v2672
  %v3055 = vunpack.c.h.b16 %v2672
  %v3056 = vunpack.c.l.b16 %v2673
  %v3057 = vunpack.c.h.b16 %v2673
  %v3058 = vunpack.c.l.b16 %v2674
  %v3059 = vunpack.c.h.b16 %v2674
  %v3060 = vunpack.c.l.b16 %v2675
  %v3061 = vunpack.c.h.b16 %v2675
  %v3062 = vunpack.c.l.b16 %v2676
  %v3063 = vunpack.c.h.b16 %v2676
  %v3064 = vunpack.c.l.b16 %v2677
  %v3065 = vunpack.c.h.b16 %v2677
  %v3066 = vunpack.c.l.b16 %v2678
  %v3067 = vunpack.c.h.b16 %v2678
  %v3068 = vunpack.c.l.b16 %v2679
  %v3069 = vunpack.c.h.b16 %v2679
  %v3070 = vunpack.c.l.b16 %v2680
  %v3071 = vunpack.c.h.b16 %v2680
  %v3072 = vunpack.c.l.b16 %v2681
  %v3073 = vunpack.c.h.b16 %v2681
  %v3074 = vunpack.c.l.b16 %v2682
  %v3075 = vunpack.c.h.b16 %v2682
  %v3076 = vunpack.c.l.b16 %v2683
  %v3077 = vunpack.c.h.b16 %v2683
  %v3078 = vunpack.c.l.b16 %v2684
  %v3079 = vunpack.c.h.b16 %v2684
  %v3080 = vunpack.c.l.b16 %v2685
  %v3081 = vunpack.c.h.b16 %v2685
  %v3082 = vunpack.c.l.b16 %v2686
  %v3083 = vunpack.c.h.b16 %v2686
  %v3084 = vunpack.c.l.b16 %v2687
  %v3085 = vunpack.c.h.b16 %v2687
  %v3086 = vunpack.c.l.b16 %v2688
  %v3087 = vunpack.c.h.b16 %v2688
  %v3088 = vunpack.c.l.b16 %v2689
  %v3089 = vunpack.c.h.b16 %v2689
  %v3090 = vunpack.c.l.b16 %v2690
  %v3091 = vunpack.c.h.b16 %v2690
  %v3092 = vunpack.c.l.b16 %v2691
  %v3093 = vunpack.c.h.b16 %v2691
  %v3094 = vunpack.c.l.b16 %v2692
  %v3095 = vunpack.c.h.b16 %v2692
  %v3096 = vunpack.c.l.b16 %v2693
  %v3097 = vunpack.c.h.b16 %v2693
  %v3098 = vunpack.c.l.b16 %v2694
  %v3099 = vunpack.c.h.b16 %v2694
  %v3100 = vunpack.c.l.b16 %v2695
  %v3101 = vunpack.c.h.b16 %v2695
  %v3102 = vpack.c.b16 %v2850, %v2846
  %v3103 = vpack.c.b16 %v2851, %v2847
  %v3104 = vpack.c.b16 %v2852, %v2848
  %v3105 = vpack.c.b16 %v2853, %v2849
  %v3106 = vpack.c.b16 %v2858, %v2854
  %v3107 = vpack.c.b16 %v2859, %v2855
  %v3108 = vpack.c.b16 %v2860, %v2856
  %v3109 = vpack.c.b16 %v2861, %v2857
  %v3110 = vpack.c.b16 %v2866, %v2862
  %v3111 = vpack.c.b16 %v2867, %v2863
  %v3112 = vpack.c.b16 %v2868, %v2864
  %v3113 = vpack.c.b16 %v2869, %v2865
  %v3114 = vpack.c.b16 %v2874, %v2870
  %v3115 = vpack.c.b16 %v2875, %v2871
  %v3116 = vpack.c.b16 %v2876, %v2872
  %v3117 = vpack.c.b16 %v2877, %v2873
  %v3118 = vpack.c.b16 %v2882, %v2878
  %v3119 = vpack.c.b16 %v2883, %v2879
  %v3120 = vpack.c.b16 %v2884, %v2880
  %v3121 = vpack.c.b16 %v2885, %v2881
  %v3122 = vpack.c.b16 %v2890, %v2886
  %v3123 = vpack.c.b16 %v2891, %v2887
  %v3124 = vpack.c.b16 %v2892, %v2888
  %v3125 = vpack.c.b16 %v2893, %v2889
  %v3126 = vpack.c.b16 %v2898, %v2894
  %v3127 = vpack.c.b16 %v2899, %v2895
  %v3128 = vpack.c.b16 %v2900, %v2896
  %v3129 = vpack.c.b16 %v2901, %v2897
  %v3130 = vpack.c.b16 %v2906, %v2902
  %v3131 = vpack.c.b16 %v2907, %v2903
  %v3132 = vpack.c.b16 %v2908, %v2904
  %v3133 = vpack.c.b16 %v2909, %v2905
  %v3134 = vpack.c.b16 %v2914, %v2910
  %v3135 = vpack.c.b16 %v2915, %v2911
  %v3136 = vpack.c.b16 %v2916, %v2912
  %v3137 = vpack.c.b16 %v2917, %v2913
  %v3138 = vpack.c.b16 %v2922, %v2918
  %v3139 = vpack.c.b16 %v2923, %v2919
  %v3140 = vpack.c.b16 %v2924, %v2920
  %v3141 = vpack.c.b16 %v2925, %v2921
  %v3142 = vpack.c.b16 %v2930, %v2926
  %v3143 = vpack.c.b16 %v2931, %v2927
  %v3144 = vpack.c.b16 %v2932, %v2928
  %v3145 = vpack.c.b16 %v2933, %v2929
  %v3146 = vpack.c.b16 %v2938, %v2934
  %v3147 = vpack.c.b16 %v2939, %v2935
  %v3148 = vpack.c.b16 %v2940, %v2936
  %v3149 = vpack.c.b16 %v2941, %v2937
  %v3150 = vpack.c.b16 %v2946, %v2942
  %v3151 = vpack.c.b16 %v2947, %v2943
  %v3152 = vpack.c.b16 %v2948, %v2944
  %v3153 = vpack.c.b16 %v2949, %v2945
  %v3154 = vpack.c.b16 %v2954, %v2950
  %v3155 = vpack.c.b16 %v2955, %v2951
  %v3156 = vpack.c.b16 %v2956, %v2952
  %v3157 = vpack.c.b16 %v2957, %v2953
  %v3158 = vpack.c.b16 %v2962, %v2958
  %v3159 = vpack.c.b16 %v2963, %v2959
  %v3160 = vpack.c.b16 %v2964, %v2960
  %v3161 = vpack.c.b16 %v2965, %v2961
  %v3162 = vpack.c.b16 %v2970, %v2966
  %v3163 = vpack.c.b16 %v2971, %v2967
  %v3164 = vpack.c.b16 %v2972, %v2968
  %v3165 = vpack.c.b16 %v2973, %v2969
  %v3166 = vpack.c.b16 %v2978, %v2974
  %v3167 = vpack.c.b16 %v2979, %v2975
  %v3168 = vpack.c.b16 %v2980, %v2976
  %v3169 = vpack.c.b16 %v2981, %v2977
  %v3170 = vpack.c.b16 %v2986, %v2982
  %v3171 = vpack.c.b16 %v2987, %v2983
  %v3172 = vpack.c.b16 %v2988, %v2984
  %v3173 = vpack.c.b16 %v2989, %v2985
  %v3174 = vpack.c.b16 %v2994, %v2990
  %v3175 = vpack.c.b16 %v2995, %v2991
  %v3176 = vpack.c.b16 %v2996, %v2992
  %v3177 = vpack.c.b16 %v2997, %v2993
  %v3178 = vpack.c.b16 %v3002, %v2998
  %v3179 = vpack.c.b16 %v3003, %v2999
  %v3180 = vpack.c.b16 %v3004, %v3000
  %v3181 = vpack.c.b16 %v3005, %v3001
  %v3182 = vpack.c.b16 %v3010, %v3006
  %v3183 = vpack.c.b16 %v3011, %v3007
  %v3184 = vpack.c.b16 %v3012, %v3008
  %v3185 = vpack.c.b16 %v3013, %v3009
  %v3186 = vpack.c.b16 %v3018, %v3014
  %v3187 = vpack.c.b16 %v3019, %v3015
  %v3188 = vpack.c.b16 %v3020, %v3016
  %v3189 = vpack.c.b16 %v3021, %v3017
  %v3190 = vpack.c.b16 %v3026, %v3022
  %v3191 = vpack.c.b16 %v3027, %v3023
  %v3192 = vpack.c.b16 %v3028, %v3024
  %v3193 = vpack.c.b16 %v3029, %v3025
  %v3194 = vpack.c.b16 %v3034, %v3030
  %v3195 = vpack.c.b16 %v3035, %v3031
  %v3196 = vpack.c.b16 %v3036, %v3032
  %v3197 = vpack.c.b16 %v3037, %v3033
  %v3198 = vpack.c.b16 %v3042, %v3038
  %v3199 = vpack.c.b16 %v3043, %v3039
  %v3200 = vpack.c.b16 %v3044, %v3040
  %v3201 = vpack.c.b16 %v3045, %v3041
  %v3202 = vpack.c.b16 %v3050, %v3046
  %v3203 = vpack.c.b16 %v3051, %v3047
  %v3204 = vpack.c.b16 %v3052, %v3048
  %v3205 = vpack.c.b16 %v3053, %v3049
  %v3206 = vpack.c.b16 %v3058, %v3054
  %v3207 = vpack.c.b16 %v3059, %v3055
  %v3208 = vpack.c.b16 %v3060, %v3056
  %v3209 = vpack.c.b16 %v3061, %v3057
  %v3210 = vpack.c.b16 %v3066, %v3062
  %v3211 = vpack.c.b16 %v3067, %v3063
  %v3212 = vpack.c.b16 %v3068, %v3064
  %v3213 = vpack.c.b16 %v3069, %v3065
  %v3214 = vpack.c.b16 %v3074, %v3070
  %v3215 = vpack.c.b16 %v3075, %v3071
  %v3216 = vpack.c.b16 %v3076, %v3072
  %v3217 = vpack.c.b16 %v3077, %v3073
  %v3218 = vpack.c.b16 %v3082, %v3078
  %v3219 = vpack.c.b16 %v3083, %v3079
  %v3220 = vpack.c.b16 %v3084, %v3080
  %v3221 = vpack.c.b16 %v3085, %v3081
  %v3222 = vpack.c.b16 %v3090, %v3086
  %v3223 = vpack.c.b16 %v3091, %v3087
  %v3224 = vpack.c.b16 %v3092, %v3088
  %v3225 = vpack.c.b16 %v3093, %v3089
  %v3226 = vpack.c.b16 %v3098, %v3094
  %v3227 = vpack.c.b16 %v3099, %v3095
  %v3228 = vpack.c.b16 %v3100, %v3096
  %v3229 = vpack.c.b16 %v3101, %v3097
  %3358 = vmatprep.subr.bf16.mxu0 %v3131
  %3359 = vmatpush1.bf16.msra.mxu0 %v3130
  %3360 = vmatprep.subr.bf16.mxu0 %v3127
  %3361 = vmatpush1.bf16.msra.mxu0 %v3126
  %3362 = vmatprep.subr.bf16.mxu0 %v3123
  %3363 = vmatpush1.bf16.msra.mxu0 %v3122
  %3364 = vmatprep.subr.bf16.mxu0 %v3119
  %3365 = vmatpush1.bf16.msra.mxu0 %v3118
  %3366 = vmatprep.subr.bf16.mxu0 %v3115
  %3367 = vmatpush1.bf16.msra.mxu0 %v3114
  %3368 = vmatprep.subr.bf16.mxu0 %v3111
  %3369 = vmatpush1.bf16.msra.mxu0 %v3110
  %3370 = vmatprep.subr.bf16.mxu0 %v3107
  %3371 = vmatpush1.bf16.msra.mxu0 %v3106
  %3372 = vmatprep.subr.bf16.mxu0 %v3103
  %3373 = vmatpush1.bf16.msra.mxu0 %v3102
  %3374 = vmatprep.subr.bf16.mxu0 %v3163
  %3375 = vmatpush2.bf16.msra.mxu0 %v3162
  %3376 = vmatprep.subr.bf16.mxu0 %v3159
  %3377 = vmatpush2.bf16.msra.mxu0 %v3158
  %3378 = vmatprep.subr.bf16.mxu0 %v3155
  %3379 = vmatpush2.bf16.msra.mxu0 %v3154
  %3380 = vmatprep.subr.bf16.mxu0 %v3151
  %3381 = vmatpush2.bf16.msra.mxu0 %v3150
  %3382 = vmatprep.subr.bf16.mxu0 %v3147
  %3383 = vmatpush2.bf16.msra.mxu0 %v3146
  %3384 = vmatprep.subr.bf16.mxu0 %v3143
  %3385 = vmatpush2.bf16.msra.mxu0 %v3142
  %3386 = vmatprep.subr.bf16.mxu0 %v3139
  %3387 = vmatpush2.bf16.msra.mxu0 %v3138
  %3388 = vmatprep.subr.bf16.mxu0 %v3135
  %3389 = vmatpush2.bf16.msra.mxu0 %v3134
  %3390 = vmatprep.mubr.bf16.mxu0 %v2565
  %3391 = vmatmul.mubr.bf16.gmra.mxu0 %v2564
  %v3392 = vpop.f32.mrf.mxu0
  %v3393 = vadd.f32 %v2701, %v3392
  %v3394 = vpop.f32.mrf.mxu0
  %v3395 = vadd.f32 %v2705, %v3394
  %v3396 = vpop.f32.mrf.mxu0
  %v3397 = vpop.f32.mrf.mxu0
  %3398 = vdwg.mxu0
  %3399 = vmatprep.subr.bf16.mxu0 %v3195
  %3400 = vmatpush1.bf16.msra.mxu0 %v3194
  %3401 = vmatprep.subr.bf16.mxu0 %v3191
  %3402 = vmatpush1.bf16.msra.mxu0 %v3190
  %3403 = vmatprep.subr.bf16.mxu0 %v3187
  %3404 = vmatpush1.bf16.msra.mxu0 %v3186
  %3405 = vmatprep.subr.bf16.mxu0 %v3183
  %3406 = vmatpush1.bf16.msra.mxu0 %v3182
  %3407 = vmatprep.subr.bf16.mxu0 %v3179
  %3408 = vmatpush1.bf16.msra.mxu0 %v3178
  %3409 = vmatprep.subr.bf16.mxu0 %v3175
  %3410 = vmatpush1.bf16.msra.mxu0 %v3174
  %3411 = vmatprep.subr.bf16.mxu0 %v3171
  %3412 = vmatpush1.bf16.msra.mxu0 %v3170
  %3413 = vmatprep.subr.bf16.mxu0 %v3167
  %3414 = vmatpush1.bf16.msra.mxu0 %v3166
  %3415 = vmatprep.subr.bf16.mxu0 %v3227
  %3416 = vmatpush2.bf16.msra.mxu0 %v3226
  %3417 = vmatprep.subr.bf16.mxu0 %v3223
  %3418 = vmatpush2.bf16.msra.mxu0 %v3222
  %3419 = vmatprep.subr.bf16.mxu0 %v3219
  %3420 = vmatpush2.bf16.msra.mxu0 %v3218
  %3421 = vmatprep.subr.bf16.mxu0 %v3215
  %3422 = vmatpush2.bf16.msra.mxu0 %v3214
  %3423 = vmatprep.subr.bf16.mxu0 %v3211
  %3424 = vmatpush2.bf16.msra.mxu0 %v3210
  %3425 = vmatprep.subr.bf16.mxu0 %v3207
  %3426 = vmatpush2.bf16.msra.mxu0 %v3206
  %3427 = vmatprep.subr.bf16.mxu0 %v3203
  %3428 = vmatpush2.bf16.msra.mxu0 %v3202
  %3429 = vmatprep.subr.bf16.mxu0 %v3199
  %3430 = vmatpush2.bf16.msra.mxu0 %v3198
  %3431 = vmatprep.mubr.bf16.mxu0 %v2567
  %3432 = vmatmul.mubr.bf16.gmra.mxu0 %v2566
  %v3433 = vpop.f32.mrf.mxu0
  %v3434 = vadd.f32 %v3393, %v3433
  %v3435 = vpop.f32.mrf.mxu0
  %v3436 = vadd.f32 %v3395, %v3435
  %v3437 = vpop.f32.mrf.mxu0
  %v3438 = vpop.f32.mrf.mxu0
  %3439 = vdwg.mxu0
  %3440 = vmatprep.subr.bf16.mxu0 %v3133
  %3441 = vmatpush1.bf16.msra.mxu0 %v3132
  %3442 = vmatprep.subr.bf16.mxu0 %v3129
  %3443 = vmatpush1.bf16.msra.mxu0 %v3128
  %3444 = vmatprep.subr.bf16.mxu0 %v3125
  %3445 = vmatpush1.bf16.msra.mxu0 %v3124
  %3446 = vmatprep.subr.bf16.mxu0 %v3121
  %3447 = vmatpush1.bf16.msra.mxu0 %v3120
  %3448 = vmatprep.subr.bf16.mxu0 %v3117
  %3449 = vmatpush1.bf16.msra.mxu0 %v3116
  %3450 = vmatprep.subr.bf16.mxu0 %v3113
  %3451 = vmatpush1.bf16.msra.mxu0 %v3112
  %3452 = vmatprep.subr.bf16.mxu0 %v3109
  %3453 = vmatpush1.bf16.msra.mxu0 %v3108
  %3454 = vmatprep.subr.bf16.mxu0 %v3105
  %3455 = vmatpush1.bf16.msra.mxu0 %v3104
  %3456 = vmatprep.subr.bf16.mxu0 %v3165
  %3457 = vmatpush2.bf16.msra.mxu0 %v3164
  %3458 = vmatprep.subr.bf16.mxu0 %v3161
  %3459 = vmatpush2.bf16.msra.mxu0 %v3160
  %3460 = vmatprep.subr.bf16.mxu0 %v3157
  %3461 = vmatpush2.bf16.msra.mxu0 %v3156
  %3462 = vmatprep.subr.bf16.mxu0 %v3153
  %3463 = vmatpush2.bf16.msra.mxu0 %v3152
  %3464 = vmatprep.subr.bf16.mxu0 %v3149
  %3465 = vmatpush2.bf16.msra.mxu0 %v3148
  %3466 = vmatprep.subr.bf16.mxu0 %v3145
  %3467 = vmatpush2.bf16.msra.mxu0 %v3144
  %3468 = vmatprep.subr.bf16.mxu0 %v3141
  %3469 = vmatpush2.bf16.msra.mxu0 %v3140
  %3470 = vmatprep.subr.bf16.mxu0 %v3137
  %3471 = vmatpush2.bf16.msra.mxu0 %v3136
  %3472 = vmatprep.mubr.bf16.mxu0 %v2565
  %3473 = vmatmul.mubr.bf16.gmra.mxu0 %v2564
  %v3474 = vpop.f32.mrf.mxu0
  %v3475 = vadd.f32 %v2709, %v3474
  %v3476 = vpop.f32.mrf.mxu0
  %v3477 = vadd.f32 %v2713, %v3476
  %v3478 = vpop.f32.mrf.mxu0
  %v3479 = vpop.f32.mrf.mxu0
  %3480 = vdwg.mxu0
  %3481 = vmatprep.subr.bf16.mxu0 %v3197
  %3482 = vmatpush1.bf16.msra.mxu0 %v3196
  %3483 = vmatprep.subr.bf16.mxu0 %v3193
  %3484 = vmatpush1.bf16.msra.mxu0 %v3192
  %3485 = vmatprep.subr.bf16.mxu0 %v3189
  %3486 = vmatpush1.bf16.msra.mxu0 %v3188
  %3487 = vmatprep.subr.bf16.mxu0 %v3185
  %3488 = vmatpush1.bf16.msra.mxu0 %v3184
  %3489 = vmatprep.subr.bf16.mxu0 %v3181
  %3490 = vmatpush1.bf16.msra.mxu0 %v3180
  %3491 = vmatprep.subr.bf16.mxu0 %v3177
  %3492 = vmatpush1.bf16.msra.mxu0 %v3176
  %3493 = vmatprep.subr.bf16.mxu0 %v3173
  %3494 = vmatpush1.bf16.msra.mxu0 %v3172
  %3495 = vmatprep.subr.bf16.mxu0 %v3169
  %3496 = vmatpush1.bf16.msra.mxu0 %v3168
  %3497 = vmatprep.subr.bf16.mxu0 %v3229
  %3498 = vmatpush2.bf16.msra.mxu0 %v3228
  %3499 = vmatprep.subr.bf16.mxu0 %v3225
  %3500 = vmatpush2.bf16.msra.mxu0 %v3224
  %3501 = vmatprep.subr.bf16.mxu0 %v3221
  %3502 = vmatpush2.bf16.msra.mxu0 %v3220
  %3503 = vmatprep.subr.bf16.mxu0 %v3217
  %3504 = vmatpush2.bf16.msra.mxu0 %v3216
  %3505 = vmatprep.subr.bf16.mxu0 %v3213
  %3506 = vmatpush2.bf16.msra.mxu0 %v3212
  %3507 = vmatprep.subr.bf16.mxu0 %v3209
  %3508 = vmatpush2.bf16.msra.mxu0 %v3208
  %3509 = vmatprep.subr.bf16.mxu0 %v3205
  %3510 = vmatpush2.bf16.msra.mxu0 %v3204
  %3511 = vmatprep.subr.bf16.mxu0 %v3201
  %3512 = vmatpush2.bf16.msra.mxu0 %v3200
  %3513 = vmatprep.mubr.bf16.mxu0 %v2567
  %3514 = vmatmul.mubr.bf16.gmra.mxu0 %v2566
  %v3515 = vpop.f32.mrf.mxu0
  %v3516 = vadd.f32 %v3475, %v3515
  %v3517 = vpop.f32.mrf.mxu0
  %v3518 = vadd.f32 %v3477, %v3517
  %v3519 = vpop.f32.mrf.mxu0
  %v3520 = vpop.f32.mrf.mxu0
  %3521 = vdwg.mxu0
  %v3522 = vmax.f32 %v3434, 0.0
  %v3523 = vmax.f32 %v3436, 0.0
  %v3524 = vmax.f32 %v3516, 0.0
  %v3525 = vmax.f32 %v3518, 0.0
  %v3526 = vpack.c.bf16 %v3522, %v3522
  %v3527 = vpack.c.bf16 %v3523, %v3523
  %v3528 = vpack.c.bf16 %v3524, %v3524
  %v3529 = vpack.c.bf16 %v3525, %v3525
  %v3530 = vld [vmem:[%s7] sm:$0xf]
  %v3531 = vld [vmem:[%s7 + $0x4] sm:$0xf]
  %v3532 = vld [vmem:[%s7 + $0x8] sm:$0xf]
  %v3533 = vld [vmem:[%s7 + $0xc] sm:$0xf]
  %v3534 = vld [vmem:[%s7 + $0x10] sm:$0xf]
  %v3535 = vld [vmem:[%s7 + $0x14] sm:$0xf]
  %v3536 = vld [vmem:[%s7 + $0x18] sm:$0xf]
  %v3537 = vld [vmem:[%s7 + $0x1c] sm:$0xf]
  %v3538 = vld [vmem:[%s7 + $0x20] sm:$0xf]
  %v3539 = vld [vmem:[%s7 + $0x24] sm:$0xf]
  %v3540 = vld [vmem:[%s7 + $0x28] sm:$0xf]
  %v3541 = vld [vmem:[%s7 + $0x2c] sm:$0xf]
  %v3542 = vld [vmem:[%s7 + $0x30] sm:$0xf]
  %v3543 = vld [vmem:[%s7 + $0x34] sm:$0xf]
  %v3544 = vld [vmem:[%s7 + $0x38] sm:$0xf]
  %v3545 = vld [vmem:[%s7 + $0x3c] sm:$0xf]
  %v3546 = vld [vmem:[%s7 + $0x40] sm:$0xf]
  %v3547 = vld [vmem:[%s7 + $0x44] sm:$0xf]
  %v3548 = vld [vmem:[%s7 + $0x48] sm:$0xf]
  %v3549 = vld [vmem:[%s7 + $0x4c] sm:$0xf]
  %v3550 = vld [vmem:[%s7 + $0x50] sm:$0xf]
  %v3551 = vld [vmem:[%s7 + $0x54] sm:$0xf]
  %v3552 = vld [vmem:[%s7 + $0x58] sm:$0xf]
  %v3553 = vld [vmem:[%s7 + $0x5c] sm:$0xf]
  %v3554 = vld [vmem:[%s7 + $0x60] sm:$0xf]
  %v3555 = vld [vmem:[%s7 + $0x64] sm:$0xf]
  %v3556 = vld [vmem:[%s7 + $0x68] sm:$0xf]
  %v3557 = vld [vmem:[%s7 + $0x6c] sm:$0xf]
  %v3558 = vld [vmem:[%s7 + $0x70] sm:$0xf]
  %v3559 = vld [vmem:[%s7 + $0x74] sm:$0xf]
  %v3560 = vld [vmem:[%s7 + $0x78] sm:$0xf]
  %v3561 = vld [vmem:[%s7 + $0x7c] sm:$0xf]
  %v3562 = vld [vmem:[%s7 + $0x80] sm:$0xf]
  %v3563 = vld [vmem:[%s7 + $0x84] sm:$0xf]
  %v3564 = vld [vmem:[%s7 + $0x88] sm:$0xf]
  %v3565 = vld [vmem:[%s7 + $0x8c] sm:$0xf]
  %v3566 = vld [vmem:[%s7 + $0x90] sm:$0xf]
  %v3567 = vld [vmem:[%s7 + $0x94] sm:$0xf]
  %v3568 = vld [vmem:[%s7 + $0x98] sm:$0xf]
  %v3569 = vld [vmem:[%s7 + $0x9c] sm:$0xf]
  %v3570 = vld [vmem:[%s7 + $0xa0] sm:$0xf]
  %v3571 = vld [vmem:[%s7 + $0xa4] sm:$0xf]
  %v3572 = vld [vmem:[%s7 + $0xa8] sm:$0xf]
  %v3573 = vld [vmem:[%s7 + $0xac] sm:$0xf]
  %v3574 = vld [vmem:[%s7 + $0xb0] sm:$0xf]
  %v3575 = vld [vmem:[%s7 + $0xb4] sm:$0xf]
  %v3576 = vld [vmem:[%s7 + $0xb8] sm:$0xf]
  %v3577 = vld [vmem:[%s7 + $0xbc] sm:$0xf]
  %v3578 = vld [vmem:[%s7 + $0xc0] sm:$0xf]
  %v3579 = vld [vmem:[%s7 + $0xc4] sm:$0xf]
  %v3580 = vld [vmem:[%s7 + $0xc8] sm:$0xf]
  %v3581 = vld [vmem:[%s7 + $0xcc] sm:$0xf]
  %v3582 = vld [vmem:[%s7 + $0xd0] sm:$0xf]
  %v3583 = vld [vmem:[%s7 + $0xd4] sm:$0xf]
  %v3584 = vld [vmem:[%s7 + $0xd8] sm:$0xf]
  %v3585 = vld [vmem:[%s7 + $0xdc] sm:$0xf]
  %v3586 = vld [vmem:[%s7 + $0xe0] sm:$0xf]
  %v3587 = vld [vmem:[%s7 + $0xe4] sm:$0xf]
  %v3588 = vld [vmem:[%s7 + $0xe8] sm:$0xf]
  %v3589 = vld [vmem:[%s7 + $0xec] sm:$0xf]
  %v3590 = vld [vmem:[%s7 + $0xf0] sm:$0xf]
  %v3591 = vld [vmem:[%s7 + $0xf4] sm:$0xf]
  %v3592 = vld [vmem:[%s7 + $0xf8] sm:$0xf]
  %v3593 = vld [vmem:[%s7 + $0xfc] sm:$0xf]
  %v3594 = vld [vmem:[%s8] sm:$0x1]
  %v3596 = vlaneseq
  %v3597 = vshrl.u32 %v3596, 7
  %v3598 = vsub.s32 0, %v3597
  %v3599 = vrot.slane %v3594, %v3598
  %v3665 = vunpack.c.l.b16 %v3530
  %v3666 = vunpack.c.l.b16 %v3531
  %v3667 = vunpack.c.l.b16 %v3532
  %v3668 = vunpack.c.l.b16 %v3533
  %v3669 = vunpack.c.l.b16 %v3534
  %v3670 = vunpack.c.l.b16 %v3535
  %v3671 = vunpack.c.l.b16 %v3536
  %v3672 = vunpack.c.l.b16 %v3537
  %v3673 = vunpack.c.l.b16 %v3538
  %v3674 = vunpack.c.l.b16 %v3539
  %v3675 = vunpack.c.l.b16 %v3540
  %v3676 = vunpack.c.l.b16 %v3541
  %v3677 = vunpack.c.l.b16 %v3542
  %v3678 = vunpack.c.l.b16 %v3543
  %v3679 = vunpack.c.l.b16 %v3544
  %v3680 = vunpack.c.l.b16 %v3545
  %v3681 = vunpack.c.l.b16 %v3546
  %v3682 = vunpack.c.l.b16 %v3547
  %v3683 = vunpack.c.l.b16 %v3548
  %v3684 = vunpack.c.l.b16 %v3549
  %v3685 = vunpack.c.l.b16 %v3550
  %v3686 = vunpack.c.l.b16 %v3551
  %v3687 = vunpack.c.l.b16 %v3552
  %v3688 = vunpack.c.l.b16 %v3553
  %v3689 = vunpack.c.l.b16 %v3554
  %v3690 = vunpack.c.l.b16 %v3555
  %v3691 = vunpack.c.l.b16 %v3556
  %v3692 = vunpack.c.l.b16 %v3557
  %v3693 = vunpack.c.l.b16 %v3558
  %v3694 = vunpack.c.l.b16 %v3559
  %v3695 = vunpack.c.l.b16 %v3560
  %v3696 = vunpack.c.l.b16 %v3561
  %v3697 = vunpack.c.l.b16 %v3562
  %v3698 = vunpack.c.l.b16 %v3563
  %v3699 = vunpack.c.l.b16 %v3564
  %v3700 = vunpack.c.l.b16 %v3565
  %v3701 = vunpack.c.l.b16 %v3566
  %v3702 = vunpack.c.l.b16 %v3567
  %v3703 = vunpack.c.l.b16 %v3568
  %v3704 = vunpack.c.l.b16 %v3569
  %v3705 = vunpack.c.l.b16 %v3570
  %v3706 = vunpack.c.l.b16 %v3571
  %v3707 = vunpack.c.l.b16 %v3572
  %v3708 = vunpack.c.l.b16 %v3573
  %v3709 = vunpack.c.l.b16 %v3574
  %v3710 = vunpack.c.l.b16 %v3575
  %v3711 = vunpack.c.l.b16 %v3576
  %v3712 = vunpack.c.l.b16 %v3577
  %v3713 = vunpack.c.l.b16 %v3578
  %v3714 = vunpack.c.l.b16 %v3579
  %v3715 = vunpack.c.l.b16 %v3580
  %v3716 = vunpack.c.l.b16 %v3581
  %v3717 = vunpack.c.l.b16 %v3582
  %v3718 = vunpack.c.l.b16 %v3583
  %v3719 = vunpack.c.l.b16 %v3584
  %v3720 = vunpack.c.l.b16 %v3585
  %v3721 = vunpack.c.l.b16 %v3586
  %v3722 = vunpack.c.l.b16 %v3587
  %v3723 = vunpack.c.l.b16 %v3588
  %v3724 = vunpack.c.l.b16 %v3589
  %v3725 = vunpack.c.l.b16 %v3590
  %v3726 = vunpack.c.l.b16 %v3591
  %v3727 = vunpack.c.l.b16 %v3592
  %v3728 = vunpack.c.l.b16 %v3593
  %v3729 = vpack.c.b16 %v3666, %v3665
  %v3730 = vpack.c.b16 %v3668, %v3667
  %v3731 = vpack.c.b16 %v3670, %v3669
  %v3732 = vpack.c.b16 %v3672, %v3671
  %v3733 = vpack.c.b16 %v3674, %v3673
  %v3734 = vpack.c.b16 %v3676, %v3675
  %v3735 = vpack.c.b16 %v3678, %v3677
  %v3736 = vpack.c.b16 %v3680, %v3679
  %v3737 = vpack.c.b16 %v3682, %v3681
  %v3738 = vpack.c.b16 %v3684, %v3683
  %v3739 = vpack.c.b16 %v3686, %v3685
  %v3740 = vpack.c.b16 %v3688, %v3687
  %v3741 = vpack.c.b16 %v3690, %v3689
  %v3742 = vpack.c.b16 %v3692, %v3691
  %v3743 = vpack.c.b16 %v3694, %v3693
  %v3744 = vpack.c.b16 %v3696, %v3695
  %v3745 = vpack.c.b16 %v3698, %v3697
  %v3746 = vpack.c.b16 %v3700, %v3699
  %v3747 = vpack.c.b16 %v3702, %v3701
  %v3748 = vpack.c.b16 %v3704, %v3703
  %v3749 = vpack.c.b16 %v3706, %v3705
  %v3750 = vpack.c.b16 %v3708, %v3707
  %v3751 = vpack.c.b16 %v3710, %v3709
  %v3752 = vpack.c.b16 %v3712, %v3711
  %v3753 = vpack.c.b16 %v3714, %v3713
  %v3754 = vpack.c.b16 %v3716, %v3715
  %v3755 = vpack.c.b16 %v3718, %v3717
  %v3756 = vpack.c.b16 %v3720, %v3719
  %v3757 = vpack.c.b16 %v3722, %v3721
  %v3758 = vpack.c.b16 %v3724, %v3723
  %v3759 = vpack.c.b16 %v3726, %v3725
  %v3760 = vpack.c.b16 %v3728, %v3727
  %3793 = vmatprep.subr.bf16.mxu0 0
  %3794 = vmatpush1.bf16.msra.mxu0 %v3736
  %3795 = vmatprep.subr.bf16.mxu0 0
  %3796 = vmatpush1.bf16.msra.mxu0 %v3735
  %3797 = vmatprep.subr.bf16.mxu0 0
  %3798 = vmatpush1.bf16.msra.mxu0 %v3734
  %3799 = vmatprep.subr.bf16.mxu0 0
  %3800 = vmatpush1.bf16.msra.mxu0 %v3733
  %3801 = vmatprep.subr.bf16.mxu0 0
  %3802 = vmatpush1.bf16.msra.mxu0 %v3732
  %3803 = vmatprep.subr.bf16.mxu0 0
  %3804 = vmatpush1.bf16.msra.mxu0 %v3731
  %3805 = vmatprep.subr.bf16.mxu0 0
  %3806 = vmatpush1.bf16.msra.mxu0 %v3730
  %3807 = vmatprep.subr.bf16.mxu0 0
  %3808 = vmatpush1.bf16.msra.mxu0 %v3729
  %3809 = vmatprep.subr.bf16.mxu0 0
  %3810 = vmatpush2.bf16.msra.mxu0 %v3744
  %3811 = vmatprep.subr.bf16.mxu0 0
  %3812 = vmatpush2.bf16.msra.mxu0 %v3743
  %3813 = vmatprep.subr.bf16.mxu0 0
  %3814 = vmatpush2.bf16.msra.mxu0 %v3742
  %3815 = vmatprep.subr.bf16.mxu0 0
  %3816 = vmatpush2.bf16.msra.mxu0 %v3741
  %3817 = vmatprep.subr.bf16.mxu0 0
  %3818 = vmatpush2.bf16.msra.mxu0 %v3740
  %3819 = vmatprep.subr.bf16.mxu0 0
  %3820 = vmatpush2.bf16.msra.mxu0 %v3739
  %3821 = vmatprep.subr.bf16.mxu0 0
  %3822 = vmatpush2.bf16.msra.mxu0 %v3738
  %3823 = vmatprep.subr.bf16.mxu0 0
  %3824 = vmatpush2.bf16.msra.mxu0 %v3737
  %3825 = vmatprep.mubr.bf16.mxu0 %v3527
  %3826 = vmatmul.mubr.bf16.gmra.mxu0 %v3526
  %v3827 = vpop.f32.mrf.mxu0
  %v3828 = vadd.f32 %v3599, %v3827
  %v3829 = vpop.f32.mrf.mxu0
  %v3830 = vpop.f32.mrf.mxu0
  %v3831 = vpop.f32.mrf.mxu0
  %3832 = vdwg.mxu0
  %3833 = vmatprep.subr.bf16.mxu0 0
  %3834 = vmatpush1.bf16.msra.mxu0 %v3752
  %3835 = vmatprep.subr.bf16.mxu0 0
  %3836 = vmatpush1.bf16.msra.mxu0 %v3751
  %3837 = vmatprep.subr.bf16.mxu0 0
  %3838 = vmatpush1.bf16.msra.mxu0 %v3750
  %3839 = vmatprep.subr.bf16.mxu0 0
  %3840 = vmatpush1.bf16.msra.mxu0 %v3749
  %3841 = vmatprep.subr.bf16.mxu0 0
  %3842 = vmatpush1.bf16.msra.mxu0 %v3748
  %3843 = vmatprep.subr.bf16.mxu0 0
  %3844 = vmatpush1.bf16.msra.mxu0 %v3747
  %3845 = vmatprep.subr.bf16.mxu0 0
  %3846 = vmatpush1.bf16.msra.mxu0 %v3746
  %3847 = vmatprep.subr.bf16.mxu0 0
  %3848 = vmatpush1.bf16.msra.mxu0 %v3745
  %3849 = vmatprep.subr.bf16.mxu0 0
  %3850 = vmatpush2.bf16.msra.mxu0 %v3760
  %3851 = vmatprep.subr.bf16.mxu0 0
  %3852 = vmatpush2.bf16.msra.mxu0 %v3759
  %3853 = vmatprep.subr.bf16.mxu0 0
  %3854 = vmatpush2.bf16.msra.mxu0 %v3758
  %3855 = vmatprep.subr.bf16.mxu0 0
  %3856 = vmatpush2.bf16.msra.mxu0 %v3757
  %3857 = vmatprep.subr.bf16.mxu0 0
  %3858 = vmatpush2.bf16.msra.mxu0 %v3756
  %3859 = vmatprep.subr.bf16.mxu0 0
  %3860 = vmatpush2.bf16.msra.mxu0 %v3755
  %3861 = vmatprep.subr.bf16.mxu0 0
  %3862 = vmatpush2.bf16.msra.mxu0 %v3754
  %3863 = vmatprep.subr.bf16.mxu0 0
  %3864 = vmatpush2.bf16.msra.mxu0 %v3753
  %3865 = vmatprep.mubr.bf16.mxu0 %v3529
  %3866 = vmatmul.mubr.bf16.gmra.mxu0 %v3528
  %v3867 = vpop.f32.mrf.mxu0
  %v3868 = vadd.f32 %v3828, %v3867
  %v3869 = vpop.f32.mrf.mxu0
  %v3870 = vpop.f32.mrf.mxu0
  %v3871 = vpop.f32.mrf.mxu0
  %3872 = vdwg.mxu0
  %3873 = vst [vmem:[%s9] sm:$0xff] %v3868
  // Predicated region
  $region38: #{multivariate_cnn_forward.1} parent=0 // pred_check
    _
  $region39: #{multivariate_cnn_forward.1} parent=0 // pred_check_branch
    %3875 = sbr.rel (0) target = $region41
  $region40: #{multivariate_cnn_forward.1} parent=0 // pred_region
    _
  $region41: #{multivariate_cnn_forward.1} parent=0 // pred_fallthru
    _
  // Predicated region
  $region42: #{multivariate_cnn_forward.1} parent=0 // pred_check
    _
  $region43: #{multivariate_cnn_forward.1} parent=0 // pred_check_branch
    %3877 = sbr.rel (0) target = $region45
  $region44: #{multivariate_cnn_forward.1} parent=0 // pred_region
    _
  $region45: #{multivariate_cnn_forward.1} parent=0 // pred_fallthru
    _

</llo_original>
